<compile_context>
chip_gen: v7x
topology: tpu7x:2x2x1
jax: 0.10.0
libtpu: 0.0.40
codegen_flags: <defaults>
</compile_context>

<pallas_src>
import jax
import jax.numpy as jnp
from jax.experimental import pallas as pl
from jax.experimental.pallas import tpu as pltpu


def _conv1d_relu(x, w_ref, b_ref, xp_ref):
    """Channels-last 'same' Conv1d + ReLU.

    x:      (Bb, T, Cin)     f32 value (Bb batch elements x T frames)
    w_ref:  (K, Cin, Cout)   weight ref (== torch weight (Cout, Cin, K) transposed)
    b_ref:  (1, Cout)        bias ref
    xp_ref: (Bb, T+K-1, Cin) VMEM scratch holding a zero-padded copy of x.

    Each tap k is a contiguous time slice of the padded scratch feeding one
    accumulating MXU matmul.
    """
    Bb, T, Cin = x.shape
    K = w_ref.shape[0]
    Cout = w_ref.shape[2]
    pad = (K - 1) // 2

    xp_ref[...] = jnp.zeros_like(xp_ref)          # padding rows (cheap, tiny)
    xp_ref[:, pad:pad + T, :] = x                 # body

    acc = jnp.zeros((Bb * T, Cout), jnp.float32)
    for k in range(K):
        col = xp_ref[:, k:k + T, :].reshape(Bb * T, Cin)
        acc = acc + jnp.dot(col, w_ref[k], preferred_element_type=jnp.float32)
    return jnp.maximum(acc + b_ref[...], 0.0).reshape(Bb, T, Cout)


def _make_kernel():
    def kernel(video_ref, text_ref,
               pool_ref,
               w1_ref, b1_ref, w2_ref, b2_ref, w3_ref, b3_ref,
               wfv_ref, wft_ref, bf_ref, wh_ref, bh_ref,
               out_ref,
               xp1_ref, xp2_ref, xp3_ref):
        Bb, T, CHW = video_ref.shape

        # --- spatial mean as one MXU matmul: (Bb*T, H*W*C) @ (H*W*C, C) ---
        v = video_ref[...].reshape(Bb * T, CHW).astype(jnp.float32)
        x = jnp.dot(v, pool_ref[...], preferred_element_type=jnp.float32)
        x = x.reshape(Bb, T, pool_ref.shape[1])                # (Bb, T, C)

        # --- VideoEncoder: temporal conv stack + temporal mean ---
        x = _conv1d_relu(x, w1_ref, b1_ref, xp1_ref)           # (Bb, T, 64)
        x = _conv1d_relu(x, w2_ref, b2_ref, xp2_ref)           # (Bb, T, 128)
        x = _conv1d_relu(x, w3_ref, b3_ref, xp3_ref)           # (Bb, T, 256)
        pooled = jnp.mean(x, axis=1)                           # (Bb, 256)

        # --- FusionClassifier: cat(video, text) @ Wfc1 as split matmuls ---
        text = text_ref[...].astype(jnp.float32)               # (Bb, 768)
        h = (jnp.dot(pooled, wfv_ref[...], preferred_element_type=jnp.float32)
             + jnp.dot(text, wft_ref[...], preferred_element_type=jnp.float32)
             + bf_ref[...])
        h = jnp.maximum(h, 0.0)                                # (Bb, 128)
        # both heads fused into one matmul / one contiguous output slab
        out_ref[...] = (jnp.dot(h, wh_ref[...], preferred_element_type=jnp.float32)
                        + bh_ref[...])                         # (Bb, 3+8)

    return kernel


def vccsa_forward(video, text, params):
    (w1, b1, w2, b2, w3, b3, wf, bf, wop, bop, wem, bem) = params
    B, T, H, W, C = video.shape
    HW = H * W
    D_txt = text.shape[1]
    n_vid = w3.shape[-1]                                       # 256

    # Free reshape only: (B, T, H, W, C) -> (B, T, H*W*C).  No HBM transpose.
    # TODO(synk): at production spatial sizes add a spatial grid axis (or an
    # inner emit_pipeline over H*W chunks) so the per-step video block stays
    # under v7x's 64 MiB VMEM; at demo sizes one block is tiny.
    video_r = video.reshape(B, T, HW * C)

    # Pooling matrix: pool[i*C + c, c'] = (c == c') / HW  -> per-channel mean.
    pool = jnp.tile(jnp.eye(C, dtype=jnp.float32), (HW, 1)) / float(HW)

    # Kernel-ready params: fc1 split into video/text row blocks, heads fused.
    wfv, wft = wf[:n_vid], wf[n_vid:]
    wh = jnp.concatenate([wop, wem], axis=1)                   # (128, 11)
    bh = jnp.concatenate([bop, bem]).reshape(1, -1)            # (1, 11)
    kparams = (pool,
               w1, b1.reshape(1, -1), w2, b2.reshape(1, -1),
               w3, b3.reshape(1, -1), wfv, wft, bf.reshape(1, -1), wh, bh)
    n_out = wh.shape[-1]

    # Several batch elements per grid step (Bb*T matmul rows); Bb is either a
    # multiple of 8 or the full batch so the (8,128) block rules always hold.
    Bb = 8 if B % 8 == 0 else B
    grid = (B // Bb,)

    def const_spec(a):
        nd = a.ndim
        return pl.BlockSpec(a.shape, lambda i, _nd=nd: (0,) * _nd)

    in_specs = [
        pl.BlockSpec((Bb, T, HW * C), lambda i: (i, 0, 0)),
        pl.BlockSpec((Bb, D_txt), lambda i: (i, 0)),
    ] + [const_spec(p) for p in kparams]

    scratch_shapes = [
        pltpu.VMEM((Bb, T + w1.shape[0] - 1, w1.shape[1]), jnp.float32),  # conv1 pad
        pltpu.VMEM((Bb, T + w2.shape[0] - 1, w2.shape[1]), jnp.float32),  # conv2 pad
        pltpu.VMEM((Bb, T + w3.shape[0] - 1, w3.shape[1]), jnp.float32),  # conv3 pad
    ]

    out = pl.pallas_call(
        _make_kernel(),
        out_shape=jax.ShapeDtypeStruct((B, n_out), jnp.float32),
        grid=grid,
        in_specs=in_specs,
        out_specs=pl.BlockSpec((Bb, n_out), lambda i: (i, 0)),
        scratch_shapes=scratch_shapes,
        compiler_params=pltpu.CompilerParams(
            dimension_semantics=("parallel",)),
    )(video_r, text, *kparams)

    return out[:, :3], out[:, 3:]


def init_params(key):
    ks = jax.random.split(key, 12)

    def rnd(k, shape, scale):
        return scale * jax.random.normal(k, shape, jnp.float32)

    # conv weights stored as (K, Cin, Cout) == torch (Cout, Cin, K) transposed
    w1 = rnd(ks[0], (3, 3, 64), 0.3)
    b1 = rnd(ks[1], (64,), 0.1)
    w2 = rnd(ks[2], (5, 64, 128), 0.08)
    b2 = rnd(ks[3], (128,), 0.1)
    w3 = rnd(ks[4], (7, 128, 256), 0.04)
    b3 = rnd(ks[5], (256,), 0.1)
    wf = rnd(ks[6], (256 + 768, 128), 0.05)     # fc1: rows 0..255 video, rest text
    bf = rnd(ks[7], (128,), 0.1)
    wop = rnd(ks[8], (128, 3), 0.1)
    bop = rnd(ks[9], (3,), 0.1)
    wem = rnd(ks[10], (128, 8), 0.1)
    bem = rnd(ks[11], (8,), 0.1)
    return (w1, b1, w2, b2, w3, b3, wf, bf, wop, bop, wem, bem)


def reference(video, text, params):
    """Pure-JAX reference matching the PyTorch VCCSAModel forward."""
    (w1, b1, w2, b2, w3, b3, wf, bf, wop, bop, wem, bem) = params

    def conv(x, w, b):                          # x: (B, T, Cin), w: (K, Cin, Cout)
        K = w.shape[0]
        pad = (K - 1) // 2
        T = x.shape[1]
        xp = jnp.pad(x, ((0, 0), (pad, pad), (0, 0)))
        out = sum(jnp.einsum('btc,co->bto', xp[:, k:k + T, :], w[k])
                  for k in range(K))
        return jnp.maximum(out + b, 0.0)

    x = video.mean(axis=(2, 3))                                # (B, T, C)
    x = conv(x, w1, b1)
    x = conv(x, w2, b2)
    x = conv(x, w3, b3)
    pooled = x.mean(axis=1)                                    # (B, 256)
    combined = jnp.concatenate([pooled, text], axis=-1)        # (B, 1024)
    h = jnp.maximum(combined @ wf + bf, 0.0)                   # (B, 128)
    return h @ wop + bop, h @ wem + bem


if __name__ == "__main__":
    key = jax.random.PRNGKey(0)
    kv, kt, kp = jax.random.split(key, 3)
    B, T, H, W, C = 2, 16, 8, 8, 3
    video_feats = jax.random.normal(kv, (B, T, H, W, C), jnp.float32)
    text_feats = jax.random.normal(kt, (B, 768), jnp.float32)
    params = init_params(kp)

    opinion, emotion = jax.block_until_ready(
        jax.jit(vccsa_forward)(video_feats, text_feats, params))

    op_ref, em_ref = reference(video_feats, text_feats, params)
    assert opinion.shape == (B, 3) and emotion.shape == (B, 8)
    assert jnp.allclose(opinion, op_ref, atol=2e-3, rtol=2e-3), \
        float(jnp.max(jnp.abs(opinion - op_ref)))
    assert jnp.allclose(emotion, em_ref, atol=2e-3, rtol=2e-3), \
        float(jnp.max(jnp.abs(emotion - em_ref)))
    print("KERNEL_OK")
</pallas_src>

<mosaic_0001>
module attributes {stable_mosaic.version = 11 : i64} {
  func.func @kernel(%arg0: i32, %arg1: memref<2x16x192xf32, #tpu.memory_space<vmem>>, %arg2: memref<2x768xf32, #tpu.memory_space<vmem>>, %arg3: memref<192x3xf32, #tpu.memory_space<vmem>>, %arg4: memref<3x3x64xf32, #tpu.memory_space<vmem>>, %arg5: memref<1x64xf32, #tpu.memory_space<vmem>>, %arg6: memref<5x64x128xf32, #tpu.memory_space<vmem>>, %arg7: memref<1x128xf32, #tpu.memory_space<vmem>>, %arg8: memref<7x128x256xf32, #tpu.memory_space<vmem>>, %arg9: memref<1x256xf32, #tpu.memory_space<vmem>>, %arg10: memref<256x128xf32, #tpu.memory_space<vmem>>, %arg11: memref<768x128xf32, #tpu.memory_space<vmem>>, %arg12: memref<1x128xf32, #tpu.memory_space<vmem>>, %arg13: memref<128x11xf32, #tpu.memory_space<vmem>>, %arg14: memref<1x11xf32, #tpu.memory_space<vmem>>, %arg15: memref<2x11xf32, #tpu.memory_space<vmem>>, %arg16: memref<2x18x3xf32, #tpu.memory_space<vmem>>, %arg17: memref<2x20x64xf32, #tpu.memory_space<vmem>>, %arg18: memref<2x22x128xf32, #tpu.memory_space<vmem>>) attributes {dimension_semantics = [#tpu.dimension_semantics<parallel>], iteration_bounds = array<i64: 1>, scalar_prefetch = 0 : i64, scratch_operands = 3 : i64, tpu.core_type = #tpu.core_type<tc>, window_params = [{transform_indices = @transform_0, window_bounds = array<i64: 2, 16, 192>}, {transform_indices = @transform_1, window_bounds = array<i64: 2, 768>}, {pipeline_mode = #tpu.pipeline_mode<synchronous>, transform_indices = @transform_2, window_bounds = array<i64: 192, 3>}, {pipeline_mode = #tpu.pipeline_mode<synchronous>, transform_indices = @transform_3, window_bounds = array<i64: 3, 3, 64>}, {pipeline_mode = #tpu.pipeline_mode<synchronous>, transform_indices = @transform_4, window_bounds = array<i64: 1, 64>}, {pipeline_mode = #tpu.pipeline_mode<synchronous>, transform_indices = @transform_5, window_bounds = array<i64: 5, 64, 128>}, {pipeline_mode = #tpu.pipeline_mode<synchronous>, transform_indices = @transform_6, window_bounds = array<i64: 1, 128>}, {pipeline_mode = #tpu.pipeline_mode<synchronous>, transform_indices = @transform_7, window_bounds = array<i64: 7, 128, 256>}, {pipeline_mode = #tpu.pipeline_mode<synchronous>, transform_indices = @transform_8, window_bounds = array<i64: 1, 256>}, {pipeline_mode = #tpu.pipeline_mode<synchronous>, transform_indices = @transform_9, window_bounds = array<i64: 256, 128>}, {pipeline_mode = #tpu.pipeline_mode<synchronous>, transform_indices = @transform_10, window_bounds = array<i64: 768, 128>}, {pipeline_mode = #tpu.pipeline_mode<synchronous>, transform_indices = @transform_11, window_bounds = array<i64: 1, 128>}, {pipeline_mode = #tpu.pipeline_mode<synchronous>, transform_indices = @transform_12, window_bounds = array<i64: 128, 11>}, {pipeline_mode = #tpu.pipeline_mode<synchronous>, transform_indices = @transform_13, window_bounds = array<i64: 1, 11>}, {transform_indices = @transform_14, window_bounds = array<i64: 2, 11>}]} {
    %c0 = arith.constant 0 : index
    %c0_0 = arith.constant 0 : index
    %c0_1 = arith.constant 0 : index
    %0 = vector.load %arg1[%c0, %c0_0, %c0_1] : memref<2x16x192xf32, #tpu.memory_space<vmem>>, vector<2x16x192xf32>
    %1 = vector.shape_cast %0 : vector<2x16x192xf32> to vector<32x192xf32>
    %c0_2 = arith.constant 0 : index
    %c0_3 = arith.constant 0 : index
    %2 = vector.load %arg3[%c0_2, %c0_3] : memref<192x3xf32, #tpu.memory_space<vmem>>, vector<192x3xf32>
    %cst = arith.constant dense<0.000000e+00> : vector<32x3xf32>
    %3 = tpu.matmul %1, %2, %cst {dimension_numbers = #tpu.dot_dimension_numbers<[1], [0], [0], [1], [0, 0, 1, 1], [], []>} : vector<32x192xf32>, vector<192x3xf32>, vector<32x3xf32> -> vector<32x3xf32>
    %4 = vector.shape_cast %3 : vector<32x3xf32> to vector<2x16x3xf32>
    %cst_4 = arith.constant 0.000000e+00 : f32
    %5 = vector.broadcast %cst_4 : f32 to vector<2x18x3xf32>
    %c0_5 = arith.constant 0 : index
    %c0_6 = arith.constant 0 : index
    %c0_7 = arith.constant 0 : index
    %6 = vector.load %arg16[%c0_5, %c0_6, %c0_7] : memref<2x18x3xf32, #tpu.memory_space<vmem>>, vector<2x18x3xf32>
    tpu.vector_store %arg16[%c0_5, %c0_6, %c0_7], %5 {strides = array<i32>} : memref<2x18x3xf32, #tpu.memory_space<vmem>>, vector<2x18x3xf32>,
    %c0_8 = arith.constant 0 : index
    %c1 = arith.constant 1 : index
    %c0_9 = arith.constant 0 : index
    %7 = vector.load %arg16[%c0_8, %c1, %c0_9] : memref<2x18x3xf32, #tpu.memory_space<vmem>>, vector<2x16x3xf32>
    tpu.vector_store %arg16[%c0_8, %c1, %c0_9], %4 {strides = array<i32>} : memref<2x18x3xf32, #tpu.memory_space<vmem>>, vector<2x16x3xf32>,
    %cst_10 = arith.constant 0.000000e+00 : f32
    %8 = vector.broadcast %cst_10 : f32 to vector<32x64xf32>
    %c0_11 = arith.constant 0 : index
    %c0_12 = arith.constant 0 : index
    %c0_13 = arith.constant 0 : index
    %9 = vector.load %arg16[%c0_11, %c0_12, %c0_13] : memref<2x18x3xf32, #tpu.memory_space<vmem>>, vector<2x16x3xf32>
    %10 = vector.shape_cast %9 : vector<2x16x3xf32> to vector<32x3xf32>
    %c0_14 = arith.constant 0 : index
    %c0_15 = arith.constant 0 : index
    %c0_16 = arith.constant 0 : index
    %11 = vector.load %arg4[%c0_14, %c0_15, %c0_16] : memref<3x3x64xf32, #tpu.memory_space<vmem>>, vector<1x3x64xf32>
    %12 = vector.shape_cast %11 : vector<1x3x64xf32> to vector<3x64xf32>
    %cst_17 = arith.constant dense<0.000000e+00> : vector<32x64xf32>
    %13 = tpu.matmul %10, %12, %cst_17 {dimension_numbers = #tpu.dot_dimension_numbers<[1], [0], [0], [1], [0, 0, 1, 1], [], []>} : vector<32x3xf32>, vector<3x64xf32>, vector<32x64xf32> -> vector<32x64xf32>
    %14 = arith.addf %8, %13 : vector<32x64xf32>
    %c0_18 = arith.constant 0 : index
    %c1_19 = arith.constant 1 : index
    %c0_20 = arith.constant 0 : index
    %15 = vector.load %arg16[%c0_18, %c1_19, %c0_20] : memref<2x18x3xf32, #tpu.memory_space<vmem>>, vector<2x16x3xf32>
    %16 = vector.shape_cast %15 : vector<2x16x3xf32> to vector<32x3xf32>
    %c1_21 = arith.constant 1 : index
    %c0_22 = arith.constant 0 : index
    %c0_23 = arith.constant 0 : index
    %17 = vector.load %arg4[%c1_21, %c0_22, %c0_23] : memref<3x3x64xf32, #tpu.memory_space<vmem>>, vector<1x3x64xf32>
    %18 = vector.shape_cast %17 : vector<1x3x64xf32> to vector<3x64xf32>
    %cst_24 = arith.constant dense<0.000000e+00> : vector<32x64xf32>
    %19 = tpu.matmul %16, %18, %cst_24 {dimension_numbers = #tpu.dot_dimension_numbers<[1], [0], [0], [1], [0, 0, 1, 1], [], []>} : vector<32x3xf32>, vector<3x64xf32>, vector<32x64xf32> -> vector<32x64xf32>
    %20 = arith.addf %14, %19 : vector<32x64xf32>
    %c0_25 = arith.constant 0 : index
    %c2 = arith.constant 2 : index
    %c0_26 = arith.constant 0 : index
    %21 = vector.load %arg16[%c0_25, %c2, %c0_26] : memref<2x18x3xf32, #tpu.memory_space<vmem>>, vector<2x16x3xf32>
    %22 = vector.shape_cast %21 : vector<2x16x3xf32> to vector<32x3xf32>
    %c2_27 = arith.constant 2 : index
    %c0_28 = arith.constant 0 : index
    %c0_29 = arith.constant 0 : index
    %23 = vector.load %arg4[%c2_27, %c0_28, %c0_29] : memref<3x3x64xf32, #tpu.memory_space<vmem>>, vector<1x3x64xf32>
    %24 = vector.shape_cast %23 : vector<1x3x64xf32> to vector<3x64xf32>
    %cst_30 = arith.constant dense<0.000000e+00> : vector<32x64xf32>
    %25 = tpu.matmul %22, %24, %cst_30 {dimension_numbers = #tpu.dot_dimension_numbers<[1], [0], [0], [1], [0, 0, 1, 1], [], []>} : vector<32x3xf32>, vector<3x64xf32>, vector<32x64xf32> -> vector<32x64xf32>
    %26 = arith.addf %20, %25 : vector<32x64xf32>
    %c0_31 = arith.constant 0 : index
    %c0_32 = arith.constant 0 : index
    %27 = vector.load %arg5[%c0_31, %c0_32] : memref<1x64xf32, #tpu.memory_space<vmem>>, vector<1x64xf32>
    %28 = vector.broadcast %27 : vector<1x64xf32> to vector<32x64xf32>
    %29 = arith.addf %26, %28 : vector<32x64xf32>
    %cst_33 = arith.constant 0.000000e+00 : f32
    %30 = vector.broadcast %cst_33 : f32 to vector<32x64xf32>
    %31 = arith.maximumf %29, %30 : vector<32x64xf32>
    %32 = vector.shape_cast %31 : vector<32x64xf32> to vector<2x16x64xf32>
    %cst_34 = arith.constant 0.000000e+00 : f32
    %33 = vector.broadcast %cst_34 : f32 to vector<2x20x64xf32>
    %c0_35 = arith.constant 0 : index
    %c0_36 = arith.constant 0 : index
    %c0_37 = arith.constant 0 : index
    %34 = vector.load %arg17[%c0_35, %c0_36, %c0_37] : memref<2x20x64xf32, #tpu.memory_space<vmem>>, vector<2x20x64xf32>
    tpu.vector_store %arg17[%c0_35, %c0_36, %c0_37], %33 {strides = array<i32>} : memref<2x20x64xf32, #tpu.memory_space<vmem>>, vector<2x20x64xf32>,
    %c0_38 = arith.constant 0 : index
    %c2_39 = arith.constant 2 : index
    %c0_40 = arith.constant 0 : index
    %35 = vector.load %arg17[%c0_38, %c2_39, %c0_40] : memref<2x20x64xf32, #tpu.memory_space<vmem>>, vector<2x16x64xf32>
    tpu.vector_store %arg17[%c0_38, %c2_39, %c0_40], %32 {strides = array<i32>} : memref<2x20x64xf32, #tpu.memory_space<vmem>>, vector<2x16x64xf32>,
    %cst_41 = arith.constant 0.000000e+00 : f32
    %36 = vector.broadcast %cst_41 : f32 to vector<32x128xf32>
    %c0_42 = arith.constant 0 : index
    %c0_43 = arith.constant 0 : index
    %c0_44 = arith.constant 0 : index
    %37 = vector.load %arg17[%c0_42, %c0_43, %c0_44] : memref<2x20x64xf32, #tpu.memory_space<vmem>>, vector<2x16x64xf32>
    %38 = vector.shape_cast %37 : vector<2x16x64xf32> to vector<32x64xf32>
    %c0_45 = arith.constant 0 : index
    %c0_46 = arith.constant 0 : index
    %c0_47 = arith.constant 0 : index
    %39 = vector.load %arg6[%c0_45, %c0_46, %c0_47] : memref<5x64x128xf32, #tpu.memory_space<vmem>>, vector<1x64x128xf32>
    %40 = vector.shape_cast %39 : vector<1x64x128xf32> to vector<64x128xf32>
    %cst_48 = arith.constant dense<0.000000e+00> : vector<32x128xf32>
    %41 = tpu.matmul %38, %40, %cst_48 {dimension_numbers = #tpu.dot_dimension_numbers<[1], [0], [0], [1], [0, 0, 1, 1], [], []>} : vector<32x64xf32>, vector<64x128xf32>, vector<32x128xf32> -> vector<32x128xf32>
    %42 = arith.addf %36, %41 : vector<32x128xf32>
    %c0_49 = arith.constant 0 : index
    %c1_50 = arith.constant 1 : index
    %c0_51 = arith.constant 0 : index
    %43 = vector.load %arg17[%c0_49, %c1_50, %c0_51] : memref<2x20x64xf32, #tpu.memory_space<vmem>>, vector<2x16x64xf32>
    %44 = vector.shape_cast %43 : vector<2x16x64xf32> to vector<32x64xf32>
    %c1_52 = arith.constant 1 : index
    %c0_53 = arith.constant 0 : index
    %c0_54 = arith.constant 0 : index
    %45 = vector.load %arg6[%c1_52, %c0_53, %c0_54] : memref<5x64x128xf32, #tpu.memory_space<vmem>>, vector<1x64x128xf32>
    %46 = vector.shape_cast %45 : vector<1x64x128xf32> to vector<64x128xf32>
    %cst_55 = arith.constant dense<0.000000e+00> : vector<32x128xf32>
    %47 = tpu.matmul %44, %46, %cst_55 {dimension_numbers = #tpu.dot_dimension_numbers<[1], [0], [0], [1], [0, 0, 1, 1], [], []>} : vector<32x64xf32>, vector<64x128xf32>, vector<32x128xf32> -> vector<32x128xf32>
    %48 = arith.addf %42, %47 : vector<32x128xf32>
    %c0_56 = arith.constant 0 : index
    %c2_57 = arith.constant 2 : index
    %c0_58 = arith.constant 0 : index
    %49 = vector.load %arg17[%c0_56, %c2_57, %c0_58] : memref<2x20x64xf32, #tpu.memory_space<vmem>>, vector<2x16x64xf32>
    %50 = vector.shape_cast %49 : vector<2x16x64xf32> to vector<32x64xf32>
    %c2_59 = arith.constant 2 : index
    %c0_60 = arith.constant 0 : index
    %c0_61 = arith.constant 0 : index
    %51 = vector.load %arg6[%c2_59, %c0_60, %c0_61] : memref<5x64x128xf32, #tpu.memory_space<vmem>>, vector<1x64x128xf32>
    %52 = vector.shape_cast %51 : vector<1x64x128xf32> to vector<64x128xf32>
    %cst_62 = arith.constant dense<0.000000e+00> : vector<32x128xf32>
    %53 = tpu.matmul %50, %52, %cst_62 {dimension_numbers = #tpu.dot_dimension_numbers<[1], [0], [0], [1], [0, 0, 1, 1], [], []>} : vector<32x64xf32>, vector<64x128xf32>, vector<32x128xf32> -> vector<32x128xf32>
    %54 = arith.addf %48, %53 : vector<32x128xf32>
    %c0_63 = arith.constant 0 : index
    %c3 = arith.constant 3 : index
    %c0_64 = arith.constant 0 : index
    %55 = vector.load %arg17[%c0_63, %c3, %c0_64] : memref<2x20x64xf32, #tpu.memory_space<vmem>>, vector<2x16x64xf32>
    %56 = vector.shape_cast %55 : vector<2x16x64xf32> to vector<32x64xf32>
    %c3_65 = arith.constant 3 : index
    %c0_66 = arith.constant 0 : index
    %c0_67 = arith.constant 0 : index
    %57 = vector.load %arg6[%c3_65, %c0_66, %c0_67] : memref<5x64x128xf32, #tpu.memory_space<vmem>>, vector<1x64x128xf32>
    %58 = vector.shape_cast %57 : vector<1x64x128xf32> to vector<64x128xf32>
    %cst_68 = arith.constant dense<0.000000e+00> : vector<32x128xf32>
    %59 = tpu.matmul %56, %58, %cst_68 {dimension_numbers = #tpu.dot_dimension_numbers<[1], [0], [0], [1], [0, 0, 1, 1], [], []>} : vector<32x64xf32>, vector<64x128xf32>, vector<32x128xf32> -> vector<32x128xf32>
    %60 = arith.addf %54, %59 : vector<32x128xf32>
    %c0_69 = arith.constant 0 : index
    %c4 = arith.constant 4 : index
    %c0_70 = arith.constant 0 : index
    %61 = vector.load %arg17[%c0_69, %c4, %c0_70] : memref<2x20x64xf32, #tpu.memory_space<vmem>>, vector<2x16x64xf32>
    %62 = vector.shape_cast %61 : vector<2x16x64xf32> to vector<32x64xf32>
    %c4_71 = arith.constant 4 : index
    %c0_72 = arith.constant 0 : index
    %c0_73 = arith.constant 0 : index
    %63 = vector.load %arg6[%c4_71, %c0_72, %c0_73] : memref<5x64x128xf32, #tpu.memory_space<vmem>>, vector<1x64x128xf32>
    %64 = vector.shape_cast %63 : vector<1x64x128xf32> to vector<64x128xf32>
    %cst_74 = arith.constant dense<0.000000e+00> : vector<32x128xf32>
    %65 = tpu.matmul %62, %64, %cst_74 {dimension_numbers = #tpu.dot_dimension_numbers<[1], [0], [0], [1], [0, 0, 1, 1], [], []>} : vector<32x64xf32>, vector<64x128xf32>, vector<32x128xf32> -> vector<32x128xf32>
    %66 = arith.addf %60, %65 : vector<32x128xf32>
    %c0_75 = arith.constant 0 : index
    %c0_76 = arith.constant 0 : index
    %67 = vector.load %arg7[%c0_75, %c0_76] : memref<1x128xf32, #tpu.memory_space<vmem>>, vector<1x128xf32>
    %68 = vector.broadcast %67 : vector<1x128xf32> to vector<32x128xf32>
    %69 = arith.addf %66, %68 : vector<32x128xf32>
    %cst_77 = arith.constant 0.000000e+00 : f32
    %70 = vector.broadcast %cst_77 : f32 to vector<32x128xf32>
    %71 = arith.maximumf %69, %70 : vector<32x128xf32>
    %72 = vector.shape_cast %71 : vector<32x128xf32> to vector<2x16x128xf32>
    %cst_78 = arith.constant 0.000000e+00 : f32
    %73 = vector.broadcast %cst_78 : f32 to vector<2x22x128xf32>
    %c0_79 = arith.constant 0 : index
    %c0_80 = arith.constant 0 : index
    %c0_81 = arith.constant 0 : index
    %74 = vector.load %arg18[%c0_79, %c0_80, %c0_81] : memref<2x22x128xf32, #tpu.memory_space<vmem>>, vector<2x22x128xf32>
    tpu.vector_store %arg18[%c0_79, %c0_80, %c0_81], %73 {strides = array<i32>} : memref<2x22x128xf32, #tpu.memory_space<vmem>>, vector<2x22x128xf32>,
    %c0_82 = arith.constant 0 : index
    %c3_83 = arith.constant 3 : index
    %c0_84 = arith.constant 0 : index
    %75 = vector.load %arg18[%c0_82, %c3_83, %c0_84] : memref<2x22x128xf32, #tpu.memory_space<vmem>>, vector<2x16x128xf32>
    tpu.vector_store %arg18[%c0_82, %c3_83, %c0_84], %72 {strides = array<i32>} : memref<2x22x128xf32, #tpu.memory_space<vmem>>, vector<2x16x128xf32>,
    %cst_85 = arith.constant 0.000000e+00 : f32
    %76 = vector.broadcast %cst_85 : f32 to vector<32x256xf32>
    %c0_86 = arith.constant 0 : index
    %c0_87 = arith.constant 0 : index
    %c0_88 = arith.constant 0 : index
    %77 = vector.load %arg18[%c0_86, %c0_87, %c0_88] : memref<2x22x128xf32, #tpu.memory_space<vmem>>, vector<2x16x128xf32>
    %78 = vector.shape_cast %77 : vector<2x16x128xf32> to vector<32x128xf32>
    %c0_89 = arith.constant 0 : index
    %c0_90 = arith.constant 0 : index
    %c0_91 = arith.constant 0 : index
    %79 = vector.load %arg8[%c0_89, %c0_90, %c0_91] : memref<7x128x256xf32, #tpu.memory_space<vmem>>, vector<1x128x256xf32>
    %80 = vector.shape_cast %79 : vector<1x128x256xf32> to vector<128x256xf32>
    %cst_92 = arith.constant dense<0.000000e+00> : vector<32x256xf32>
    %81 = tpu.matmul %78, %80, %cst_92 {dimension_numbers = #tpu.dot_dimension_numbers<[1], [0], [0], [1], [0, 0, 1, 1], [], []>} : vector<32x128xf32>, vector<128x256xf32>, vector<32x256xf32> -> vector<32x256xf32>
    %82 = arith.addf %76, %81 : vector<32x256xf32>
    %c0_93 = arith.constant 0 : index
    %c1_94 = arith.constant 1 : index
    %c0_95 = arith.constant 0 : index
    %83 = vector.load %arg18[%c0_93, %c1_94, %c0_95] : memref<2x22x128xf32, #tpu.memory_space<vmem>>, vector<2x16x128xf32>
    %84 = vector.shape_cast %83 : vector<2x16x128xf32> to vector<32x128xf32>
    %c1_96 = arith.constant 1 : index
    %c0_97 = arith.constant 0 : index
    %c0_98 = arith.constant 0 : index
    %85 = vector.load %arg8[%c1_96, %c0_97, %c0_98] : memref<7x128x256xf32, #tpu.memory_space<vmem>>, vector<1x128x256xf32>
    %86 = vector.shape_cast %85 : vector<1x128x256xf32> to vector<128x256xf32>
    %cst_99 = arith.constant dense<0.000000e+00> : vector<32x256xf32>
    %87 = tpu.matmul %84, %86, %cst_99 {dimension_numbers = #tpu.dot_dimension_numbers<[1], [0], [0], [1], [0, 0, 1, 1], [], []>} : vector<32x128xf32>, vector<128x256xf32>, vector<32x256xf32> -> vector<32x256xf32>
    %88 = arith.addf %82, %87 : vector<32x256xf32>
    %c0_100 = arith.constant 0 : index
    %c2_101 = arith.constant 2 : index
    %c0_102 = arith.constant 0 : index
    %89 = vector.load %arg18[%c0_100, %c2_101, %c0_102] : memref<2x22x128xf32, #tpu.memory_space<vmem>>, vector<2x16x128xf32>
    %90 = vector.shape_cast %89 : vector<2x16x128xf32> to vector<32x128xf32>
    %c2_103 = arith.constant 2 : index
    %c0_104 = arith.constant 0 : index
    %c0_105 = arith.constant 0 : index
    %91 = vector.load %arg8[%c2_103, %c0_104, %c0_105] : memref<7x128x256xf32, #tpu.memory_space<vmem>>, vector<1x128x256xf32>
    %92 = vector.shape_cast %91 : vector<1x128x256xf32> to vector<128x256xf32>
    %cst_106 = arith.constant dense<0.000000e+00> : vector<32x256xf32>
    %93 = tpu.matmul %90, %92, %cst_106 {dimension_numbers = #tpu.dot_dimension_numbers<[1], [0], [0], [1], [0, 0, 1, 1], [], []>} : vector<32x128xf32>, vector<128x256xf32>, vector<32x256xf32> -> vector<32x256xf32>
    %94 = arith.addf %88, %93 : vector<32x256xf32>
    %c0_107 = arith.constant 0 : index
    %c3_108 = arith.constant 3 : index
    %c0_109 = arith.constant 0 : index
    %95 = vector.load %arg18[%c0_107, %c3_108, %c0_109] : memref<2x22x128xf32, #tpu.memory_space<vmem>>, vector<2x16x128xf32>
    %96 = vector.shape_cast %95 : vector<2x16x128xf32> to vector<32x128xf32>
    %c3_110 = arith.constant 3 : index
    %c0_111 = arith.constant 0 : index
    %c0_112 = arith.constant 0 : index
    %97 = vector.load %arg8[%c3_110, %c0_111, %c0_112] : memref<7x128x256xf32, #tpu.memory_space<vmem>>, vector<1x128x256xf32>
    %98 = vector.shape_cast %97 : vector<1x128x256xf32> to vector<128x256xf32>
    %cst_113 = arith.constant dense<0.000000e+00> : vector<32x256xf32>
    %99 = tpu.matmul %96, %98, %cst_113 {dimension_numbers = #tpu.dot_dimension_numbers<[1], [0], [0], [1], [0, 0, 1, 1], [], []>} : vector<32x128xf32>, vector<128x256xf32>, vector<32x256xf32> -> vector<32x256xf32>
    %100 = arith.addf %94, %99 : vector<32x256xf32>
    %c0_114 = arith.constant 0 : index
    %c4_115 = arith.constant 4 : index
    %c0_116 = arith.constant 0 : index
    %101 = vector.load %arg18[%c0_114, %c4_115, %c0_116] : memref<2x22x128xf32, #tpu.memory_space<vmem>>, vector<2x16x128xf32>
    %102 = vector.shape_cast %101 : vector<2x16x128xf32> to vector<32x128xf32>
    %c4_117 = arith.constant 4 : index
    %c0_118 = arith.constant 0 : index
    %c0_119 = arith.constant 0 : index
    %103 = vector.load %arg8[%c4_117, %c0_118, %c0_119] : memref<7x128x256xf32, #tpu.memory_space<vmem>>, vector<1x128x256xf32>
    %104 = vector.shape_cast %103 : vector<1x128x256xf32> to vector<128x256xf32>
    %cst_120 = arith.constant dense<0.000000e+00> : vector<32x256xf32>
    %105 = tpu.matmul %102, %104, %cst_120 {dimension_numbers = #tpu.dot_dimension_numbers<[1], [0], [0], [1], [0, 0, 1, 1], [], []>} : vector<32x128xf32>, vector<128x256xf32>, vector<32x256xf32> -> vector<32x256xf32>
    %106 = arith.addf %100, %105 : vector<32x256xf32>
    %c0_121 = arith.constant 0 : index
    %c5 = arith.constant 5 : index
    %c0_122 = arith.constant 0 : index
    %107 = vector.load %arg18[%c0_121, %c5, %c0_122] : memref<2x22x128xf32, #tpu.memory_space<vmem>>, vector<2x16x128xf32>
    %108 = vector.shape_cast %107 : vector<2x16x128xf32> to vector<32x128xf32>
    %c5_123 = arith.constant 5 : index
    %c0_124 = arith.constant 0 : index
    %c0_125 = arith.constant 0 : index
    %109 = vector.load %arg8[%c5_123, %c0_124, %c0_125] : memref<7x128x256xf32, #tpu.memory_space<vmem>>, vector<1x128x256xf32>
    %110 = vector.shape_cast %109 : vector<1x128x256xf32> to vector<128x256xf32>
    %cst_126 = arith.constant dense<0.000000e+00> : vector<32x256xf32>
    %111 = tpu.matmul %108, %110, %cst_126 {dimension_numbers = #tpu.dot_dimension_numbers<[1], [0], [0], [1], [0, 0, 1, 1], [], []>} : vector<32x128xf32>, vector<128x256xf32>, vector<32x256xf32> -> vector<32x256xf32>
    %112 = arith.addf %106, %111 : vector<32x256xf32>
    %c0_127 = arith.constant 0 : index
    %c6 = arith.constant 6 : index
    %c0_128 = arith.constant 0 : index
    %113 = vector.load %arg18[%c0_127, %c6, %c0_128] : memref<2x22x128xf32, #tpu.memory_space<vmem>>, vector<2x16x128xf32>
    %114 = vector.shape_cast %113 : vector<2x16x128xf32> to vector<32x128xf32>
    %c6_129 = arith.constant 6 : index
    %c0_130 = arith.constant 0 : index
    %c0_131 = arith.constant 0 : index
    %115 = vector.load %arg8[%c6_129, %c0_130, %c0_131] : memref<7x128x256xf32, #tpu.memory_space<vmem>>, vector<1x128x256xf32>
    %116 = vector.shape_cast %115 : vector<1x128x256xf32> to vector<128x256xf32>
    %cst_132 = arith.constant dense<0.000000e+00> : vector<32x256xf32>
    %117 = tpu.matmul %114, %116, %cst_132 {dimension_numbers = #tpu.dot_dimension_numbers<[1], [0], [0], [1], [0, 0, 1, 1], [], []>} : vector<32x128xf32>, vector<128x256xf32>, vector<32x256xf32> -> vector<32x256xf32>
    %118 = arith.addf %112, %117 : vector<32x256xf32>
    %c0_133 = arith.constant 0 : index
    %c0_134 = arith.constant 0 : index
    %119 = vector.load %arg9[%c0_133, %c0_134] : memref<1x256xf32, #tpu.memory_space<vmem>>, vector<1x256xf32>
    %120 = vector.broadcast %119 : vector<1x256xf32> to vector<32x256xf32>
    %121 = arith.addf %118, %120 : vector<32x256xf32>
    %cst_135 = arith.constant 0.000000e+00 : f32
    %122 = vector.broadcast %cst_135 : f32 to vector<32x256xf32>
    %123 = arith.maximumf %121, %122 : vector<32x256xf32>
    %124 = vector.shape_cast %123 : vector<32x256xf32> to vector<2x16x256xf32>
    %cst_136 = arith.constant dense<0.000000e+00> : vector<2x256xf32>
    %125 = vector.multi_reduction <add>, %124, %cst_136 [1] : vector<2x16x256xf32> to vector<2x256xf32>
    %cst_137 = arith.constant 1.600000e+01 : f32
    %126 = vector.broadcast %cst_137 : f32 to vector<2x256xf32>
    %127 = arith.divf %125, %126 : vector<2x256xf32>
    %c0_138 = arith.constant 0 : index
    %c0_139 = arith.constant 0 : index
    %128 = vector.load %arg2[%c0_138, %c0_139] : memref<2x768xf32, #tpu.memory_space<vmem>>, vector<2x768xf32>
    %c0_140 = arith.constant 0 : index
    %c0_141 = arith.constant 0 : index
    %129 = vector.load %arg10[%c0_140, %c0_141] : memref<256x128xf32, #tpu.memory_space<vmem>>, vector<256x128xf32>
    %cst_142 = arith.constant dense<0.000000e+00> : vector<2x128xf32>
    %130 = tpu.matmul %127, %129, %cst_142 {dimension_numbers = #tpu.dot_dimension_numbers<[1], [0], [0], [1], [0, 0, 1, 1], [], []>} : vector<2x256xf32>, vector<256x128xf32>, vector<2x128xf32> -> vector<2x128xf32>
    %c0_143 = arith.constant 0 : index
    %c0_144 = arith.constant 0 : index
    %131 = vector.load %arg11[%c0_143, %c0_144] : memref<768x128xf32, #tpu.memory_space<vmem>>, vector<768x128xf32>
    %cst_145 = arith.constant dense<0.000000e+00> : vector<2x128xf32>
    %132 = tpu.matmul %128, %131, %cst_145 {dimension_numbers = #tpu.dot_dimension_numbers<[1], [0], [0], [1], [0, 0, 1, 1], [], []>} : vector<2x768xf32>, vector<768x128xf32>, vector<2x128xf32> -> vector<2x128xf32>
    %133 = arith.addf %130, %132 : vector<2x128xf32>
    %c0_146 = arith.constant 0 : index
    %c0_147 = arith.constant 0 : index
    %134 = vector.load %arg12[%c0_146, %c0_147] : memref<1x128xf32, #tpu.memory_space<vmem>>, vector<1x128xf32>
    %135 = vector.broadcast %134 : vector<1x128xf32> to vector<2x128xf32>
    %136 = arith.addf %133, %135 : vector<2x128xf32>
    %cst_148 = arith.constant 0.000000e+00 : f32
    %137 = vector.broadcast %cst_148 : f32 to vector<2x128xf32>
    %138 = arith.maximumf %136, %137 : vector<2x128xf32>
    %c0_149 = arith.constant 0 : index
    %c0_150 = arith.constant 0 : index
    %139 = vector.load %arg13[%c0_149, %c0_150] : memref<128x11xf32, #tpu.memory_space<vmem>>, vector<128x11xf32>
    %cst_151 = arith.constant dense<0.000000e+00> : vector<2x11xf32>
    %140 = tpu.matmul %138, %139, %cst_151 {dimension_numbers = #tpu.dot_dimension_numbers<[1], [0], [0], [1], [0, 0, 1, 1], [], []>} : vector<2x128xf32>, vector<128x11xf32>, vector<2x11xf32> -> vector<2x11xf32>
    %c0_152 = arith.constant 0 : index
    %c0_153 = arith.constant 0 : index
    %141 = vector.load %arg14[%c0_152, %c0_153] : memref<1x11xf32, #tpu.memory_space<vmem>>, vector<1x11xf32>
    %142 = vector.broadcast %141 : vector<1x11xf32> to vector<2x11xf32>
    %143 = arith.addf %140, %142 : vector<2x11xf32>
    %c0_154 = arith.constant 0 : index
    %c0_155 = arith.constant 0 : index
    %144 = vector.load %arg15[%c0_154, %c0_155] : memref<2x11xf32, #tpu.memory_space<vmem>>, vector<2x11xf32>
    tpu.vector_store %arg15[%c0_154, %c0_155], %143 {strides = array<i32>} : memref<2x11xf32, #tpu.memory_space<vmem>>, vector<2x11xf32>,
    return
  }
  func.func @transform_0(%arg0: i32) -> (i32, i32, i32) {
    %c0_i32 = arith.constant 0 : i32
    %c0_i32_0 = arith.constant 0 : i32
    %c0_i32_1 = arith.constant 0 : i32
    return %arg0, %c0_i32, %c0_i32_0 : i32, i32, i32
  }
  func.func @transform_1(%arg0: i32) -> (i32, i32) {
    %c0_i32 = arith.constant 0 : i32
    %c0_i32_0 = arith.constant 0 : i32
    return %arg0, %c0_i32 : i32, i32
  }
  func.func @transform_2(%arg0: i32) -> (i32, i32) {
    %c0_i32 = arith.constant 0 : i32
    %c0_i32_0 = arith.constant 0 : i32
    %c0_i32_1 = arith.constant 0 : i32
    return %c0_i32, %c0_i32_0 : i32, i32
  }
  func.func @transform_3(%arg0: i32) -> (i32, i32, i32) {
    %c0_i32 = arith.constant 0 : i32
    %c0_i32_0 = arith.constant 0 : i32
    %c0_i32_1 = arith.constant 0 : i32
    %c0_i32_2 = arith.constant 0 : i32
    return %c0_i32, %c0_i32_0, %c0_i32_1 : i32, i32, i32
  }
  func.func @transform_4(%arg0: i32) -> (i32, i32) {
    %c0_i32 = arith.constant 0 : i32
    %c0_i32_0 = arith.constant 0 : i32
    %c0_i32_1 = arith.constant 0 : i32
    return %c0_i32, %c0_i32_0 : i32, i32
  }
  func.func @transform_5(%arg0: i32) -> (i32, i32, i32) {
    %c0_i32 = arith.constant 0 : i32
    %c0_i32_0 = arith.constant 0 : i32
    %c0_i32_1 = arith.constant 0 : i32
    %c0_i32_2 = arith.constant 0 : i32
    return %c0_i32, %c0_i32_0, %c0_i32_1 : i32, i32, i32
  }
  func.func @transform_6(%arg0: i32) -> (i32, i32) {
    %c0_i32 = arith.constant 0 : i32
    %c0_i32_0 = arith.constant 0 : i32
    %c0_i32_1 = arith.constant 0 : i32
    return %c0_i32, %c0_i32_0 : i32, i32
  }
  func.func @transform_7(%arg0: i32) -> (i32, i32, i32) {
    %c0_i32 = arith.constant 0 : i32
    %c0_i32_0 = arith.constant 0 : i32
    %c0_i32_1 = arith.constant 0 : i32
    %c0_i32_2 = arith.constant 0 : i32
    return %c0_i32, %c0_i32_0, %c0_i32_1 : i32, i32, i32
  }
  func.func @transform_8(%arg0: i32) -> (i32, i32) {
    %c0_i32 = arith.constant 0 : i32
    %c0_i32_0 = arith.constant 0 : i32
    %c0_i32_1 = arith.constant 0 : i32
    return %c0_i32, %c0_i32_0 : i32, i32
  }
  func.func @transform_9(%arg0: i32) -> (i32, i32) {
    %c0_i32 = arith.constant 0 : i32
    %c0_i32_0 = arith.constant 0 : i32
    %c0_i32_1 = arith.constant 0 : i32
    return %c0_i32, %c0_i32_0 : i32, i32
  }
  func.func @transform_10(%arg0: i32) -> (i32, i32) {
    %c0_i32 = arith.constant 0 : i32
    %c0_i32_0 = arith.constant 0 : i32
    %c0_i32_1 = arith.constant 0 : i32
    return %c0_i32, %c0_i32_0 : i32, i32
  }
  func.func @transform_11(%arg0: i32) -> (i32, i32) {
    %c0_i32 = arith.constant 0 : i32
    %c0_i32_0 = arith.constant 0 : i32
    %c0_i32_1 = arith.constant 0 : i32
    return %c0_i32, %c0_i32_0 : i32, i32
  }
  func.func @transform_12(%arg0: i32) -> (i32, i32) {
    %c0_i32 = arith.constant 0 : i32
    %c0_i32_0 = arith.constant 0 : i32
    %c0_i32_1 = arith.constant 0 : i32
    return %c0_i32, %c0_i32_0 : i32, i32
  }
  func.func @transform_13(%arg0: i32) -> (i32, i32) {
    %c0_i32 = arith.constant 0 : i32
    %c0_i32_0 = arith.constant 0 : i32
    %c0_i32_1 = arith.constant 0 : i32
    return %c0_i32, %c0_i32_0 : i32, i32
  }
  func.func @transform_14(%arg0: i32) -> (i32, i32) {
    %c0_i32 = arith.constant 0 : i32
    %c0_i32_0 = arith.constant 0 : i32
    return %arg0, %c0_i32 : i32, i32
  }
}

</mosaic_0001>

<llo_original>
// kernel: vccsa_forward.1
$region0: #{vccsa_forward.1}
  #allocation0 [shape = 'u32[]', space=smem, size = 0x4, offset = 0x4, fixed_abs, tag = 'smem constant byte address 0x4 - core index']
  #allocation1 [shape = 'u32[144,128]{1,0:T(1,128)}', space=vmem, size = 0x12000, scoped, tag = 'internal scratch']
  #allocation2 [shape = 'f32[2,18,3]{2,1,0:T(8,128)}', space=vmem, size = 0x6000, scoped, tag = 'scratch operand']
  #allocation3 [shape = 'f32[2,20,64]{2,1,0:T(8,128)}', space=vmem, size = 0x6000, scoped, tag = 'scratch operand']
  #allocation4 [shape = 'f32[2,22,128]{2,1,0:T(8,128)}', space=vmem, size = 0x6000, scoped, tag = 'scratch operand']
  %s0 = inlined_call_operand.vmem [shape: f32[2,16,192], index: 0, kind: input, shape index: {}]
  %s1 = inlined_call_operand.vmem [shape: f32[2,768], index: 1, kind: input, shape index: {}]
  %s2 = inlined_call_operand.vmem [shape: f32[192,3], index: 2, kind: input, shape index: {}]
  %s3 = inlined_call_operand.vmem [shape: f32[3,3,64], index: 3, kind: input, shape index: {}]
  %s4 = inlined_call_operand.vmem [shape: f32[1,64], index: 4, kind: input, shape index: {}]
  %s5 = inlined_call_operand.vmem [shape: f32[5,64,128], index: 5, kind: input, shape index: {}]
  %s6 = inlined_call_operand.vmem [shape: f32[1,128], index: 6, kind: input, shape index: {}]
  %s7 = inlined_call_operand.vmem [shape: f32[7,128,256], index: 7, kind: input, shape index: {}]
  %s8 = inlined_call_operand.vmem [shape: f32[1,256], index: 8, kind: input, shape index: {}]
  %s9 = inlined_call_operand.vmem [shape: f32[256,128], index: 9, kind: input, shape index: {}]
  %s10 = inlined_call_operand.vmem [shape: f32[768,128], index: 10, kind: input, shape index: {}]
  %s11 = inlined_call_operand.vmem [shape: f32[1,128], index: 11, kind: input, shape index: {}]
  %s12 = inlined_call_operand.vmem [shape: f32[128,11], index: 12, kind: input, shape index: {}]
  %s13 = inlined_call_operand.vmem [shape: f32[1,11], index: 13, kind: input, shape index: {}]
  %s14 = inlined_call_operand.vmem [shape: f32[2,11], index: 14, kind: output, shape index: {}]
  %s15 = sld [smem:[#allocation0]]
  $region66: #{vccsa_forward.1} parent=0
    _
  %s17 = ssub.s32 1, %s15
  %s18 = scalar_select 0, %s17, %s15
  // Predicated region
  $region2: #{vccsa_forward.1} parent=0 // pred_check
    _
  $region3: #{vccsa_forward.1} parent=0 // pred_check_branch
    %20 = sbr.rel (0) target = $region5
  $region4: #{vccsa_forward.1} parent=0 // pred_region
    _
  $region5: #{vccsa_forward.1} parent=0 // pred_fallthru
    _
  // Predicated region
  $region6: #{vccsa_forward.1} parent=0 // pred_check
    _
  $region7: #{vccsa_forward.1} parent=0 // pred_check_branch
    %22 = sbr.rel (0) target = $region9
  $region8: #{vccsa_forward.1} parent=0 // pred_region
    _
  $region9: #{vccsa_forward.1} parent=0 // pred_fallthru
    _
  // Predicated region
  $region10: #{vccsa_forward.1} parent=0 // pred_check
    _
  $region11: #{vccsa_forward.1} parent=0 // pred_check_branch
    %24 = sbr.rel (0) target = $region13
  $region12: #{vccsa_forward.1} parent=0 // pred_region
    _
  $region13: #{vccsa_forward.1} parent=0 // pred_fallthru
    _
  // Predicated region
  $region14: #{vccsa_forward.1} parent=0 // pred_check
    _
  $region15: #{vccsa_forward.1} parent=0 // pred_check_branch
    %26 = sbr.rel (0) target = $region17
  $region16: #{vccsa_forward.1} parent=0 // pred_region
    _
  $region17: #{vccsa_forward.1} parent=0 // pred_fallthru
    _
  // Predicated region
  $region18: #{vccsa_forward.1} parent=0 // pred_check
    _
  $region19: #{vccsa_forward.1} parent=0 // pred_check_branch
    %28 = sbr.rel (0) target = $region21
  $region20: #{vccsa_forward.1} parent=0 // pred_region
    _
  $region21: #{vccsa_forward.1} parent=0 // pred_fallthru
    _
  // Predicated region
  $region22: #{vccsa_forward.1} parent=0 // pred_check
    _
  $region23: #{vccsa_forward.1} parent=0 // pred_check_branch
    %30 = sbr.rel (0) target = $region25
  $region24: #{vccsa_forward.1} parent=0 // pred_region
    _
  $region25: #{vccsa_forward.1} parent=0 // pred_fallthru
    _
  // Predicated region
  $region26: #{vccsa_forward.1} parent=0 // pred_check
    _
  $region27: #{vccsa_forward.1} parent=0 // pred_check_branch
    %32 = sbr.rel (0) target = $region29
  $region28: #{vccsa_forward.1} parent=0 // pred_region
    _
  $region29: #{vccsa_forward.1} parent=0 // pred_fallthru
    _
  // Predicated region
  $region30: #{vccsa_forward.1} parent=0 // pred_check
    _
  $region31: #{vccsa_forward.1} parent=0 // pred_check_branch
    %34 = sbr.rel (0) target = $region33
  $region32: #{vccsa_forward.1} parent=0 // pred_region
    _
  $region33: #{vccsa_forward.1} parent=0 // pred_fallthru
    _
  // Predicated region
  $region34: #{vccsa_forward.1} parent=0 // pred_check
    _
  $region35: #{vccsa_forward.1} parent=0 // pred_check_branch
    %36 = sbr.rel (0) target = $region37
  $region36: #{vccsa_forward.1} parent=0 // pred_region
    _
  $region37: #{vccsa_forward.1} parent=0 // pred_fallthru
    _
  // Predicated region
  $region38: #{vccsa_forward.1} parent=0 // pred_check
    _
  $region39: #{vccsa_forward.1} parent=0 // pred_check_branch
    %38 = sbr.rel (0) target = $region41
  $region40: #{vccsa_forward.1} parent=0 // pred_region
    _
  $region41: #{vccsa_forward.1} parent=0 // pred_fallthru
    _
  // Predicated region
  $region42: #{vccsa_forward.1} parent=0 // pred_check
    _
  $region43: #{vccsa_forward.1} parent=0 // pred_check_branch
    %40 = sbr.rel (0) target = $region45
  $region44: #{vccsa_forward.1} parent=0 // pred_region
    _
  $region45: #{vccsa_forward.1} parent=0 // pred_fallthru
    _
  // Predicated region
  $region46: #{vccsa_forward.1} parent=0 // pred_check
    _
  $region47: #{vccsa_forward.1} parent=0 // pred_check_branch
    %42 = sbr.rel (0) target = $region49
  $region48: #{vccsa_forward.1} parent=0 // pred_region
    _
  $region49: #{vccsa_forward.1} parent=0 // pred_fallthru
    _
  // Predicated region
  $region50: #{vccsa_forward.1} parent=0 // pred_check
    _
  $region51: #{vccsa_forward.1} parent=0 // pred_check_branch
    %44 = sbr.rel (0) target = $region53
  $region52: #{vccsa_forward.1} parent=0 // pred_region
    _
  $region53: #{vccsa_forward.1} parent=0 // pred_fallthru
    _
  // Predicated region
  $region54: #{vccsa_forward.1} parent=0 // pred_check
    _
  $region55: #{vccsa_forward.1} parent=0 // pred_check_branch
    %46 = sbr.rel (0) target = $region57
  $region56: #{vccsa_forward.1} parent=0 // pred_region
    _
  $region57: #{vccsa_forward.1} parent=0 // pred_fallthru
    _
  %v47 = vld [vmem:[%s0] sm:$0xff]
  %v48 = vld [vmem:[%s0 + $0x8] sm:$0xff]
  %v49 = vld [vmem:[%s0 + $0x10] sm:$0xff]
  %v50 = vld [vmem:[%s0 + $0x18] sm:$0xff]
  %v51 = vld [vmem:[%s0 + $0x20] sm:$0xff]
  %v52 = vld [vmem:[%s0 + $0x28] sm:$0xff]
  %v53 = vld [vmem:[%s0 + $0x30] sm:$0xff]
  %v54 = vld [vmem:[%s0 + $0x38] sm:$0xff]
  %v55 = vld [vmem:[%s2] sm:$0xff]
  %v56 = vld [vmem:[%s2 + $0x8] sm:$0xff]
  %v57 = vld [vmem:[%s2 + $0x10] sm:$0xff]
  %v58 = vld [vmem:[%s2 + $0x18] sm:$0xff]
  %v59 = vld [vmem:[%s2 + $0x20] sm:$0xff]
  %v60 = vld [vmem:[%s2 + $0x28] sm:$0xff]
  %v61 = vld [vmem:[%s2 + $0x30] sm:$0xff]
  %v62 = vld [vmem:[%s2 + $0x38] sm:$0xff]
  %v63 = vld [vmem:[%s2 + $0x40] sm:$0xff]
  %v64 = vld [vmem:[%s2 + $0x48] sm:$0xff]
  %v65 = vld [vmem:[%s2 + $0x50] sm:$0xff]
  %v66 = vld [vmem:[%s2 + $0x58] sm:$0xff]
  %v67 = vld [vmem:[%s2 + $0x60] sm:$0xff]
  %v68 = vld [vmem:[%s2 + $0x68] sm:$0xff]
  %v69 = vld [vmem:[%s2 + $0x70] sm:$0xff]
  %v70 = vld [vmem:[%s2 + $0x78] sm:$0xff]
  %v71 = vld [vmem:[%s2 + $0x80] sm:$0xff]
  %v72 = vld [vmem:[%s2 + $0x88] sm:$0xff]
  %v73 = vld [vmem:[%s2 + $0x90] sm:$0xff]
  %v74 = vld [vmem:[%s2 + $0x98] sm:$0xff]
  %v75 = vld [vmem:[%s2 + $0xa0] sm:$0xff]
  %v76 = vld [vmem:[%s2 + $0xa8] sm:$0xff]
  %v77 = vld [vmem:[%s2 + $0xb0] sm:$0xff]
  %v78 = vld [vmem:[%s2 + $0xb8] sm:$0xff]
  %vm79 = vcmask 523264
  %v81 = vsel %vm79, %v48, 0
  %v84 = vsel %vm79, %v50, 0
  %v87 = vsel %vm79, %v52, 0
  %v90 = vsel %vm79, %v54, 0
  %92 = vmatprep.subr.mxu0 0.0
  %93 = vmatpush1.msra.mxu0 %v55
  %94 = vmatprep.subr.mxu0 0.0
  %95 = vmatpush1.msra.mxu0 %v56
  %96 = vmatprep.subr.mxu0 0.0
  %97 = vmatpush1.msra.mxu0 %v57
  %98 = vmatprep.subr.mxu0 0.0
  %99 = vmatpush1.msra.mxu0 %v58
  %100 = vmatprep.subr.mxu0 0.0
  %101 = vmatpush1.msra.mxu0 %v59
  %102 = vmatprep.subr.mxu0 0.0
  %103 = vmatpush1.msra.mxu0 %v60
  %104 = vmatprep.subr.mxu0 0.0
  %105 = vmatpush1.msra.mxu0 %v61
  %106 = vmatprep.subr.mxu0 0.0
  %107 = vmatpush1.msra.mxu0 %v62
  %108 = vmatprep.subr.mxu0 0.0
  %109 = vmatpush1.msra.mxu0 %v63
  %110 = vmatprep.subr.mxu0 0.0
  %111 = vmatpush1.msra.mxu0 %v64
  %112 = vmatprep.subr.mxu0 0.0
  %113 = vmatpush1.msra.mxu0 %v65
  %114 = vmatprep.subr.mxu0 0.0
  %115 = vmatpush1.msra.mxu0 %v66
  %116 = vmatprep.subr.mxu0 0.0
  %117 = vmatpush1.msra.mxu0 %v67
  %118 = vmatprep.subr.mxu0 0.0
  %119 = vmatpush1.msra.mxu0 %v68
  %120 = vmatprep.subr.mxu0 0.0
  %121 = vmatpush1.msra.mxu0 %v69
  %122 = vmatprep.subr.mxu0 0.0
  %123 = vmatpush1.msra.mxu0 %v70
  %124 = vmatprep.subr.mxu0 0.0
  %125 = vmatpush1.msra.mxu0 %v71
  %126 = vmatprep.subr.mxu0 0.0
  %127 = vmatpush1.msra.mxu0 %v72
  %128 = vmatprep.subr.mxu0 0.0
  %129 = vmatpush1.msra.mxu0 %v73
  %130 = vmatprep.subr.mxu0 0.0
  %131 = vmatpush1.msra.mxu0 %v74
  %132 = vmatprep.subr.mxu0 0.0
  %133 = vmatpush1.msra.mxu0 %v75
  %134 = vmatprep.subr.mxu0 0.0
  %135 = vmatpush1.msra.mxu0 %v76
  %136 = vmatprep.subr.mxu0 0.0
  %137 = vmatpush1.msra.mxu0 %v77
  %138 = vmatprep.subr.mxu0 0.0
  %139 = vmatpush1.msra.mxu0 %v78
  %140 = vmatprep.subr.mxu0 0.0
  %141 = vmatpush1.msra.mxu0 0.0
  %142 = vmatprep.subr.mxu0 0.0
  %143 = vmatpush1.msra.mxu0 0.0
  %144 = vmatprep.subr.mxu0 0.0
  %145 = vmatpush1.msra.mxu0 0.0
  %146 = vmatprep.subr.mxu0 0.0
  %147 = vmatpush1.msra.mxu0 0.0
  %148 = vmatprep.subr.mxu0 0.0
  %149 = vmatpush1.msra.mxu0 0.0
  %150 = vmatprep.subr.mxu0 0.0
  %151 = vmatpush1.msra.mxu0 0.0
  %152 = vmatprep.subr.mxu0 0.0
  %153 = vmatpush1.msra.mxu0 0.0
  %154 = vmatprep.subr.mxu0 0.0
  %155 = vmatpush1.msra.mxu0 0.0
  %156 = vmatprep.mubr.f32.mxu0 %v81
  %157 = vmatmul.mubr.f32.gmra.mrb[0].mxu0 %v47
  %v158 = vpop.f32.mrb[0].mxu0
  %v159 = vadd.f32 0.0, %v158
  %v160 = vpop.f32.mrb[0].mxu0
  %161 = vmatprep.mubr.f32.mxu0 %v84
  %162 = vmatmul.mubr.f32.gmra.mrb[0].mxu0 %v49
  %v163 = vpop.f32.mrb[0].mxu0
  %v164 = vadd.f32 0.0, %v163
  %v165 = vpop.f32.mrb[0].mxu0
  %166 = vmatprep.mubr.f32.mxu0 %v87
  %167 = vmatmul.mubr.f32.gmra.mrb[0].mxu0 %v51
  %v168 = vpop.f32.mrb[0].mxu0
  %v169 = vadd.f32 0.0, %v168
  %v170 = vpop.f32.mrb[0].mxu0
  %171 = vmatprep.mubr.f32.mxu0 %v90
  %172 = vmatmul.mubr.f32.gmra.mrb[0].mxu0 %v53
  %v173 = vpop.f32.mrb[0].mxu0
  %v174 = vadd.f32 0.0, %v173
  %v175 = vpop.f32.mrb[0].mxu0
  %176 = vdwg.mxu0
  %vm177 = vcmask 23552
  %178 = vst.msk [vmem:[#allocation2] sm:$0xff] %vm177, 0.0
  %179 = vst.msk [vmem:[#allocation2 + $0x8] sm:$0xff] %vm177, 0.0
  %vm180 = vcmask 17408
  %181 = vst.msk [vmem:[#allocation2 + $0x10] sm:$0x3] %vm180, 0.0
  %182 = vst.msk [vmem:[#allocation2 + $0x18] sm:$0xff] %vm177, 0.0
  %183 = vst.msk [vmem:[#allocation2 + $0x20] sm:$0xff] %vm177, 0.0
  %184 = vst.msk [vmem:[#allocation2 + $0x28] sm:$0x3] %vm180, 0.0
  %185 = vst.msk [vmem:[#allocation2 + $0x1] sm:$0xff] %vm177, %v159
  %186 = vst.msk [vmem:[#allocation2 + $0x9] sm:$0xff] %vm177, %v164
  %187 = vst.msk [vmem:[#allocation2 + $0x19] sm:$0xff] %vm177, %v169
  %188 = vst.msk [vmem:[#allocation2 + $0x21] sm:$0xff] %vm177, %v174
  %v189 = vld [vmem:[#allocation2] sm:$0xff]
  %v190 = vld [vmem:[#allocation2 + $0x8] sm:$0xff]
  %v191 = vld [vmem:[#allocation2 + $0x18] sm:$0xff]
  %v192 = vld [vmem:[#allocation2 + $0x20] sm:$0xff]
  %v193 = vld [vmem:[%s3] sm:$0x7]
  %v194 = vld [vmem:[#allocation2 + $0x1] sm:$0xff]
  %v195 = vld [vmem:[#allocation2 + $0x9] sm:$0xff]
  %v196 = vld [vmem:[#allocation2 + $0x19] sm:$0xff]
  %v197 = vld [vmem:[#allocation2 + $0x21] sm:$0xff]
  %s198 = scalar_lea.vmem %s3, 4
  %v199 = vld [vmem:[%s198] sm:$0x7]
  %v201 = vsel %vm177, %v194, 0
  %v204 = vsel %vm177, %v195, 0
  %v207 = vsel %vm177, %v196, 0
  %v210 = vsel %vm177, %v197, 0
  %vm212 = vcmask 1042432
  %v214 = vsel %vm212, %v199, 0
  %216 = vmatprep.subr.mxu0 0.0
  %217 = vmatpush1.msra.mxu0 %v214
  %218 = vmatprep.subr.mxu0 0.0
  %219 = vmatpush1.msra.mxu0 0.0
  %220 = vmatprep.subr.mxu0 0.0
  %221 = vmatpush1.msra.mxu0 0.0
  %222 = vmatprep.subr.mxu0 0.0
  %223 = vmatpush1.msra.mxu0 0.0
  %224 = vmatprep.subr.mxu0 0.0
  %225 = vmatpush1.msra.mxu0 0.0
  %226 = vmatprep.subr.mxu0 0.0
  %227 = vmatpush1.msra.mxu0 0.0
  %228 = vmatprep.subr.mxu0 0.0
  %229 = vmatpush1.msra.mxu0 0.0
  %230 = vmatprep.subr.mxu0 0.0
  %231 = vmatpush1.msra.mxu0 0.0
  %232 = vmatprep.subr.mxu0 0.0
  %233 = vmatpush1.msra.mxu0 0.0
  %234 = vmatprep.subr.mxu0 0.0
  %235 = vmatpush1.msra.mxu0 0.0
  %236 = vmatprep.subr.mxu0 0.0
  %237 = vmatpush1.msra.mxu0 0.0
  %238 = vmatprep.subr.mxu0 0.0
  %239 = vmatpush1.msra.mxu0 0.0
  %240 = vmatprep.subr.mxu0 0.0
  %241 = vmatpush1.msra.mxu0 0.0
  %242 = vmatprep.subr.mxu0 0.0
  %243 = vmatpush1.msra.mxu0 0.0
  %244 = vmatprep.subr.mxu0 0.0
  %245 = vmatpush1.msra.mxu0 0.0
  %246 = vmatprep.subr.mxu0 0.0
  %247 = vmatpush1.msra.mxu0 0.0
  %248 = vmatprep.subr.mxu0 0.0
  %249 = vmatpush1.msra.mxu0 0.0
  %250 = vmatprep.subr.mxu0 0.0
  %251 = vmatpush1.msra.mxu0 0.0
  %252 = vmatprep.subr.mxu0 0.0
  %253 = vmatpush1.msra.mxu0 0.0
  %254 = vmatprep.subr.mxu0 0.0
  %255 = vmatpush1.msra.mxu0 0.0
  %256 = vmatprep.subr.mxu0 0.0
  %257 = vmatpush1.msra.mxu0 0.0
  %258 = vmatprep.subr.mxu0 0.0
  %259 = vmatpush1.msra.mxu0 0.0
  %260 = vmatprep.subr.mxu0 0.0
  %261 = vmatpush1.msra.mxu0 0.0
  %262 = vmatprep.subr.mxu0 0.0
  %263 = vmatpush1.msra.mxu0 0.0
  %264 = vmatprep.subr.mxu0 0.0
  %265 = vmatpush1.msra.mxu0 0.0
  %266 = vmatprep.subr.mxu0 0.0
  %267 = vmatpush1.msra.mxu0 0.0
  %268 = vmatprep.subr.mxu0 0.0
  %269 = vmatpush1.msra.mxu0 0.0
  %270 = vmatprep.subr.mxu0 0.0
  %271 = vmatpush1.msra.mxu0 0.0
  %272 = vmatprep.subr.mxu0 0.0
  %273 = vmatpush1.msra.mxu0 0.0
  %274 = vmatprep.subr.mxu0 0.0
  %275 = vmatpush1.msra.mxu0 0.0
  %276 = vmatprep.subr.mxu0 0.0
  %277 = vmatpush1.msra.mxu0 0.0
  %278 = vmatprep.subr.mxu0 0.0
  %279 = vmatpush1.msra.mxu0 0.0
  %280 = vmatprep.mubr.f32.mxu0 0.0
  %281 = vmatmul.mubr.f32.gmra.mrb[0].mxu0 %v201
  %v282 = vpop.f32.mrb[0].mxu0
  %v283 = vadd.f32 0.0, %v282
  %v284 = vpop.f32.mrb[0].mxu0
  %285 = vmatprep.mubr.f32.mxu0 0.0
  %286 = vmatmul.mubr.f32.gmra.mrb[0].mxu0 %v204
  %v287 = vpop.f32.mrb[0].mxu0
  %v288 = vadd.f32 0.0, %v287
  %v289 = vpop.f32.mrb[0].mxu0
  %290 = vmatprep.mubr.f32.mxu0 0.0
  %291 = vmatmul.mubr.f32.gmra.mrb[0].mxu0 %v207
  %v292 = vpop.f32.mrb[0].mxu0
  %v293 = vadd.f32 0.0, %v292
  %v294 = vpop.f32.mrb[0].mxu0
  %295 = vmatprep.mubr.f32.mxu0 0.0
  %296 = vmatmul.mubr.f32.gmra.mrb[0].mxu0 %v210
  %v297 = vpop.f32.mrb[0].mxu0
  %v298 = vadd.f32 0.0, %v297
  %v299 = vpop.f32.mrb[0].mxu0
  %300 = vdwg.mxu0
  %v302 = vsel %vm177, %v189, 0
  %v305 = vsel %vm177, %v190, 0
  %v308 = vsel %vm177, %v191, 0
  %v311 = vsel %vm177, %v192, 0
  %v314 = vsel %vm212, %v193, 0
  %316 = vmatprep.subr.mxu0 0.0
  %317 = vmatpush1.msra.mxu0 %v314
  %318 = vmatprep.subr.mxu0 0.0
  %319 = vmatpush1.msra.mxu0 0.0
  %320 = vmatprep.subr.mxu0 0.0
  %321 = vmatpush1.msra.mxu0 0.0
  %322 = vmatprep.subr.mxu0 0.0
  %323 = vmatpush1.msra.mxu0 0.0
  %324 = vmatprep.subr.mxu0 0.0
  %325 = vmatpush1.msra.mxu0 0.0
  %326 = vmatprep.subr.mxu0 0.0
  %327 = vmatpush1.msra.mxu0 0.0
  %328 = vmatprep.subr.mxu0 0.0
  %329 = vmatpush1.msra.mxu0 0.0
  %330 = vmatprep.subr.mxu0 0.0
  %331 = vmatpush1.msra.mxu0 0.0
  %332 = vmatprep.subr.mxu0 0.0
  %333 = vmatpush1.msra.mxu0 0.0
  %334 = vmatprep.subr.mxu0 0.0
  %335 = vmatpush1.msra.mxu0 0.0
  %336 = vmatprep.subr.mxu0 0.0
  %337 = vmatpush1.msra.mxu0 0.0
  %338 = vmatprep.subr.mxu0 0.0
  %339 = vmatpush1.msra.mxu0 0.0
  %340 = vmatprep.subr.mxu0 0.0
  %341 = vmatpush1.msra.mxu0 0.0
  %342 = vmatprep.subr.mxu0 0.0
  %343 = vmatpush1.msra.mxu0 0.0
  %344 = vmatprep.subr.mxu0 0.0
  %345 = vmatpush1.msra.mxu0 0.0
  %346 = vmatprep.subr.mxu0 0.0
  %347 = vmatpush1.msra.mxu0 0.0
  %348 = vmatprep.subr.mxu0 0.0
  %349 = vmatpush1.msra.mxu0 0.0
  %350 = vmatprep.subr.mxu0 0.0
  %351 = vmatpush1.msra.mxu0 0.0
  %352 = vmatprep.subr.mxu0 0.0
  %353 = vmatpush1.msra.mxu0 0.0
  %354 = vmatprep.subr.mxu0 0.0
  %355 = vmatpush1.msra.mxu0 0.0
  %356 = vmatprep.subr.mxu0 0.0
  %357 = vmatpush1.msra.mxu0 0.0
  %358 = vmatprep.subr.mxu0 0.0
  %359 = vmatpush1.msra.mxu0 0.0
  %360 = vmatprep.subr.mxu0 0.0
  %361 = vmatpush1.msra.mxu0 0.0
  %362 = vmatprep.subr.mxu0 0.0
  %363 = vmatpush1.msra.mxu0 0.0
  %364 = vmatprep.subr.mxu0 0.0
  %365 = vmatpush1.msra.mxu0 0.0
  %366 = vmatprep.subr.mxu0 0.0
  %367 = vmatpush1.msra.mxu0 0.0
  %368 = vmatprep.subr.mxu0 0.0
  %369 = vmatpush1.msra.mxu0 0.0
  %370 = vmatprep.subr.mxu0 0.0
  %371 = vmatpush1.msra.mxu0 0.0
  %372 = vmatprep.subr.mxu0 0.0
  %373 = vmatpush1.msra.mxu0 0.0
  %374 = vmatprep.subr.mxu0 0.0
  %375 = vmatpush1.msra.mxu0 0.0
  %376 = vmatprep.subr.mxu0 0.0
  %377 = vmatpush1.msra.mxu0 0.0
  %378 = vmatprep.subr.mxu0 0.0
  %379 = vmatpush1.msra.mxu0 0.0
  %380 = vmatprep.mubr.f32.mxu0 0.0
  %381 = vmatmul.mubr.f32.gmra.mrb[0].mxu0 %v302
  %v382 = vpop.f32.mrb[0].mxu0
  %v383 = vadd.f32 %v283, %v382
  %v384 = vpop.f32.mrb[0].mxu0
  %385 = vmatprep.mubr.f32.mxu0 0.0
  %386 = vmatmul.mubr.f32.gmra.mrb[0].mxu0 %v305
  %v387 = vpop.f32.mrb[0].mxu0
  %v388 = vadd.f32 %v288, %v387
  %v389 = vpop.f32.mrb[0].mxu0
  %390 = vmatprep.mubr.f32.mxu0 0.0
  %391 = vmatmul.mubr.f32.gmra.mrb[0].mxu0 %v308
  %v392 = vpop.f32.mrb[0].mxu0
  %v393 = vadd.f32 %v293, %v392
  %v394 = vpop.f32.mrb[0].mxu0
  %395 = vmatprep.mubr.f32.mxu0 0.0
  %396 = vmatmul.mubr.f32.gmra.mrb[0].mxu0 %v311
  %v397 = vpop.f32.mrb[0].mxu0
  %v398 = vadd.f32 %v298, %v397
  %v399 = vpop.f32.mrb[0].mxu0
  %400 = vdwg.mxu0
  %v401 = vld [vmem:[#allocation2 + $0x2] sm:$0xff]
  %v402 = vld [vmem:[#allocation2 + $0xa] sm:$0xff]
  %v403 = vld [vmem:[#allocation2 + $0x1a] sm:$0xff]
  %v404 = vld [vmem:[#allocation2 + $0x22] sm:$0xff]
  %s405 = scalar_lea.vmem %s3, 8
  %v406 = vld [vmem:[%s405] sm:$0x7]
  %v408 = vsel %vm177, %v401, 0
  %v411 = vsel %vm177, %v402, 0
  %v414 = vsel %vm177, %v403, 0
  %v417 = vsel %vm177, %v404, 0
  %v420 = vsel %vm212, %v406, 0
  %422 = vmatprep.subr.mxu0 0.0
  %423 = vmatpush1.msra.mxu0 %v420
  %424 = vmatprep.subr.mxu0 0.0
  %425 = vmatpush1.msra.mxu0 0.0
  %426 = vmatprep.subr.mxu0 0.0
  %427 = vmatpush1.msra.mxu0 0.0
  %428 = vmatprep.subr.mxu0 0.0
  %429 = vmatpush1.msra.mxu0 0.0
  %430 = vmatprep.subr.mxu0 0.0
  %431 = vmatpush1.msra.mxu0 0.0
  %432 = vmatprep.subr.mxu0 0.0
  %433 = vmatpush1.msra.mxu0 0.0
  %434 = vmatprep.subr.mxu0 0.0
  %435 = vmatpush1.msra.mxu0 0.0
  %436 = vmatprep.subr.mxu0 0.0
  %437 = vmatpush1.msra.mxu0 0.0
  %438 = vmatprep.subr.mxu0 0.0
  %439 = vmatpush1.msra.mxu0 0.0
  %440 = vmatprep.subr.mxu0 0.0
  %441 = vmatpush1.msra.mxu0 0.0
  %442 = vmatprep.subr.mxu0 0.0
  %443 = vmatpush1.msra.mxu0 0.0
  %444 = vmatprep.subr.mxu0 0.0
  %445 = vmatpush1.msra.mxu0 0.0
  %446 = vmatprep.subr.mxu0 0.0
  %447 = vmatpush1.msra.mxu0 0.0
  %448 = vmatprep.subr.mxu0 0.0
  %449 = vmatpush1.msra.mxu0 0.0
  %450 = vmatprep.subr.mxu0 0.0
  %451 = vmatpush1.msra.mxu0 0.0
  %452 = vmatprep.subr.mxu0 0.0
  %453 = vmatpush1.msra.mxu0 0.0
  %454 = vmatprep.subr.mxu0 0.0
  %455 = vmatpush1.msra.mxu0 0.0
  %456 = vmatprep.subr.mxu0 0.0
  %457 = vmatpush1.msra.mxu0 0.0
  %458 = vmatprep.subr.mxu0 0.0
  %459 = vmatpush1.msra.mxu0 0.0
  %460 = vmatprep.subr.mxu0 0.0
  %461 = vmatpush1.msra.mxu0 0.0
  %462 = vmatprep.subr.mxu0 0.0
  %463 = vmatpush1.msra.mxu0 0.0
  %464 = vmatprep.subr.mxu0 0.0
  %465 = vmatpush1.msra.mxu0 0.0
  %466 = vmatprep.subr.mxu0 0.0
  %467 = vmatpush1.msra.mxu0 0.0
  %468 = vmatprep.subr.mxu0 0.0
  %469 = vmatpush1.msra.mxu0 0.0
  %470 = vmatprep.subr.mxu0 0.0
  %471 = vmatpush1.msra.mxu0 0.0
  %472 = vmatprep.subr.mxu0 0.0
  %473 = vmatpush1.msra.mxu0 0.0
  %474 = vmatprep.subr.mxu0 0.0
  %475 = vmatpush1.msra.mxu0 0.0
  %476 = vmatprep.subr.mxu0 0.0
  %477 = vmatpush1.msra.mxu0 0.0
  %478 = vmatprep.subr.mxu0 0.0
  %479 = vmatpush1.msra.mxu0 0.0
  %480 = vmatprep.subr.mxu0 0.0
  %481 = vmatpush1.msra.mxu0 0.0
  %482 = vmatprep.subr.mxu0 0.0
  %483 = vmatpush1.msra.mxu0 0.0
  %484 = vmatprep.subr.mxu0 0.0
  %485 = vmatpush1.msra.mxu0 0.0
  %486 = vmatprep.mubr.f32.mxu0 0.0
  %487 = vmatmul.mubr.f32.gmra.mrb[0].mxu0 %v408
  %v488 = vpop.f32.mrb[0].mxu0
  %v489 = vadd.f32 0.0, %v488
  %v490 = vpop.f32.mrb[0].mxu0
  %491 = vmatprep.mubr.f32.mxu0 0.0
  %492 = vmatmul.mubr.f32.gmra.mrb[0].mxu0 %v411
  %v493 = vpop.f32.mrb[0].mxu0
  %v494 = vadd.f32 0.0, %v493
  %v495 = vpop.f32.mrb[0].mxu0
  %496 = vmatprep.mubr.f32.mxu0 0.0
  %497 = vmatmul.mubr.f32.gmra.mrb[0].mxu0 %v414
  %v498 = vpop.f32.mrb[0].mxu0
  %v499 = vadd.f32 0.0, %v498
  %v500 = vpop.f32.mrb[0].mxu0
  %501 = vmatprep.mubr.f32.mxu0 0.0
  %502 = vmatmul.mubr.f32.gmra.mrb[0].mxu0 %v417
  %v503 = vpop.f32.mrb[0].mxu0
  %v504 = vadd.f32 0.0, %v503
  %v505 = vpop.f32.mrb[0].mxu0
  %506 = vdwg.mxu0
  %v507 = vadd.f32 %v383, %v489
  %v508 = vadd.f32 %v388, %v494
  %v509 = vadd.f32 %v393, %v499
  %v510 = vadd.f32 %v398, %v504
  %v511 = vld [vmem:[%s4] sm:$0x1]
  %v513 = vlaneseq
  %v514 = vshrl.u32 %v513, 7
  %v515 = vsub.s32 0, %v514
  %v516 = vrot.slane %v511, %v515
  %v518 = vadd.f32 %v507, %v516
  %v519 = vadd.f32 %v508, %v516
  %v520 = vadd.f32 %v509, %v516
  %v521 = vadd.f32 %v510, %v516
  %v522 = vmax.f32 %v518, 0.0
  %v523 = vmax.f32 %v519, 0.0
  %v524 = vmax.f32 %v520, 0.0
  %v525 = vmax.f32 %v521, 0.0
  %526 = vst.msk [vmem:[#allocation3] sm:$0xff] %vm79, 0.0
  %527 = vst.msk [vmem:[#allocation3 + $0x8] sm:$0xff] %vm79, 0.0
  %vm528 = vcmask 519168
  %529 = vst.msk [vmem:[#allocation3 + $0x10] sm:$0xf] %vm528, 0.0
  %530 = vst.msk [vmem:[#allocation3 + $0x18] sm:$0xff] %vm79, 0.0
  %531 = vst.msk [vmem:[#allocation3 + $0x20] sm:$0xff] %vm79, 0.0
  %532 = vst.msk [vmem:[#allocation3 + $0x28] sm:$0xf] %vm528, 0.0
  %533 = vst.msk [vmem:[#allocation3 + $0x2] sm:$0xff] %vm79, %v522
  %534 = vst.msk [vmem:[#allocation3 + $0xa] sm:$0xff] %vm79, %v523
  %535 = vst.msk [vmem:[#allocation3 + $0x1a] sm:$0xff] %vm79, %v524
  %536 = vst.msk [vmem:[#allocation3 + $0x22] sm:$0xff] %vm79, %v525
  %v537 = vld [vmem:[#allocation3] sm:$0xff]
  %v538 = vld [vmem:[#allocation3 + $0x8] sm:$0xff]
  %v539 = vld [vmem:[#allocation3 + $0x18] sm:$0xff]
  %v540 = vld [vmem:[#allocation3 + $0x20] sm:$0xff]
  %v541 = vld [vmem:[%s5] sm:$0xff]
  %v542 = vld [vmem:[%s5 + $0x8] sm:$0xff]
  %v543 = vld [vmem:[%s5 + $0x10] sm:$0xff]
  %v544 = vld [vmem:[%s5 + $0x18] sm:$0xff]
  %v545 = vld [vmem:[%s5 + $0x20] sm:$0xff]
  %v546 = vld [vmem:[%s5 + $0x28] sm:$0xff]
  %v547 = vld [vmem:[%s5 + $0x30] sm:$0xff]
  %v548 = vld [vmem:[%s5 + $0x38] sm:$0xff]
  %v549 = vld [vmem:[#allocation3 + $0x1] sm:$0xff]
  %v550 = vld [vmem:[#allocation3 + $0x9] sm:$0xff]
  %v551 = vld [vmem:[#allocation3 + $0x19] sm:$0xff]
  %v552 = vld [vmem:[#allocation3 + $0x21] sm:$0xff]
  %s553 = scalar_lea.vmem %s5, 64
  %v554 = vld [vmem:[%s553] sm:$0xff]
  %v555 = vld [vmem:[%s553 + $0x8] sm:$0xff]
  %v556 = vld [vmem:[%s553 + $0x10] sm:$0xff]
  %v557 = vld [vmem:[%s553 + $0x18] sm:$0xff]
  %v558 = vld [vmem:[%s553 + $0x20] sm:$0xff]
  %v559 = vld [vmem:[%s553 + $0x28] sm:$0xff]
  %v560 = vld [vmem:[%s553 + $0x30] sm:$0xff]
  %v561 = vld [vmem:[%s553 + $0x38] sm:$0xff]
  %v563 = vsel %vm79, %v549, 0
  %v566 = vsel %vm79, %v550, 0
  %v569 = vsel %vm79, %v551, 0
  %v572 = vsel %vm79, %v552, 0
  %574 = vmatprep.subr.mxu0 0.0
  %575 = vmatpush1.msra.mxu0 %v554
  %576 = vmatprep.subr.mxu0 0.0
  %577 = vmatpush1.msra.mxu0 %v555
  %578 = vmatprep.subr.mxu0 0.0
  %579 = vmatpush1.msra.mxu0 %v556
  %580 = vmatprep.subr.mxu0 0.0
  %581 = vmatpush1.msra.mxu0 %v557
  %582 = vmatprep.subr.mxu0 0.0
  %583 = vmatpush1.msra.mxu0 %v558
  %584 = vmatprep.subr.mxu0 0.0
  %585 = vmatpush1.msra.mxu0 %v559
  %586 = vmatprep.subr.mxu0 0.0
  %587 = vmatpush1.msra.mxu0 %v560
  %588 = vmatprep.subr.mxu0 0.0
  %589 = vmatpush1.msra.mxu0 %v561
  %590 = vmatprep.subr.mxu0 0.0
  %591 = vmatpush1.msra.mxu0 0.0
  %592 = vmatprep.subr.mxu0 0.0
  %593 = vmatpush1.msra.mxu0 0.0
  %594 = vmatprep.subr.mxu0 0.0
  %595 = vmatpush1.msra.mxu0 0.0
  %596 = vmatprep.subr.mxu0 0.0
  %597 = vmatpush1.msra.mxu0 0.0
  %598 = vmatprep.subr.mxu0 0.0
  %599 = vmatpush1.msra.mxu0 0.0
  %600 = vmatprep.subr.mxu0 0.0
  %601 = vmatpush1.msra.mxu0 0.0
  %602 = vmatprep.subr.mxu0 0.0
  %603 = vmatpush1.msra.mxu0 0.0
  %604 = vmatprep.subr.mxu0 0.0
  %605 = vmatpush1.msra.mxu0 0.0
  %606 = vmatprep.subr.mxu0 0.0
  %607 = vmatpush1.msra.mxu0 0.0
  %608 = vmatprep.subr.mxu0 0.0
  %609 = vmatpush1.msra.mxu0 0.0
  %610 = vmatprep.subr.mxu0 0.0
  %611 = vmatpush1.msra.mxu0 0.0
  %612 = vmatprep.subr.mxu0 0.0
  %613 = vmatpush1.msra.mxu0 0.0
  %614 = vmatprep.subr.mxu0 0.0
  %615 = vmatpush1.msra.mxu0 0.0
  %616 = vmatprep.subr.mxu0 0.0
  %617 = vmatpush1.msra.mxu0 0.0
  %618 = vmatprep.subr.mxu0 0.0
  %619 = vmatpush1.msra.mxu0 0.0
  %620 = vmatprep.subr.mxu0 0.0
  %621 = vmatpush1.msra.mxu0 0.0
  %622 = vmatprep.subr.mxu0 0.0
  %623 = vmatpush1.msra.mxu0 0.0
  %624 = vmatprep.subr.mxu0 0.0
  %625 = vmatpush1.msra.mxu0 0.0
  %626 = vmatprep.subr.mxu0 0.0
  %627 = vmatpush1.msra.mxu0 0.0
  %628 = vmatprep.subr.mxu0 0.0
  %629 = vmatpush1.msra.mxu0 0.0
  %630 = vmatprep.subr.mxu0 0.0
  %631 = vmatpush1.msra.mxu0 0.0
  %632 = vmatprep.subr.mxu0 0.0
  %633 = vmatpush1.msra.mxu0 0.0
  %634 = vmatprep.subr.mxu0 0.0
  %635 = vmatpush1.msra.mxu0 0.0
  %636 = vmatprep.subr.mxu0 0.0
  %637 = vmatpush1.msra.mxu0 0.0
  %638 = vmatprep.mubr.f32.mxu0 0.0
  %639 = vmatmul.mubr.f32.gmra.mrb[0].mxu0 %v563
  %v640 = vpop.f32.mrb[0].mxu0
  %v641 = vadd.f32 0.0, %v640
  %v642 = vpop.f32.mrb[0].mxu0
  %643 = vmatprep.mubr.f32.mxu0 0.0
  %644 = vmatmul.mubr.f32.gmra.mrb[0].mxu0 %v566
  %v645 = vpop.f32.mrb[0].mxu0
  %v646 = vadd.f32 0.0, %v645
  %v647 = vpop.f32.mrb[0].mxu0
  %648 = vmatprep.mubr.f32.mxu0 0.0
  %649 = vmatmul.mubr.f32.gmra.mrb[0].mxu0 %v569
  %v650 = vpop.f32.mrb[0].mxu0
  %v651 = vadd.f32 0.0, %v650
  %v652 = vpop.f32.mrb[0].mxu0
  %653 = vmatprep.mubr.f32.mxu0 0.0
  %654 = vmatmul.mubr.f32.gmra.mrb[0].mxu0 %v572
  %v655 = vpop.f32.mrb[0].mxu0
  %v656 = vadd.f32 0.0, %v655
  %v657 = vpop.f32.mrb[0].mxu0
  %658 = vdwg.mxu0
  %v660 = vsel %vm79, %v537, 0
  %v663 = vsel %vm79, %v538, 0
  %v666 = vsel %vm79, %v539, 0
  %v669 = vsel %vm79, %v540, 0
  %671 = vmatprep.subr.mxu0 0.0
  %672 = vmatpush1.msra.mxu0 %v541
  %673 = vmatprep.subr.mxu0 0.0
  %674 = vmatpush1.msra.mxu0 %v542
  %675 = vmatprep.subr.mxu0 0.0
  %676 = vmatpush1.msra.mxu0 %v543
  %677 = vmatprep.subr.mxu0 0.0
  %678 = vmatpush1.msra.mxu0 %v544
  %679 = vmatprep.subr.mxu0 0.0
  %680 = vmatpush1.msra.mxu0 %v545
  %681 = vmatprep.subr.mxu0 0.0
  %682 = vmatpush1.msra.mxu0 %v546
  %683 = vmatprep.subr.mxu0 0.0
  %684 = vmatpush1.msra.mxu0 %v547
  %685 = vmatprep.subr.mxu0 0.0
  %686 = vmatpush1.msra.mxu0 %v548
  %687 = vmatprep.subr.mxu0 0.0
  %688 = vmatpush1.msra.mxu0 0.0
  %689 = vmatprep.subr.mxu0 0.0
  %690 = vmatpush1.msra.mxu0 0.0
  %691 = vmatprep.subr.mxu0 0.0
  %692 = vmatpush1.msra.mxu0 0.0
  %693 = vmatprep.subr.mxu0 0.0
  %694 = vmatpush1.msra.mxu0 0.0
  %695 = vmatprep.subr.mxu0 0.0
  %696 = vmatpush1.msra.mxu0 0.0
  %697 = vmatprep.subr.mxu0 0.0
  %698 = vmatpush1.msra.mxu0 0.0
  %699 = vmatprep.subr.mxu0 0.0
  %700 = vmatpush1.msra.mxu0 0.0
  %701 = vmatprep.subr.mxu0 0.0
  %702 = vmatpush1.msra.mxu0 0.0
  %703 = vmatprep.subr.mxu0 0.0
  %704 = vmatpush1.msra.mxu0 0.0
  %705 = vmatprep.subr.mxu0 0.0
  %706 = vmatpush1.msra.mxu0 0.0
  %707 = vmatprep.subr.mxu0 0.0
  %708 = vmatpush1.msra.mxu0 0.0
  %709 = vmatprep.subr.mxu0 0.0
  %710 = vmatpush1.msra.mxu0 0.0
  %711 = vmatprep.subr.mxu0 0.0
  %712 = vmatpush1.msra.mxu0 0.0
  %713 = vmatprep.subr.mxu0 0.0
  %714 = vmatpush1.msra.mxu0 0.0
  %715 = vmatprep.subr.mxu0 0.0
  %716 = vmatpush1.msra.mxu0 0.0
  %717 = vmatprep.subr.mxu0 0.0
  %718 = vmatpush1.msra.mxu0 0.0
  %719 = vmatprep.subr.mxu0 0.0
  %720 = vmatpush1.msra.mxu0 0.0
  %721 = vmatprep.subr.mxu0 0.0
  %722 = vmatpush1.msra.mxu0 0.0
  %723 = vmatprep.subr.mxu0 0.0
  %724 = vmatpush1.msra.mxu0 0.0
  %725 = vmatprep.subr.mxu0 0.0
  %726 = vmatpush1.msra.mxu0 0.0
  %727 = vmatprep.subr.mxu0 0.0
  %728 = vmatpush1.msra.mxu0 0.0
  %729 = vmatprep.subr.mxu0 0.0
  %730 = vmatpush1.msra.mxu0 0.0
  %731 = vmatprep.subr.mxu0 0.0
  %732 = vmatpush1.msra.mxu0 0.0
  %733 = vmatprep.subr.mxu0 0.0
  %734 = vmatpush1.msra.mxu0 0.0
  %735 = vmatprep.mubr.f32.mxu0 0.0
  %736 = vmatmul.mubr.f32.gmra.mrb[0].mxu0 %v660
  %v737 = vpop.f32.mrb[0].mxu0
  %v738 = vadd.f32 %v641, %v737
  %v739 = vpop.f32.mrb[0].mxu0
  %740 = vmatprep.mubr.f32.mxu0 0.0
  %741 = vmatmul.mubr.f32.gmra.mrb[0].mxu0 %v663
  %v742 = vpop.f32.mrb[0].mxu0
  %v743 = vadd.f32 %v646, %v742
  %v744 = vpop.f32.mrb[0].mxu0
  %745 = vmatprep.mubr.f32.mxu0 0.0
  %746 = vmatmul.mubr.f32.gmra.mrb[0].mxu0 %v666
  %v747 = vpop.f32.mrb[0].mxu0
  %v748 = vadd.f32 %v651, %v747
  %v749 = vpop.f32.mrb[0].mxu0
  %750 = vmatprep.mubr.f32.mxu0 0.0
  %751 = vmatmul.mubr.f32.gmra.mrb[0].mxu0 %v669
  %v752 = vpop.f32.mrb[0].mxu0
  %v753 = vadd.f32 %v656, %v752
  %v754 = vpop.f32.mrb[0].mxu0
  %755 = vdwg.mxu0
  %v756 = vld [vmem:[#allocation3 + $0x2] sm:$0xff]
  %v757 = vld [vmem:[#allocation3 + $0xa] sm:$0xff]
  %v758 = vld [vmem:[#allocation3 + $0x1a] sm:$0xff]
  %v759 = vld [vmem:[#allocation3 + $0x22] sm:$0xff]
  %s760 = scalar_lea.vmem %s5, 128
  %v761 = vld [vmem:[%s760] sm:$0xff]
  %v762 = vld [vmem:[%s760 + $0x8] sm:$0xff]
  %v763 = vld [vmem:[%s760 + $0x10] sm:$0xff]
  %v764 = vld [vmem:[%s760 + $0x18] sm:$0xff]
  %v765 = vld [vmem:[%s760 + $0x20] sm:$0xff]
  %v766 = vld [vmem:[%s760 + $0x28] sm:$0xff]
  %v767 = vld [vmem:[%s760 + $0x30] sm:$0xff]
  %v768 = vld [vmem:[%s760 + $0x38] sm:$0xff]
  %v770 = vsel %vm79, %v756, 0
  %v773 = vsel %vm79, %v757, 0
  %v776 = vsel %vm79, %v758, 0
  %v779 = vsel %vm79, %v759, 0
  %781 = vmatprep.subr.mxu0 0.0
  %782 = vmatpush1.msra.mxu0 %v761
  %783 = vmatprep.subr.mxu0 0.0
  %784 = vmatpush1.msra.mxu0 %v762
  %785 = vmatprep.subr.mxu0 0.0
  %786 = vmatpush1.msra.mxu0 %v763
  %787 = vmatprep.subr.mxu0 0.0
  %788 = vmatpush1.msra.mxu0 %v764
  %789 = vmatprep.subr.mxu0 0.0
  %790 = vmatpush1.msra.mxu0 %v765
  %791 = vmatprep.subr.mxu0 0.0
  %792 = vmatpush1.msra.mxu0 %v766
  %793 = vmatprep.subr.mxu0 0.0
  %794 = vmatpush1.msra.mxu0 %v767
  %795 = vmatprep.subr.mxu0 0.0
  %796 = vmatpush1.msra.mxu0 %v768
  %797 = vmatprep.subr.mxu0 0.0
  %798 = vmatpush1.msra.mxu0 0.0
  %799 = vmatprep.subr.mxu0 0.0
  %800 = vmatpush1.msra.mxu0 0.0
  %801 = vmatprep.subr.mxu0 0.0
  %802 = vmatpush1.msra.mxu0 0.0
  %803 = vmatprep.subr.mxu0 0.0
  %804 = vmatpush1.msra.mxu0 0.0
  %805 = vmatprep.subr.mxu0 0.0
  %806 = vmatpush1.msra.mxu0 0.0
  %807 = vmatprep.subr.mxu0 0.0
  %808 = vmatpush1.msra.mxu0 0.0
  %809 = vmatprep.subr.mxu0 0.0
  %810 = vmatpush1.msra.mxu0 0.0
  %811 = vmatprep.subr.mxu0 0.0
  %812 = vmatpush1.msra.mxu0 0.0
  %813 = vmatprep.subr.mxu0 0.0
  %814 = vmatpush1.msra.mxu0 0.0
  %815 = vmatprep.subr.mxu0 0.0
  %816 = vmatpush1.msra.mxu0 0.0
  %817 = vmatprep.subr.mxu0 0.0
  %818 = vmatpush1.msra.mxu0 0.0
  %819 = vmatprep.subr.mxu0 0.0
  %820 = vmatpush1.msra.mxu0 0.0
  %821 = vmatprep.subr.mxu0 0.0
  %822 = vmatpush1.msra.mxu0 0.0
  %823 = vmatprep.subr.mxu0 0.0
  %824 = vmatpush1.msra.mxu0 0.0
  %825 = vmatprep.subr.mxu0 0.0
  %826 = vmatpush1.msra.mxu0 0.0
  %827 = vmatprep.subr.mxu0 0.0
  %828 = vmatpush1.msra.mxu0 0.0
  %829 = vmatprep.subr.mxu0 0.0
  %830 = vmatpush1.msra.mxu0 0.0
  %831 = vmatprep.subr.mxu0 0.0
  %832 = vmatpush1.msra.mxu0 0.0
  %833 = vmatprep.subr.mxu0 0.0
  %834 = vmatpush1.msra.mxu0 0.0
  %835 = vmatprep.subr.mxu0 0.0
  %836 = vmatpush1.msra.mxu0 0.0
  %837 = vmatprep.subr.mxu0 0.0
  %838 = vmatpush1.msra.mxu0 0.0
  %839 = vmatprep.subr.mxu0 0.0
  %840 = vmatpush1.msra.mxu0 0.0
  %841 = vmatprep.subr.mxu0 0.0
  %842 = vmatpush1.msra.mxu0 0.0
  %843 = vmatprep.subr.mxu0 0.0
  %844 = vmatpush1.msra.mxu0 0.0
  %845 = vmatprep.mubr.f32.mxu0 0.0
  %846 = vmatmul.mubr.f32.gmra.mrb[0].mxu0 %v770
  %v847 = vpop.f32.mrb[0].mxu0
  %v848 = vadd.f32 0.0, %v847
  %v849 = vpop.f32.mrb[0].mxu0
  %850 = vmatprep.mubr.f32.mxu0 0.0
  %851 = vmatmul.mubr.f32.gmra.mrb[0].mxu0 %v773
  %v852 = vpop.f32.mrb[0].mxu0
  %v853 = vadd.f32 0.0, %v852
  %v854 = vpop.f32.mrb[0].mxu0
  %855 = vmatprep.mubr.f32.mxu0 0.0
  %856 = vmatmul.mubr.f32.gmra.mrb[0].mxu0 %v776
  %v857 = vpop.f32.mrb[0].mxu0
  %v858 = vadd.f32 0.0, %v857
  %v859 = vpop.f32.mrb[0].mxu0
  %860 = vmatprep.mubr.f32.mxu0 0.0
  %861 = vmatmul.mubr.f32.gmra.mrb[0].mxu0 %v779
  %v862 = vpop.f32.mrb[0].mxu0
  %v863 = vadd.f32 0.0, %v862
  %v864 = vpop.f32.mrb[0].mxu0
  %865 = vdwg.mxu0
  %v866 = vadd.f32 %v738, %v848
  %v867 = vadd.f32 %v743, %v853
  %v868 = vadd.f32 %v748, %v858
  %v869 = vadd.f32 %v753, %v863
  %v870 = vld [vmem:[#allocation3 + $0x3] sm:$0xff]
  %v871 = vld [vmem:[#allocation3 + $0xb] sm:$0xff]
  %v872 = vld [vmem:[#allocation3 + $0x1b] sm:$0xff]
  %v873 = vld [vmem:[#allocation3 + $0x23] sm:$0xff]
  %s874 = scalar_lea.vmem %s5, 192
  %v875 = vld [vmem:[%s874] sm:$0xff]
  %v876 = vld [vmem:[%s874 + $0x8] sm:$0xff]
  %v877 = vld [vmem:[%s874 + $0x10] sm:$0xff]
  %v878 = vld [vmem:[%s874 + $0x18] sm:$0xff]
  %v879 = vld [vmem:[%s874 + $0x20] sm:$0xff]
  %v880 = vld [vmem:[%s874 + $0x28] sm:$0xff]
  %v881 = vld [vmem:[%s874 + $0x30] sm:$0xff]
  %v882 = vld [vmem:[%s874 + $0x38] sm:$0xff]
  %v884 = vsel %vm79, %v870, 0
  %v887 = vsel %vm79, %v871, 0
  %v890 = vsel %vm79, %v872, 0
  %v893 = vsel %vm79, %v873, 0
  %895 = vmatprep.subr.mxu0 0.0
  %896 = vmatpush1.msra.mxu0 %v875
  %897 = vmatprep.subr.mxu0 0.0
  %898 = vmatpush1.msra.mxu0 %v876
  %899 = vmatprep.subr.mxu0 0.0
  %900 = vmatpush1.msra.mxu0 %v877
  %901 = vmatprep.subr.mxu0 0.0
  %902 = vmatpush1.msra.mxu0 %v878
  %903 = vmatprep.subr.mxu0 0.0
  %904 = vmatpush1.msra.mxu0 %v879
  %905 = vmatprep.subr.mxu0 0.0
  %906 = vmatpush1.msra.mxu0 %v880
  %907 = vmatprep.subr.mxu0 0.0
  %908 = vmatpush1.msra.mxu0 %v881
  %909 = vmatprep.subr.mxu0 0.0
  %910 = vmatpush1.msra.mxu0 %v882
  %911 = vmatprep.subr.mxu0 0.0
  %912 = vmatpush1.msra.mxu0 0.0
  %913 = vmatprep.subr.mxu0 0.0
  %914 = vmatpush1.msra.mxu0 0.0
  %915 = vmatprep.subr.mxu0 0.0
  %916 = vmatpush1.msra.mxu0 0.0
  %917 = vmatprep.subr.mxu0 0.0
  %918 = vmatpush1.msra.mxu0 0.0
  %919 = vmatprep.subr.mxu0 0.0
  %920 = vmatpush1.msra.mxu0 0.0
  %921 = vmatprep.subr.mxu0 0.0
  %922 = vmatpush1.msra.mxu0 0.0
  %923 = vmatprep.subr.mxu0 0.0
  %924 = vmatpush1.msra.mxu0 0.0
  %925 = vmatprep.subr.mxu0 0.0
  %926 = vmatpush1.msra.mxu0 0.0
  %927 = vmatprep.subr.mxu0 0.0
  %928 = vmatpush1.msra.mxu0 0.0
  %929 = vmatprep.subr.mxu0 0.0
  %930 = vmatpush1.msra.mxu0 0.0
  %931 = vmatprep.subr.mxu0 0.0
  %932 = vmatpush1.msra.mxu0 0.0
  %933 = vmatprep.subr.mxu0 0.0
  %934 = vmatpush1.msra.mxu0 0.0
  %935 = vmatprep.subr.mxu0 0.0
  %936 = vmatpush1.msra.mxu0 0.0
  %937 = vmatprep.subr.mxu0 0.0
  %938 = vmatpush1.msra.mxu0 0.0
  %939 = vmatprep.subr.mxu0 0.0
  %940 = vmatpush1.msra.mxu0 0.0
  %941 = vmatprep.subr.mxu0 0.0
  %942 = vmatpush1.msra.mxu0 0.0
  %943 = vmatprep.subr.mxu0 0.0
  %944 = vmatpush1.msra.mxu0 0.0
  %945 = vmatprep.subr.mxu0 0.0
  %946 = vmatpush1.msra.mxu0 0.0
  %947 = vmatprep.subr.mxu0 0.0
  %948 = vmatpush1.msra.mxu0 0.0
  %949 = vmatprep.subr.mxu0 0.0
  %950 = vmatpush1.msra.mxu0 0.0
  %951 = vmatprep.subr.mxu0 0.0
  %952 = vmatpush1.msra.mxu0 0.0
  %953 = vmatprep.subr.mxu0 0.0
  %954 = vmatpush1.msra.mxu0 0.0
  %955 = vmatprep.subr.mxu0 0.0
  %956 = vmatpush1.msra.mxu0 0.0
  %957 = vmatprep.subr.mxu0 0.0
  %958 = vmatpush1.msra.mxu0 0.0
  %959 = vmatprep.mubr.f32.mxu0 0.0
  %960 = vmatmul.mubr.f32.gmra.mrb[0].mxu0 %v884
  %v961 = vpop.f32.mrb[0].mxu0
  %v962 = vadd.f32 0.0, %v961
  %v963 = vpop.f32.mrb[0].mxu0
  %964 = vmatprep.mubr.f32.mxu0 0.0
  %965 = vmatmul.mubr.f32.gmra.mrb[0].mxu0 %v887
  %v966 = vpop.f32.mrb[0].mxu0
  %v967 = vadd.f32 0.0, %v966
  %v968 = vpop.f32.mrb[0].mxu0
  %969 = vmatprep.mubr.f32.mxu0 0.0
  %970 = vmatmul.mubr.f32.gmra.mrb[0].mxu0 %v890
  %v971 = vpop.f32.mrb[0].mxu0
  %v972 = vadd.f32 0.0, %v971
  %v973 = vpop.f32.mrb[0].mxu0
  %974 = vmatprep.mubr.f32.mxu0 0.0
  %975 = vmatmul.mubr.f32.gmra.mrb[0].mxu0 %v893
  %v976 = vpop.f32.mrb[0].mxu0
  %v977 = vadd.f32 0.0, %v976
  %v978 = vpop.f32.mrb[0].mxu0
  %979 = vdwg.mxu0
  %v980 = vadd.f32 %v866, %v962
  %v981 = vadd.f32 %v867, %v967
  %v982 = vadd.f32 %v868, %v972
  %v983 = vadd.f32 %v869, %v977
  %v984 = vld [vmem:[#allocation3 + $0x4] sm:$0xff]
  %v985 = vld [vmem:[#allocation3 + $0xc] sm:$0xff]
  %v986 = vld [vmem:[#allocation3 + $0x1c] sm:$0xff]
  %v987 = vld [vmem:[#allocation3 + $0x24] sm:$0xff]
  %s988 = scalar_lea.vmem %s5, 256
  %v989 = vld [vmem:[%s988] sm:$0xff]
  %v990 = vld [vmem:[%s988 + $0x8] sm:$0xff]
  %v991 = vld [vmem:[%s988 + $0x10] sm:$0xff]
  %v992 = vld [vmem:[%s988 + $0x18] sm:$0xff]
  %v993 = vld [vmem:[%s988 + $0x20] sm:$0xff]
  %v994 = vld [vmem:[%s988 + $0x28] sm:$0xff]
  %v995 = vld [vmem:[%s988 + $0x30] sm:$0xff]
  %v996 = vld [vmem:[%s988 + $0x38] sm:$0xff]
  %v998 = vsel %vm79, %v984, 0
  %v1001 = vsel %vm79, %v985, 0
  %v1004 = vsel %vm79, %v986, 0
  %v1007 = vsel %vm79, %v987, 0
  %1009 = vmatprep.subr.mxu0 0.0
  %1010 = vmatpush1.msra.mxu0 %v989
  %1011 = vmatprep.subr.mxu0 0.0
  %1012 = vmatpush1.msra.mxu0 %v990
  %1013 = vmatprep.subr.mxu0 0.0
  %1014 = vmatpush1.msra.mxu0 %v991
  %1015 = vmatprep.subr.mxu0 0.0
  %1016 = vmatpush1.msra.mxu0 %v992
  %1017 = vmatprep.subr.mxu0 0.0
  %1018 = vmatpush1.msra.mxu0 %v993
  %1019 = vmatprep.subr.mxu0 0.0
  %1020 = vmatpush1.msra.mxu0 %v994
  %1021 = vmatprep.subr.mxu0 0.0
  %1022 = vmatpush1.msra.mxu0 %v995
  %1023 = vmatprep.subr.mxu0 0.0
  %1024 = vmatpush1.msra.mxu0 %v996
  %1025 = vmatprep.subr.mxu0 0.0
  %1026 = vmatpush1.msra.mxu0 0.0
  %1027 = vmatprep.subr.mxu0 0.0
  %1028 = vmatpush1.msra.mxu0 0.0
  %1029 = vmatprep.subr.mxu0 0.0
  %1030 = vmatpush1.msra.mxu0 0.0
  %1031 = vmatprep.subr.mxu0 0.0
  %1032 = vmatpush1.msra.mxu0 0.0
  %1033 = vmatprep.subr.mxu0 0.0
  %1034 = vmatpush1.msra.mxu0 0.0
  %1035 = vmatprep.subr.mxu0 0.0
  %1036 = vmatpush1.msra.mxu0 0.0
  %1037 = vmatprep.subr.mxu0 0.0
  %1038 = vmatpush1.msra.mxu0 0.0
  %1039 = vmatprep.subr.mxu0 0.0
  %1040 = vmatpush1.msra.mxu0 0.0
  %1041 = vmatprep.subr.mxu0 0.0
  %1042 = vmatpush1.msra.mxu0 0.0
  %1043 = vmatprep.subr.mxu0 0.0
  %1044 = vmatpush1.msra.mxu0 0.0
  %1045 = vmatprep.subr.mxu0 0.0
  %1046 = vmatpush1.msra.mxu0 0.0
  %1047 = vmatprep.subr.mxu0 0.0
  %1048 = vmatpush1.msra.mxu0 0.0
  %1049 = vmatprep.subr.mxu0 0.0
  %1050 = vmatpush1.msra.mxu0 0.0
  %1051 = vmatprep.subr.mxu0 0.0
  %1052 = vmatpush1.msra.mxu0 0.0
  %1053 = vmatprep.subr.mxu0 0.0
  %1054 = vmatpush1.msra.mxu0 0.0
  %1055 = vmatprep.subr.mxu0 0.0
  %1056 = vmatpush1.msra.mxu0 0.0
  %1057 = vmatprep.subr.mxu0 0.0
  %1058 = vmatpush1.msra.mxu0 0.0
  %1059 = vmatprep.subr.mxu0 0.0
  %1060 = vmatpush1.msra.mxu0 0.0
  %1061 = vmatprep.subr.mxu0 0.0
  %1062 = vmatpush1.msra.mxu0 0.0
  %1063 = vmatprep.subr.mxu0 0.0
  %1064 = vmatpush1.msra.mxu0 0.0
  %1065 = vmatprep.subr.mxu0 0.0
  %1066 = vmatpush1.msra.mxu0 0.0
  %1067 = vmatprep.subr.mxu0 0.0
  %1068 = vmatpush1.msra.mxu0 0.0
  %1069 = vmatprep.subr.mxu0 0.0
  %1070 = vmatpush1.msra.mxu0 0.0
  %1071 = vmatprep.subr.mxu0 0.0
  %1072 = vmatpush1.msra.mxu0 0.0
  %1073 = vmatprep.mubr.f32.mxu0 0.0
  %1074 = vmatmul.mubr.f32.gmra.mrb[0].mxu0 %v998
  %v1075 = vpop.f32.mrb[0].mxu0
  %v1076 = vadd.f32 0.0, %v1075
  %v1077 = vpop.f32.mrb[0].mxu0
  %1078 = vmatprep.mubr.f32.mxu0 0.0
  %1079 = vmatmul.mubr.f32.gmra.mrb[0].mxu0 %v1001
  %v1080 = vpop.f32.mrb[0].mxu0
  %v1081 = vadd.f32 0.0, %v1080
  %v1082 = vpop.f32.mrb[0].mxu0
  %1083 = vmatprep.mubr.f32.mxu0 0.0
  %1084 = vmatmul.mubr.f32.gmra.mrb[0].mxu0 %v1004
  %v1085 = vpop.f32.mrb[0].mxu0
  %v1086 = vadd.f32 0.0, %v1085
  %v1087 = vpop.f32.mrb[0].mxu0
  %1088 = vmatprep.mubr.f32.mxu0 0.0
  %1089 = vmatmul.mubr.f32.gmra.mrb[0].mxu0 %v1007
  %v1090 = vpop.f32.mrb[0].mxu0
  %v1091 = vadd.f32 0.0, %v1090
  %v1092 = vpop.f32.mrb[0].mxu0
  %1093 = vdwg.mxu0
  %v1094 = vadd.f32 %v980, %v1076
  %v1095 = vadd.f32 %v981, %v1081
  %v1096 = vadd.f32 %v982, %v1086
  %v1097 = vadd.f32 %v983, %v1091
  %v1098 = vld [vmem:[%s6] sm:$0x1]
  %v1100 = vlaneseq
  %v1101 = vshrl.u32 %v1100, 7
  %v1102 = vsub.s32 0, %v1101
  %v1103 = vrot.slane %v1098, %v1102
  %v1105 = vadd.f32 %v1094, %v1103
  %v1106 = vadd.f32 %v1095, %v1103
  %v1107 = vadd.f32 %v1096, %v1103
  %v1108 = vadd.f32 %v1097, %v1103
  %v1109 = vmax.f32 %v1105, 0.0
  %v1110 = vmax.f32 %v1106, 0.0
  %v1111 = vmax.f32 %v1107, 0.0
  %v1112 = vmax.f32 %v1108, 0.0
  %1113 = vst [vmem:[#allocation4] sm:$0xff] 0.0
  %1114 = vst [vmem:[#allocation4 + $0x8] sm:$0xff] 0.0
  %1115 = vst [vmem:[#allocation4 + $0x10] sm:$0x3f] 0.0
  %1116 = vst [vmem:[#allocation4 + $0x18] sm:$0xff] 0.0
  %1117 = vst [vmem:[#allocation4 + $0x20] sm:$0xff] 0.0
  %1118 = vst [vmem:[#allocation4 + $0x28] sm:$0x3f] 0.0
  %1119 = vst [vmem:[#allocation4 + $0x3] sm:$0xff] %v1109
  %1120 = vst [vmem:[#allocation4 + $0xb] sm:$0xff] %v1110
  %1121 = vst [vmem:[#allocation4 + $0x1b] sm:$0xff] %v1111
  %1122 = vst [vmem:[#allocation4 + $0x23] sm:$0xff] %v1112
  %v1123 = vld [vmem:[#allocation4] sm:$0xff]
  %v1124 = vld [vmem:[#allocation4 + $0x8] sm:$0xff]
  %v1125 = vld [vmem:[#allocation4 + $0x18] sm:$0xff]
  %v1126 = vld [vmem:[#allocation4 + $0x20] sm:$0xff]
  %v1127 = vld [vmem:[%s7] sm:$0xff]
  %v1128 = vld [vmem:[%s7 + $0x8] sm:$0xff]
  %v1129 = vld [vmem:[%s7 + $0x10] sm:$0xff]
  %v1130 = vld [vmem:[%s7 + $0x18] sm:$0xff]
  %v1131 = vld [vmem:[%s7 + $0x20] sm:$0xff]
  %v1132 = vld [vmem:[%s7 + $0x28] sm:$0xff]
  %v1133 = vld [vmem:[%s7 + $0x30] sm:$0xff]
  %v1134 = vld [vmem:[%s7 + $0x38] sm:$0xff]
  %v1135 = vld [vmem:[%s7 + $0x40] sm:$0xff]
  %v1136 = vld [vmem:[%s7 + $0x48] sm:$0xff]
  %v1137 = vld [vmem:[%s7 + $0x50] sm:$0xff]
  %v1138 = vld [vmem:[%s7 + $0x58] sm:$0xff]
  %v1139 = vld [vmem:[%s7 + $0x60] sm:$0xff]
  %v1140 = vld [vmem:[%s7 + $0x68] sm:$0xff]
  %v1141 = vld [vmem:[%s7 + $0x70] sm:$0xff]
  %v1142 = vld [vmem:[%s7 + $0x78] sm:$0xff]
  %v1143 = vld [vmem:[%s7 + $0x80] sm:$0xff]
  %v1144 = vld [vmem:[%s7 + $0x88] sm:$0xff]
  %v1145 = vld [vmem:[%s7 + $0x90] sm:$0xff]
  %v1146 = vld [vmem:[%s7 + $0x98] sm:$0xff]
  %v1147 = vld [vmem:[%s7 + $0xa0] sm:$0xff]
  %v1148 = vld [vmem:[%s7 + $0xa8] sm:$0xff]
  %v1149 = vld [vmem:[%s7 + $0xb0] sm:$0xff]
  %v1150 = vld [vmem:[%s7 + $0xb8] sm:$0xff]
  %v1151 = vld [vmem:[%s7 + $0xc0] sm:$0xff]
  %v1152 = vld [vmem:[%s7 + $0xc8] sm:$0xff]
  %v1153 = vld [vmem:[%s7 + $0xd0] sm:$0xff]
  %v1154 = vld [vmem:[%s7 + $0xd8] sm:$0xff]
  %v1155 = vld [vmem:[%s7 + $0xe0] sm:$0xff]
  %v1156 = vld [vmem:[%s7 + $0xe8] sm:$0xff]
  %v1157 = vld [vmem:[%s7 + $0xf0] sm:$0xff]
  %v1158 = vld [vmem:[%s7 + $0xf8] sm:$0xff]
  %v1159 = vld [vmem:[#allocation4 + $0x1] sm:$0xff]
  %v1160 = vld [vmem:[#allocation4 + $0x9] sm:$0xff]
  %v1161 = vld [vmem:[#allocation4 + $0x19] sm:$0xff]
  %v1162 = vld [vmem:[#allocation4 + $0x21] sm:$0xff]
  %s1163 = scalar_lea.vmem %s7, 256
  %v1164 = vld [vmem:[%s1163] sm:$0xff]
  %v1165 = vld [vmem:[%s1163 + $0x8] sm:$0xff]
  %v1166 = vld [vmem:[%s1163 + $0x10] sm:$0xff]
  %v1167 = vld [vmem:[%s1163 + $0x18] sm:$0xff]
  %v1168 = vld [vmem:[%s1163 + $0x20] sm:$0xff]
  %v1169 = vld [vmem:[%s1163 + $0x28] sm:$0xff]
  %v1170 = vld [vmem:[%s1163 + $0x30] sm:$0xff]
  %v1171 = vld [vmem:[%s1163 + $0x38] sm:$0xff]
  %v1172 = vld [vmem:[%s1163 + $0x40] sm:$0xff]
  %v1173 = vld [vmem:[%s1163 + $0x48] sm:$0xff]
  %v1174 = vld [vmem:[%s1163 + $0x50] sm:$0xff]
  %v1175 = vld [vmem:[%s1163 + $0x58] sm:$0xff]
  %v1176 = vld [vmem:[%s1163 + $0x60] sm:$0xff]
  %v1177 = vld [vmem:[%s1163 + $0x68] sm:$0xff]
  %v1178 = vld [vmem:[%s1163 + $0x70] sm:$0xff]
  %v1179 = vld [vmem:[%s1163 + $0x78] sm:$0xff]
  %v1180 = vld [vmem:[%s1163 + $0x80] sm:$0xff]
  %v1181 = vld [vmem:[%s1163 + $0x88] sm:$0xff]
  %v1182 = vld [vmem:[%s1163 + $0x90] sm:$0xff]
  %v1183 = vld [vmem:[%s1163 + $0x98] sm:$0xff]
  %v1184 = vld [vmem:[%s1163 + $0xa0] sm:$0xff]
  %v1185 = vld [vmem:[%s1163 + $0xa8] sm:$0xff]
  %v1186 = vld [vmem:[%s1163 + $0xb0] sm:$0xff]
  %v1187 = vld [vmem:[%s1163 + $0xb8] sm:$0xff]
  %v1188 = vld [vmem:[%s1163 + $0xc0] sm:$0xff]
  %v1189 = vld [vmem:[%s1163 + $0xc8] sm:$0xff]
  %v1190 = vld [vmem:[%s1163 + $0xd0] sm:$0xff]
  %v1191 = vld [vmem:[%s1163 + $0xd8] sm:$0xff]
  %v1192 = vld [vmem:[%s1163 + $0xe0] sm:$0xff]
  %v1193 = vld [vmem:[%s1163 + $0xe8] sm:$0xff]
  %v1194 = vld [vmem:[%s1163 + $0xf0] sm:$0xff]
  %v1195 = vld [vmem:[%s1163 + $0xf8] sm:$0xff]
  %1196 = vmatprep.subr.mxu0 %v1165
  %1197 = vmatpush1.msra.mxu0 %v1164
  %1198 = vmatprep.subr.mxu0 %v1167
  %1199 = vmatpush1.msra.mxu0 %v1166
  %1200 = vmatprep.subr.mxu0 %v1169
  %1201 = vmatpush1.msra.mxu0 %v1168
  %1202 = vmatprep.subr.mxu0 %v1171
  %1203 = vmatpush1.msra.mxu0 %v1170
  %1204 = vmatprep.subr.mxu0 %v1173
  %1205 = vmatpush1.msra.mxu0 %v1172
  %1206 = vmatprep.subr.mxu0 %v1175
  %1207 = vmatpush1.msra.mxu0 %v1174
  %1208 = vmatprep.subr.mxu0 %v1177
  %1209 = vmatpush1.msra.mxu0 %v1176
  %1210 = vmatprep.subr.mxu0 %v1179
  %1211 = vmatpush1.msra.mxu0 %v1178
  %1212 = vmatprep.subr.mxu0 %v1181
  %1213 = vmatpush1.msra.mxu0 %v1180
  %1214 = vmatprep.subr.mxu0 %v1183
  %1215 = vmatpush1.msra.mxu0 %v1182
  %1216 = vmatprep.subr.mxu0 %v1185
  %1217 = vmatpush1.msra.mxu0 %v1184
  %1218 = vmatprep.subr.mxu0 %v1187
  %1219 = vmatpush1.msra.mxu0 %v1186
  %1220 = vmatprep.subr.mxu0 %v1189
  %1221 = vmatpush1.msra.mxu0 %v1188
  %1222 = vmatprep.subr.mxu0 %v1191
  %1223 = vmatpush1.msra.mxu0 %v1190
  %1224 = vmatprep.subr.mxu0 %v1193
  %1225 = vmatpush1.msra.mxu0 %v1192
  %1226 = vmatprep.subr.mxu0 %v1195
  %1227 = vmatpush1.msra.mxu0 %v1194
  %1228 = vmatprep.subr.mxu0 0.0
  %1229 = vmatpush1.msra.mxu0 0.0
  %1230 = vmatprep.subr.mxu0 0.0
  %1231 = vmatpush1.msra.mxu0 0.0
  %1232 = vmatprep.subr.mxu0 0.0
  %1233 = vmatpush1.msra.mxu0 0.0
  %1234 = vmatprep.subr.mxu0 0.0
  %1235 = vmatpush1.msra.mxu0 0.0
  %1236 = vmatprep.subr.mxu0 0.0
  %1237 = vmatpush1.msra.mxu0 0.0
  %1238 = vmatprep.subr.mxu0 0.0
  %1239 = vmatpush1.msra.mxu0 0.0
  %1240 = vmatprep.subr.mxu0 0.0
  %1241 = vmatpush1.msra.mxu0 0.0
  %1242 = vmatprep.subr.mxu0 0.0
  %1243 = vmatpush1.msra.mxu0 0.0
  %1244 = vmatprep.subr.mxu0 0.0
  %1245 = vmatpush1.msra.mxu0 0.0
  %1246 = vmatprep.subr.mxu0 0.0
  %1247 = vmatpush1.msra.mxu0 0.0
  %1248 = vmatprep.subr.mxu0 0.0
  %1249 = vmatpush1.msra.mxu0 0.0
  %1250 = vmatprep.subr.mxu0 0.0
  %1251 = vmatpush1.msra.mxu0 0.0
  %1252 = vmatprep.subr.mxu0 0.0
  %1253 = vmatpush1.msra.mxu0 0.0
  %1254 = vmatprep.subr.mxu0 0.0
  %1255 = vmatpush1.msra.mxu0 0.0
  %1256 = vmatprep.subr.mxu0 0.0
  %1257 = vmatpush1.msra.mxu0 0.0
  %1258 = vmatprep.subr.mxu0 0.0
  %1259 = vmatpush1.msra.mxu0 0.0
  %1260 = vmatprep.mubr.f32.mxu0 0.0
  %1261 = vmatmul.mubr.f32.gmra.mrb[0].mxu0 %v1159
  %v1262 = vpop.f32.mrb[0].mxu0
  %v1263 = vadd.f32 0.0, %v1262
  %v1264 = vpop.f32.mrb[0].mxu0
  %v1265 = vadd.f32 0.0, %v1264
  %1266 = vmatprep.mubr.f32.mxu0 0.0
  %1267 = vmatmul.mubr.f32.gmra.mrb[0].mxu0 %v1160
  %v1268 = vpop.f32.mrb[0].mxu0
  %v1269 = vadd.f32 0.0, %v1268
  %v1270 = vpop.f32.mrb[0].mxu0
  %v1271 = vadd.f32 0.0, %v1270
  %1272 = vmatprep.mubr.f32.mxu0 0.0
  %1273 = vmatmul.mubr.f32.gmra.mrb[0].mxu0 %v1161
  %v1274 = vpop.f32.mrb[0].mxu0
  %v1275 = vadd.f32 0.0, %v1274
  %v1276 = vpop.f32.mrb[0].mxu0
  %v1277 = vadd.f32 0.0, %v1276
  %1278 = vmatprep.mubr.f32.mxu0 0.0
  %1279 = vmatmul.mubr.f32.gmra.mrb[0].mxu0 %v1162
  %v1280 = vpop.f32.mrb[0].mxu0
  %v1281 = vadd.f32 0.0, %v1280
  %v1282 = vpop.f32.mrb[0].mxu0
  %v1283 = vadd.f32 0.0, %v1282
  %1284 = vdwg.mxu0
  %1285 = vmatprep.subr.mxu0 %v1128
  %1286 = vmatpush1.msra.mxu0 %v1127
  %1287 = vmatprep.subr.mxu0 %v1130
  %1288 = vmatpush1.msra.mxu0 %v1129
  %1289 = vmatprep.subr.mxu0 %v1132
  %1290 = vmatpush1.msra.mxu0 %v1131
  %1291 = vmatprep.subr.mxu0 %v1134
  %1292 = vmatpush1.msra.mxu0 %v1133
  %1293 = vmatprep.subr.mxu0 %v1136
  %1294 = vmatpush1.msra.mxu0 %v1135
  %1295 = vmatprep.subr.mxu0 %v1138
  %1296 = vmatpush1.msra.mxu0 %v1137
  %1297 = vmatprep.subr.mxu0 %v1140
  %1298 = vmatpush1.msra.mxu0 %v1139
  %1299 = vmatprep.subr.mxu0 %v1142
  %1300 = vmatpush1.msra.mxu0 %v1141
  %1301 = vmatprep.subr.mxu0 %v1144
  %1302 = vmatpush1.msra.mxu0 %v1143
  %1303 = vmatprep.subr.mxu0 %v1146
  %1304 = vmatpush1.msra.mxu0 %v1145
  %1305 = vmatprep.subr.mxu0 %v1148
  %1306 = vmatpush1.msra.mxu0 %v1147
  %1307 = vmatprep.subr.mxu0 %v1150
  %1308 = vmatpush1.msra.mxu0 %v1149
  %1309 = vmatprep.subr.mxu0 %v1152
  %1310 = vmatpush1.msra.mxu0 %v1151
  %1311 = vmatprep.subr.mxu0 %v1154
  %1312 = vmatpush1.msra.mxu0 %v1153
  %1313 = vmatprep.subr.mxu0 %v1156
  %1314 = vmatpush1.msra.mxu0 %v1155
  %1315 = vmatprep.subr.mxu0 %v1158
  %1316 = vmatpush1.msra.mxu0 %v1157
  %1317 = vmatprep.subr.mxu0 0.0
  %1318 = vmatpush1.msra.mxu0 0.0
  %1319 = vmatprep.subr.mxu0 0.0
  %1320 = vmatpush1.msra.mxu0 0.0
  %1321 = vmatprep.subr.mxu0 0.0
  %1322 = vmatpush1.msra.mxu0 0.0
  %1323 = vmatprep.subr.mxu0 0.0
  %1324 = vmatpush1.msra.mxu0 0.0
  %1325 = vmatprep.subr.mxu0 0.0
  %1326 = vmatpush1.msra.mxu0 0.0
  %1327 = vmatprep.subr.mxu0 0.0
  %1328 = vmatpush1.msra.mxu0 0.0
  %1329 = vmatprep.subr.mxu0 0.0
  %1330 = vmatpush1.msra.mxu0 0.0
  %1331 = vmatprep.subr.mxu0 0.0
  %1332 = vmatpush1.msra.mxu0 0.0
  %1333 = vmatprep.subr.mxu0 0.0
  %1334 = vmatpush1.msra.mxu0 0.0
  %1335 = vmatprep.subr.mxu0 0.0
  %1336 = vmatpush1.msra.mxu0 0.0
  %1337 = vmatprep.subr.mxu0 0.0
  %1338 = vmatpush1.msra.mxu0 0.0
  %1339 = vmatprep.subr.mxu0 0.0
  %1340 = vmatpush1.msra.mxu0 0.0
  %1341 = vmatprep.subr.mxu0 0.0
  %1342 = vmatpush1.msra.mxu0 0.0
  %1343 = vmatprep.subr.mxu0 0.0
  %1344 = vmatpush1.msra.mxu0 0.0
  %1345 = vmatprep.subr.mxu0 0.0
  %1346 = vmatpush1.msra.mxu0 0.0
  %1347 = vmatprep.subr.mxu0 0.0
  %1348 = vmatpush1.msra.mxu0 0.0
  %1349 = vmatprep.mubr.f32.mxu0 0.0
  %1350 = vmatmul.mubr.f32.gmra.mrb[0].mxu0 %v1123
  %v1351 = vpop.f32.mrb[0].mxu0
  %v1352 = vadd.f32 %v1263, %v1351
  %v1353 = vpop.f32.mrb[0].mxu0
  %v1354 = vadd.f32 %v1265, %v1353
  %1355 = vmatprep.mubr.f32.mxu0 0.0
  %1356 = vmatmul.mubr.f32.gmra.mrb[0].mxu0 %v1124
  %v1357 = vpop.f32.mrb[0].mxu0
  %v1358 = vadd.f32 %v1269, %v1357
  %v1359 = vpop.f32.mrb[0].mxu0
  %v1360 = vadd.f32 %v1271, %v1359
  %1361 = vmatprep.mubr.f32.mxu0 0.0
  %1362 = vmatmul.mubr.f32.gmra.mrb[0].mxu0 %v1125
  %v1363 = vpop.f32.mrb[0].mxu0
  %v1364 = vadd.f32 %v1275, %v1363
  %v1365 = vpop.f32.mrb[0].mxu0
  %v1366 = vadd.f32 %v1277, %v1365
  %1367 = vmatprep.mubr.f32.mxu0 0.0
  %1368 = vmatmul.mubr.f32.gmra.mrb[0].mxu0 %v1126
  %v1369 = vpop.f32.mrb[0].mxu0
  %v1370 = vadd.f32 %v1281, %v1369
  %v1371 = vpop.f32.mrb[0].mxu0
  %v1372 = vadd.f32 %v1283, %v1371
  %1373 = vdwg.mxu0
  %v1374 = vld [vmem:[#allocation4 + $0x2] sm:$0xff]
  %v1375 = vld [vmem:[#allocation4 + $0xa] sm:$0xff]
  %v1376 = vld [vmem:[#allocation4 + $0x1a] sm:$0xff]
  %v1377 = vld [vmem:[#allocation4 + $0x22] sm:$0xff]
  %s1378 = scalar_lea.vmem %s7, 512
  %v1379 = vld [vmem:[%s1378] sm:$0xff]
  %v1380 = vld [vmem:[%s1378 + $0x8] sm:$0xff]
  %v1381 = vld [vmem:[%s1378 + $0x10] sm:$0xff]
  %v1382 = vld [vmem:[%s1378 + $0x18] sm:$0xff]
  %v1383 = vld [vmem:[%s1378 + $0x20] sm:$0xff]
  %v1384 = vld [vmem:[%s1378 + $0x28] sm:$0xff]
  %v1385 = vld [vmem:[%s1378 + $0x30] sm:$0xff]
  %v1386 = vld [vmem:[%s1378 + $0x38] sm:$0xff]
  %v1387 = vld [vmem:[%s1378 + $0x40] sm:$0xff]
  %v1388 = vld [vmem:[%s1378 + $0x48] sm:$0xff]
  %v1389 = vld [vmem:[%s1378 + $0x50] sm:$0xff]
  %v1390 = vld [vmem:[%s1378 + $0x58] sm:$0xff]
  %v1391 = vld [vmem:[%s1378 + $0x60] sm:$0xff]
  %v1392 = vld [vmem:[%s1378 + $0x68] sm:$0xff]
  %v1393 = vld [vmem:[%s1378 + $0x70] sm:$0xff]
  %v1394 = vld [vmem:[%s1378 + $0x78] sm:$0xff]
  %v1395 = vld [vmem:[%s1378 + $0x80] sm:$0xff]
  %v1396 = vld [vmem:[%s1378 + $0x88] sm:$0xff]
  %v1397 = vld [vmem:[%s1378 + $0x90] sm:$0xff]
  %v1398 = vld [vmem:[%s1378 + $0x98] sm:$0xff]
  %v1399 = vld [vmem:[%s1378 + $0xa0] sm:$0xff]
  %v1400 = vld [vmem:[%s1378 + $0xa8] sm:$0xff]
  %v1401 = vld [vmem:[%s1378 + $0xb0] sm:$0xff]
  %v1402 = vld [vmem:[%s1378 + $0xb8] sm:$0xff]
  %v1403 = vld [vmem:[%s1378 + $0xc0] sm:$0xff]
  %v1404 = vld [vmem:[%s1378 + $0xc8] sm:$0xff]
  %v1405 = vld [vmem:[%s1378 + $0xd0] sm:$0xff]
  %v1406 = vld [vmem:[%s1378 + $0xd8] sm:$0xff]
  %v1407 = vld [vmem:[%s1378 + $0xe0] sm:$0xff]
  %v1408 = vld [vmem:[%s1378 + $0xe8] sm:$0xff]
  %v1409 = vld [vmem:[%s1378 + $0xf0] sm:$0xff]
  %v1410 = vld [vmem:[%s1378 + $0xf8] sm:$0xff]
  %1411 = vmatprep.subr.mxu0 %v1380
  %1412 = vmatpush1.msra.mxu0 %v1379
  %1413 = vmatprep.subr.mxu0 %v1382
  %1414 = vmatpush1.msra.mxu0 %v1381
  %1415 = vmatprep.subr.mxu0 %v1384
  %1416 = vmatpush1.msra.mxu0 %v1383
  %1417 = vmatprep.subr.mxu0 %v1386
  %1418 = vmatpush1.msra.mxu0 %v1385
  %1419 = vmatprep.subr.mxu0 %v1388
  %1420 = vmatpush1.msra.mxu0 %v1387
  %1421 = vmatprep.subr.mxu0 %v1390
  %1422 = vmatpush1.msra.mxu0 %v1389
  %1423 = vmatprep.subr.mxu0 %v1392
  %1424 = vmatpush1.msra.mxu0 %v1391
  %1425 = vmatprep.subr.mxu0 %v1394
  %1426 = vmatpush1.msra.mxu0 %v1393
  %1427 = vmatprep.subr.mxu0 %v1396
  %1428 = vmatpush1.msra.mxu0 %v1395
  %1429 = vmatprep.subr.mxu0 %v1398
  %1430 = vmatpush1.msra.mxu0 %v1397
  %1431 = vmatprep.subr.mxu0 %v1400
  %1432 = vmatpush1.msra.mxu0 %v1399
  %1433 = vmatprep.subr.mxu0 %v1402
  %1434 = vmatpush1.msra.mxu0 %v1401
  %1435 = vmatprep.subr.mxu0 %v1404
  %1436 = vmatpush1.msra.mxu0 %v1403
  %1437 = vmatprep.subr.mxu0 %v1406
  %1438 = vmatpush1.msra.mxu0 %v1405
  %1439 = vmatprep.subr.mxu0 %v1408
  %1440 = vmatpush1.msra.mxu0 %v1407
  %1441 = vmatprep.subr.mxu0 %v1410
  %1442 = vmatpush1.msra.mxu0 %v1409
  %1443 = vmatprep.subr.mxu0 0.0
  %1444 = vmatpush1.msra.mxu0 0.0
  %1445 = vmatprep.subr.mxu0 0.0
  %1446 = vmatpush1.msra.mxu0 0.0
  %1447 = vmatprep.subr.mxu0 0.0
  %1448 = vmatpush1.msra.mxu0 0.0
  %1449 = vmatprep.subr.mxu0 0.0
  %1450 = vmatpush1.msra.mxu0 0.0
  %1451 = vmatprep.subr.mxu0 0.0
  %1452 = vmatpush1.msra.mxu0 0.0
  %1453 = vmatprep.subr.mxu0 0.0
  %1454 = vmatpush1.msra.mxu0 0.0
  %1455 = vmatprep.subr.mxu0 0.0
  %1456 = vmatpush1.msra.mxu0 0.0
  %1457 = vmatprep.subr.mxu0 0.0
  %1458 = vmatpush1.msra.mxu0 0.0
  %1459 = vmatprep.subr.mxu0 0.0
  %1460 = vmatpush1.msra.mxu0 0.0
  %1461 = vmatprep.subr.mxu0 0.0
  %1462 = vmatpush1.msra.mxu0 0.0
  %1463 = vmatprep.subr.mxu0 0.0
  %1464 = vmatpush1.msra.mxu0 0.0
  %1465 = vmatprep.subr.mxu0 0.0
  %1466 = vmatpush1.msra.mxu0 0.0
  %1467 = vmatprep.subr.mxu0 0.0
  %1468 = vmatpush1.msra.mxu0 0.0
  %1469 = vmatprep.subr.mxu0 0.0
  %1470 = vmatpush1.msra.mxu0 0.0
  %1471 = vmatprep.subr.mxu0 0.0
  %1472 = vmatpush1.msra.mxu0 0.0
  %1473 = vmatprep.subr.mxu0 0.0
  %1474 = vmatpush1.msra.mxu0 0.0
  %1475 = vmatprep.mubr.f32.mxu0 0.0
  %1476 = vmatmul.mubr.f32.gmra.mrb[0].mxu0 %v1374
  %v1477 = vpop.f32.mrb[0].mxu0
  %v1478 = vadd.f32 0.0, %v1477
  %v1479 = vpop.f32.mrb[0].mxu0
  %v1480 = vadd.f32 0.0, %v1479
  %1481 = vmatprep.mubr.f32.mxu0 0.0
  %1482 = vmatmul.mubr.f32.gmra.mrb[0].mxu0 %v1375
  %v1483 = vpop.f32.mrb[0].mxu0
  %v1484 = vadd.f32 0.0, %v1483
  %v1485 = vpop.f32.mrb[0].mxu0
  %v1486 = vadd.f32 0.0, %v1485
  %1487 = vmatprep.mubr.f32.mxu0 0.0
  %1488 = vmatmul.mubr.f32.gmra.mrb[0].mxu0 %v1376
  %v1489 = vpop.f32.mrb[0].mxu0
  %v1490 = vadd.f32 0.0, %v1489
  %v1491 = vpop.f32.mrb[0].mxu0
  %v1492 = vadd.f32 0.0, %v1491
  %1493 = vmatprep.mubr.f32.mxu0 0.0
  %1494 = vmatmul.mubr.f32.gmra.mrb[0].mxu0 %v1377
  %v1495 = vpop.f32.mrb[0].mxu0
  %v1496 = vadd.f32 0.0, %v1495
  %v1497 = vpop.f32.mrb[0].mxu0
  %v1498 = vadd.f32 0.0, %v1497
  %1499 = vdwg.mxu0
  %v1500 = vadd.f32 %v1352, %v1478
  %v1501 = vadd.f32 %v1354, %v1480
  %v1502 = vadd.f32 %v1358, %v1484
  %v1503 = vadd.f32 %v1360, %v1486
  %v1504 = vadd.f32 %v1364, %v1490
  %v1505 = vadd.f32 %v1366, %v1492
  %v1506 = vadd.f32 %v1370, %v1496
  %v1507 = vadd.f32 %v1372, %v1498
  %v1508 = vld [vmem:[#allocation4 + $0x3] sm:$0xff]
  %v1509 = vld [vmem:[#allocation4 + $0xb] sm:$0xff]
  %v1510 = vld [vmem:[#allocation4 + $0x1b] sm:$0xff]
  %v1511 = vld [vmem:[#allocation4 + $0x23] sm:$0xff]
  %s1512 = scalar_lea.vmem %s7, 768
  %v1513 = vld [vmem:[%s1512] sm:$0xff]
  %v1514 = vld [vmem:[%s1512 + $0x8] sm:$0xff]
  %v1515 = vld [vmem:[%s1512 + $0x10] sm:$0xff]
  %v1516 = vld [vmem:[%s1512 + $0x18] sm:$0xff]
  %v1517 = vld [vmem:[%s1512 + $0x20] sm:$0xff]
  %v1518 = vld [vmem:[%s1512 + $0x28] sm:$0xff]
  %v1519 = vld [vmem:[%s1512 + $0x30] sm:$0xff]
  %v1520 = vld [vmem:[%s1512 + $0x38] sm:$0xff]
  %v1521 = vld [vmem:[%s1512 + $0x40] sm:$0xff]
  %v1522 = vld [vmem:[%s1512 + $0x48] sm:$0xff]
  %v1523 = vld [vmem:[%s1512 + $0x50] sm:$0xff]
  %v1524 = vld [vmem:[%s1512 + $0x58] sm:$0xff]
  %v1525 = vld [vmem:[%s1512 + $0x60] sm:$0xff]
  %v1526 = vld [vmem:[%s1512 + $0x68] sm:$0xff]
  %v1527 = vld [vmem:[%s1512 + $0x70] sm:$0xff]
  %v1528 = vld [vmem:[%s1512 + $0x78] sm:$0xff]
  %v1529 = vld [vmem:[%s1512 + $0x80] sm:$0xff]
  %v1530 = vld [vmem:[%s1512 + $0x88] sm:$0xff]
  %v1531 = vld [vmem:[%s1512 + $0x90] sm:$0xff]
  %v1532 = vld [vmem:[%s1512 + $0x98] sm:$0xff]
  %v1533 = vld [vmem:[%s1512 + $0xa0] sm:$0xff]
  %v1534 = vld [vmem:[%s1512 + $0xa8] sm:$0xff]
  %v1535 = vld [vmem:[%s1512 + $0xb0] sm:$0xff]
  %v1536 = vld [vmem:[%s1512 + $0xb8] sm:$0xff]
  %v1537 = vld [vmem:[%s1512 + $0xc0] sm:$0xff]
  %v1538 = vld [vmem:[%s1512 + $0xc8] sm:$0xff]
  %v1539 = vld [vmem:[%s1512 + $0xd0] sm:$0xff]
  %v1540 = vld [vmem:[%s1512 + $0xd8] sm:$0xff]
  %v1541 = vld [vmem:[%s1512 + $0xe0] sm:$0xff]
  %v1542 = vld [vmem:[%s1512 + $0xe8] sm:$0xff]
  %v1543 = vld [vmem:[%s1512 + $0xf0] sm:$0xff]
  %v1544 = vld [vmem:[%s1512 + $0xf8] sm:$0xff]
  %1545 = vmatprep.subr.mxu0 %v1514
  %1546 = vmatpush1.msra.mxu0 %v1513
  %1547 = vmatprep.subr.mxu0 %v1516
  %1548 = vmatpush1.msra.mxu0 %v1515
  %1549 = vmatprep.subr.mxu0 %v1518
  %1550 = vmatpush1.msra.mxu0 %v1517
  %1551 = vmatprep.subr.mxu0 %v1520
  %1552 = vmatpush1.msra.mxu0 %v1519
  %1553 = vmatprep.subr.mxu0 %v1522
  %1554 = vmatpush1.msra.mxu0 %v1521
  %1555 = vmatprep.subr.mxu0 %v1524
  %1556 = vmatpush1.msra.mxu0 %v1523
  %1557 = vmatprep.subr.mxu0 %v1526
  %1558 = vmatpush1.msra.mxu0 %v1525
  %1559 = vmatprep.subr.mxu0 %v1528
  %1560 = vmatpush1.msra.mxu0 %v1527
  %1561 = vmatprep.subr.mxu0 %v1530
  %1562 = vmatpush1.msra.mxu0 %v1529
  %1563 = vmatprep.subr.mxu0 %v1532
  %1564 = vmatpush1.msra.mxu0 %v1531
  %1565 = vmatprep.subr.mxu0 %v1534
  %1566 = vmatpush1.msra.mxu0 %v1533
  %1567 = vmatprep.subr.mxu0 %v1536
  %1568 = vmatpush1.msra.mxu0 %v1535
  %1569 = vmatprep.subr.mxu0 %v1538
  %1570 = vmatpush1.msra.mxu0 %v1537
  %1571 = vmatprep.subr.mxu0 %v1540
  %1572 = vmatpush1.msra.mxu0 %v1539
  %1573 = vmatprep.subr.mxu0 %v1542
  %1574 = vmatpush1.msra.mxu0 %v1541
  %1575 = vmatprep.subr.mxu0 %v1544
  %1576 = vmatpush1.msra.mxu0 %v1543
  %1577 = vmatprep.subr.mxu0 0.0
  %1578 = vmatpush1.msra.mxu0 0.0
  %1579 = vmatprep.subr.mxu0 0.0
  %1580 = vmatpush1.msra.mxu0 0.0
  %1581 = vmatprep.subr.mxu0 0.0
  %1582 = vmatpush1.msra.mxu0 0.0
  %1583 = vmatprep.subr.mxu0 0.0
  %1584 = vmatpush1.msra.mxu0 0.0
  %1585 = vmatprep.subr.mxu0 0.0
  %1586 = vmatpush1.msra.mxu0 0.0
  %1587 = vmatprep.subr.mxu0 0.0
  %1588 = vmatpush1.msra.mxu0 0.0
  %1589 = vmatprep.subr.mxu0 0.0
  %1590 = vmatpush1.msra.mxu0 0.0
  %1591 = vmatprep.subr.mxu0 0.0
  %1592 = vmatpush1.msra.mxu0 0.0
  %1593 = vmatprep.subr.mxu0 0.0
  %1594 = vmatpush1.msra.mxu0 0.0
  %1595 = vmatprep.subr.mxu0 0.0
  %1596 = vmatpush1.msra.mxu0 0.0
  %1597 = vmatprep.subr.mxu0 0.0
  %1598 = vmatpush1.msra.mxu0 0.0
  %1599 = vmatprep.subr.mxu0 0.0
  %1600 = vmatpush1.msra.mxu0 0.0
  %1601 = vmatprep.subr.mxu0 0.0
  %1602 = vmatpush1.msra.mxu0 0.0
  %1603 = vmatprep.subr.mxu0 0.0
  %1604 = vmatpush1.msra.mxu0 0.0
  %1605 = vmatprep.subr.mxu0 0.0
  %1606 = vmatpush1.msra.mxu0 0.0
  %1607 = vmatprep.subr.mxu0 0.0
  %1608 = vmatpush1.msra.mxu0 0.0
  %1609 = vmatprep.mubr.f32.mxu0 0.0
  %1610 = vmatmul.mubr.f32.gmra.mrb[0].mxu0 %v1508
  %v1611 = vpop.f32.mrb[0].mxu0
  %v1612 = vadd.f32 0.0, %v1611
  %v1613 = vpop.f32.mrb[0].mxu0
  %v1614 = vadd.f32 0.0, %v1613
  %1615 = vmatprep.mubr.f32.mxu0 0.0
  %1616 = vmatmul.mubr.f32.gmra.mrb[0].mxu0 %v1509
  %v1617 = vpop.f32.mrb[0].mxu0
  %v1618 = vadd.f32 0.0, %v1617
  %v1619 = vpop.f32.mrb[0].mxu0
  %v1620 = vadd.f32 0.0, %v1619
  %1621 = vmatprep.mubr.f32.mxu0 0.0
  %1622 = vmatmul.mubr.f32.gmra.mrb[0].mxu0 %v1510
  %v1623 = vpop.f32.mrb[0].mxu0
  %v1624 = vadd.f32 0.0, %v1623
  %v1625 = vpop.f32.mrb[0].mxu0
  %v1626 = vadd.f32 0.0, %v1625
  %1627 = vmatprep.mubr.f32.mxu0 0.0
  %1628 = vmatmul.mubr.f32.gmra.mrb[0].mxu0 %v1511
  %v1629 = vpop.f32.mrb[0].mxu0
  %v1630 = vadd.f32 0.0, %v1629
  %v1631 = vpop.f32.mrb[0].mxu0
  %v1632 = vadd.f32 0.0, %v1631
  %1633 = vdwg.mxu0
  %v1634 = vadd.f32 %v1500, %v1612
  %v1635 = vadd.f32 %v1501, %v1614
  %v1636 = vadd.f32 %v1502, %v1618
  %v1637 = vadd.f32 %v1503, %v1620
  %v1638 = vadd.f32 %v1504, %v1624
  %v1639 = vadd.f32 %v1505, %v1626
  %v1640 = vadd.f32 %v1506, %v1630
  %v1641 = vadd.f32 %v1507, %v1632
  %v1642 = vld [vmem:[#allocation4 + $0x4] sm:$0xff]
  %v1643 = vld [vmem:[#allocation4 + $0xc] sm:$0xff]
  %v1644 = vld [vmem:[#allocation4 + $0x1c] sm:$0xff]
  %v1645 = vld [vmem:[#allocation4 + $0x24] sm:$0xff]
  %s1646 = scalar_lea.vmem %s7, 1024
  %v1647 = vld [vmem:[%s1646] sm:$0xff]
  %v1648 = vld [vmem:[%s1646 + $0x8] sm:$0xff]
  %v1649 = vld [vmem:[%s1646 + $0x10] sm:$0xff]
  %v1650 = vld [vmem:[%s1646 + $0x18] sm:$0xff]
  %v1651 = vld [vmem:[%s1646 + $0x20] sm:$0xff]
  %v1652 = vld [vmem:[%s1646 + $0x28] sm:$0xff]
  %v1653 = vld [vmem:[%s1646 + $0x30] sm:$0xff]
  %v1654 = vld [vmem:[%s1646 + $0x38] sm:$0xff]
  %v1655 = vld [vmem:[%s1646 + $0x40] sm:$0xff]
  %v1656 = vld [vmem:[%s1646 + $0x48] sm:$0xff]
  %v1657 = vld [vmem:[%s1646 + $0x50] sm:$0xff]
  %v1658 = vld [vmem:[%s1646 + $0x58] sm:$0xff]
  %v1659 = vld [vmem:[%s1646 + $0x60] sm:$0xff]
  %v1660 = vld [vmem:[%s1646 + $0x68] sm:$0xff]
  %v1661 = vld [vmem:[%s1646 + $0x70] sm:$0xff]
  %v1662 = vld [vmem:[%s1646 + $0x78] sm:$0xff]
  %v1663 = vld [vmem:[%s1646 + $0x80] sm:$0xff]
  %v1664 = vld [vmem:[%s1646 + $0x88] sm:$0xff]
  %v1665 = vld [vmem:[%s1646 + $0x90] sm:$0xff]
  %v1666 = vld [vmem:[%s1646 + $0x98] sm:$0xff]
  %v1667 = vld [vmem:[%s1646 + $0xa0] sm:$0xff]
  %v1668 = vld [vmem:[%s1646 + $0xa8] sm:$0xff]
  %v1669 = vld [vmem:[%s1646 + $0xb0] sm:$0xff]
  %v1670 = vld [vmem:[%s1646 + $0xb8] sm:$0xff]
  %v1671 = vld [vmem:[%s1646 + $0xc0] sm:$0xff]
  %v1672 = vld [vmem:[%s1646 + $0xc8] sm:$0xff]
  %v1673 = vld [vmem:[%s1646 + $0xd0] sm:$0xff]
  %v1674 = vld [vmem:[%s1646 + $0xd8] sm:$0xff]
  %v1675 = vld [vmem:[%s1646 + $0xe0] sm:$0xff]
  %v1676 = vld [vmem:[%s1646 + $0xe8] sm:$0xff]
  %v1677 = vld [vmem:[%s1646 + $0xf0] sm:$0xff]
  %v1678 = vld [vmem:[%s1646 + $0xf8] sm:$0xff]
  %1679 = vmatprep.subr.mxu0 %v1648
  %1680 = vmatpush1.msra.mxu0 %v1647
  %1681 = vmatprep.subr.mxu0 %v1650
  %1682 = vmatpush1.msra.mxu0 %v1649
  %1683 = vmatprep.subr.mxu0 %v1652
  %1684 = vmatpush1.msra.mxu0 %v1651
  %1685 = vmatprep.subr.mxu0 %v1654
  %1686 = vmatpush1.msra.mxu0 %v1653
  %1687 = vmatprep.subr.mxu0 %v1656
  %1688 = vmatpush1.msra.mxu0 %v1655
  %1689 = vmatprep.subr.mxu0 %v1658
  %1690 = vmatpush1.msra.mxu0 %v1657
  %1691 = vmatprep.subr.mxu0 %v1660
  %1692 = vmatpush1.msra.mxu0 %v1659
  %1693 = vmatprep.subr.mxu0 %v1662
  %1694 = vmatpush1.msra.mxu0 %v1661
  %1695 = vmatprep.subr.mxu0 %v1664
  %1696 = vmatpush1.msra.mxu0 %v1663
  %1697 = vmatprep.subr.mxu0 %v1666
  %1698 = vmatpush1.msra.mxu0 %v1665
  %1699 = vmatprep.subr.mxu0 %v1668
  %1700 = vmatpush1.msra.mxu0 %v1667
  %1701 = vmatprep.subr.mxu0 %v1670
  %1702 = vmatpush1.msra.mxu0 %v1669
  %1703 = vmatprep.subr.mxu0 %v1672
  %1704 = vmatpush1.msra.mxu0 %v1671
  %1705 = vmatprep.subr.mxu0 %v1674
  %1706 = vmatpush1.msra.mxu0 %v1673
  %1707 = vmatprep.subr.mxu0 %v1676
  %1708 = vmatpush1.msra.mxu0 %v1675
  %1709 = vmatprep.subr.mxu0 %v1678
  %1710 = vmatpush1.msra.mxu0 %v1677
  %1711 = vmatprep.subr.mxu0 0.0
  %1712 = vmatpush1.msra.mxu0 0.0
  %1713 = vmatprep.subr.mxu0 0.0
  %1714 = vmatpush1.msra.mxu0 0.0
  %1715 = vmatprep.subr.mxu0 0.0
  %1716 = vmatpush1.msra.mxu0 0.0
  %1717 = vmatprep.subr.mxu0 0.0
  %1718 = vmatpush1.msra.mxu0 0.0
  %1719 = vmatprep.subr.mxu0 0.0
  %1720 = vmatpush1.msra.mxu0 0.0
  %1721 = vmatprep.subr.mxu0 0.0
  %1722 = vmatpush1.msra.mxu0 0.0
  %1723 = vmatprep.subr.mxu0 0.0
  %1724 = vmatpush1.msra.mxu0 0.0
  %1725 = vmatprep.subr.mxu0 0.0
  %1726 = vmatpush1.msra.mxu0 0.0
  %1727 = vmatprep.subr.mxu0 0.0
  %1728 = vmatpush1.msra.mxu0 0.0
  %1729 = vmatprep.subr.mxu0 0.0
  %1730 = vmatpush1.msra.mxu0 0.0
  %1731 = vmatprep.subr.mxu0 0.0
  %1732 = vmatpush1.msra.mxu0 0.0
  %1733 = vmatprep.subr.mxu0 0.0
  %1734 = vmatpush1.msra.mxu0 0.0
  %1735 = vmatprep.subr.mxu0 0.0
  %1736 = vmatpush1.msra.mxu0 0.0
  %1737 = vmatprep.subr.mxu0 0.0
  %1738 = vmatpush1.msra.mxu0 0.0
  %1739 = vmatprep.subr.mxu0 0.0
  %1740 = vmatpush1.msra.mxu0 0.0
  %1741 = vmatprep.subr.mxu0 0.0
  %1742 = vmatpush1.msra.mxu0 0.0
  %1743 = vmatprep.mubr.f32.mxu0 0.0
  %1744 = vmatmul.mubr.f32.gmra.mrb[0].mxu0 %v1642
  %v1745 = vpop.f32.mrb[0].mxu0
  %v1746 = vadd.f32 0.0, %v1745
  %v1747 = vpop.f32.mrb[0].mxu0
  %v1748 = vadd.f32 0.0, %v1747
  %1749 = vmatprep.mubr.f32.mxu0 0.0
  %1750 = vmatmul.mubr.f32.gmra.mrb[0].mxu0 %v1643
  %v1751 = vpop.f32.mrb[0].mxu0
  %v1752 = vadd.f32 0.0, %v1751
  %v1753 = vpop.f32.mrb[0].mxu0
  %v1754 = vadd.f32 0.0, %v1753
  %1755 = vmatprep.mubr.f32.mxu0 0.0
  %1756 = vmatmul.mubr.f32.gmra.mrb[0].mxu0 %v1644
  %v1757 = vpop.f32.mrb[0].mxu0
  %v1758 = vadd.f32 0.0, %v1757
  %v1759 = vpop.f32.mrb[0].mxu0
  %v1760 = vadd.f32 0.0, %v1759
  %1761 = vmatprep.mubr.f32.mxu0 0.0
  %1762 = vmatmul.mubr.f32.gmra.mrb[0].mxu0 %v1645
  %v1763 = vpop.f32.mrb[0].mxu0
  %v1764 = vadd.f32 0.0, %v1763
  %v1765 = vpop.f32.mrb[0].mxu0
  %v1766 = vadd.f32 0.0, %v1765
  %1767 = vdwg.mxu0
  %v1768 = vadd.f32 %v1634, %v1746
  %v1769 = vadd.f32 %v1635, %v1748
  %v1770 = vadd.f32 %v1636, %v1752
  %v1771 = vadd.f32 %v1637, %v1754
  %v1772 = vadd.f32 %v1638, %v1758
  %v1773 = vadd.f32 %v1639, %v1760
  %v1774 = vadd.f32 %v1640, %v1764
  %v1775 = vadd.f32 %v1641, %v1766
  %v1776 = vld [vmem:[#allocation4 + $0x5] sm:$0xff]
  %v1777 = vld [vmem:[#allocation4 + $0xd] sm:$0xff]
  %v1778 = vld [vmem:[#allocation4 + $0x1d] sm:$0xff]
  %v1779 = vld [vmem:[#allocation4 + $0x25] sm:$0xff]
  %s1780 = scalar_lea.vmem %s7, 1280
  %v1781 = vld [vmem:[%s1780] sm:$0xff]
  %v1782 = vld [vmem:[%s1780 + $0x8] sm:$0xff]
  %v1783 = vld [vmem:[%s1780 + $0x10] sm:$0xff]
  %v1784 = vld [vmem:[%s1780 + $0x18] sm:$0xff]
  %v1785 = vld [vmem:[%s1780 + $0x20] sm:$0xff]
  %v1786 = vld [vmem:[%s1780 + $0x28] sm:$0xff]
  %v1787 = vld [vmem:[%s1780 + $0x30] sm:$0xff]
  %v1788 = vld [vmem:[%s1780 + $0x38] sm:$0xff]
  %v1789 = vld [vmem:[%s1780 + $0x40] sm:$0xff]
  %v1790 = vld [vmem:[%s1780 + $0x48] sm:$0xff]
  %v1791 = vld [vmem:[%s1780 + $0x50] sm:$0xff]
  %v1792 = vld [vmem:[%s1780 + $0x58] sm:$0xff]
  %v1793 = vld [vmem:[%s1780 + $0x60] sm:$0xff]
  %v1794 = vld [vmem:[%s1780 + $0x68] sm:$0xff]
  %v1795 = vld [vmem:[%s1780 + $0x70] sm:$0xff]
  %v1796 = vld [vmem:[%s1780 + $0x78] sm:$0xff]
  %v1797 = vld [vmem:[%s1780 + $0x80] sm:$0xff]
  %v1798 = vld [vmem:[%s1780 + $0x88] sm:$0xff]
  %v1799 = vld [vmem:[%s1780 + $0x90] sm:$0xff]
  %v1800 = vld [vmem:[%s1780 + $0x98] sm:$0xff]
  %v1801 = vld [vmem:[%s1780 + $0xa0] sm:$0xff]
  %v1802 = vld [vmem:[%s1780 + $0xa8] sm:$0xff]
  %v1803 = vld [vmem:[%s1780 + $0xb0] sm:$0xff]
  %v1804 = vld [vmem:[%s1780 + $0xb8] sm:$0xff]
  %v1805 = vld [vmem:[%s1780 + $0xc0] sm:$0xff]
  %v1806 = vld [vmem:[%s1780 + $0xc8] sm:$0xff]
  %v1807 = vld [vmem:[%s1780 + $0xd0] sm:$0xff]
  %v1808 = vld [vmem:[%s1780 + $0xd8] sm:$0xff]
  %v1809 = vld [vmem:[%s1780 + $0xe0] sm:$0xff]
  %v1810 = vld [vmem:[%s1780 + $0xe8] sm:$0xff]
  %v1811 = vld [vmem:[%s1780 + $0xf0] sm:$0xff]
  %v1812 = vld [vmem:[%s1780 + $0xf8] sm:$0xff]
  %1813 = vmatprep.subr.mxu0 %v1782
  %1814 = vmatpush1.msra.mxu0 %v1781
  %1815 = vmatprep.subr.mxu0 %v1784
  %1816 = vmatpush1.msra.mxu0 %v1783
  %1817 = vmatprep.subr.mxu0 %v1786
  %1818 = vmatpush1.msra.mxu0 %v1785
  %1819 = vmatprep.subr.mxu0 %v1788
  %1820 = vmatpush1.msra.mxu0 %v1787
  %1821 = vmatprep.subr.mxu0 %v1790
  %1822 = vmatpush1.msra.mxu0 %v1789
  %1823 = vmatprep.subr.mxu0 %v1792
  %1824 = vmatpush1.msra.mxu0 %v1791
  %1825 = vmatprep.subr.mxu0 %v1794
  %1826 = vmatpush1.msra.mxu0 %v1793
  %1827 = vmatprep.subr.mxu0 %v1796
  %1828 = vmatpush1.msra.mxu0 %v1795
  %1829 = vmatprep.subr.mxu0 %v1798
  %1830 = vmatpush1.msra.mxu0 %v1797
  %1831 = vmatprep.subr.mxu0 %v1800
  %1832 = vmatpush1.msra.mxu0 %v1799
  %1833 = vmatprep.subr.mxu0 %v1802
  %1834 = vmatpush1.msra.mxu0 %v1801
  %1835 = vmatprep.subr.mxu0 %v1804
  %1836 = vmatpush1.msra.mxu0 %v1803
  %1837 = vmatprep.subr.mxu0 %v1806
  %1838 = vmatpush1.msra.mxu0 %v1805
  %1839 = vmatprep.subr.mxu0 %v1808
  %1840 = vmatpush1.msra.mxu0 %v1807
  %1841 = vmatprep.subr.mxu0 %v1810
  %1842 = vmatpush1.msra.mxu0 %v1809
  %1843 = vmatprep.subr.mxu0 %v1812
  %1844 = vmatpush1.msra.mxu0 %v1811
  %1845 = vmatprep.subr.mxu0 0.0
  %1846 = vmatpush1.msra.mxu0 0.0
  %1847 = vmatprep.subr.mxu0 0.0
  %1848 = vmatpush1.msra.mxu0 0.0
  %1849 = vmatprep.subr.mxu0 0.0
  %1850 = vmatpush1.msra.mxu0 0.0
  %1851 = vmatprep.subr.mxu0 0.0
  %1852 = vmatpush1.msra.mxu0 0.0
  %1853 = vmatprep.subr.mxu0 0.0
  %1854 = vmatpush1.msra.mxu0 0.0
  %1855 = vmatprep.subr.mxu0 0.0
  %1856 = vmatpush1.msra.mxu0 0.0
  %1857 = vmatprep.subr.mxu0 0.0
  %1858 = vmatpush1.msra.mxu0 0.0
  %1859 = vmatprep.subr.mxu0 0.0
  %1860 = vmatpush1.msra.mxu0 0.0
  %1861 = vmatprep.subr.mxu0 0.0
  %1862 = vmatpush1.msra.mxu0 0.0
  %1863 = vmatprep.subr.mxu0 0.0
  %1864 = vmatpush1.msra.mxu0 0.0
  %1865 = vmatprep.subr.mxu0 0.0
  %1866 = vmatpush1.msra.mxu0 0.0
  %1867 = vmatprep.subr.mxu0 0.0
  %1868 = vmatpush1.msra.mxu0 0.0
  %1869 = vmatprep.subr.mxu0 0.0
  %1870 = vmatpush1.msra.mxu0 0.0
  %1871 = vmatprep.subr.mxu0 0.0
  %1872 = vmatpush1.msra.mxu0 0.0
  %1873 = vmatprep.subr.mxu0 0.0
  %1874 = vmatpush1.msra.mxu0 0.0
  %1875 = vmatprep.subr.mxu0 0.0
  %1876 = vmatpush1.msra.mxu0 0.0
  %1877 = vmatprep.mubr.f32.mxu0 0.0
  %1878 = vmatmul.mubr.f32.gmra.mrb[0].mxu0 %v1776
  %v1879 = vpop.f32.mrb[0].mxu0
  %v1880 = vadd.f32 0.0, %v1879
  %v1881 = vpop.f32.mrb[0].mxu0
  %v1882 = vadd.f32 0.0, %v1881
  %1883 = vmatprep.mubr.f32.mxu0 0.0
  %1884 = vmatmul.mubr.f32.gmra.mrb[0].mxu0 %v1777
  %v1885 = vpop.f32.mrb[0].mxu0
  %v1886 = vadd.f32 0.0, %v1885
  %v1887 = vpop.f32.mrb[0].mxu0
  %v1888 = vadd.f32 0.0, %v1887
  %1889 = vmatprep.mubr.f32.mxu0 0.0
  %1890 = vmatmul.mubr.f32.gmra.mrb[0].mxu0 %v1778
  %v1891 = vpop.f32.mrb[0].mxu0
  %v1892 = vadd.f32 0.0, %v1891
  %v1893 = vpop.f32.mrb[0].mxu0
  %v1894 = vadd.f32 0.0, %v1893
  %1895 = vmatprep.mubr.f32.mxu0 0.0
  %1896 = vmatmul.mubr.f32.gmra.mrb[0].mxu0 %v1779
  %v1897 = vpop.f32.mrb[0].mxu0
  %v1898 = vadd.f32 0.0, %v1897
  %v1899 = vpop.f32.mrb[0].mxu0
  %v1900 = vadd.f32 0.0, %v1899
  %1901 = vdwg.mxu0
  %v1902 = vadd.f32 %v1768, %v1880
  %v1903 = vadd.f32 %v1769, %v1882
  %v1904 = vadd.f32 %v1770, %v1886
  %v1905 = vadd.f32 %v1771, %v1888
  %v1906 = vadd.f32 %v1772, %v1892
  %v1907 = vadd.f32 %v1773, %v1894
  %v1908 = vadd.f32 %v1774, %v1898
  %v1909 = vadd.f32 %v1775, %v1900
  %v1910 = vld [vmem:[#allocation4 + $0x6] sm:$0xff]
  %v1911 = vld [vmem:[#allocation4 + $0xe] sm:$0xff]
  %v1912 = vld [vmem:[#allocation4 + $0x1e] sm:$0xff]
  %v1913 = vld [vmem:[#allocation4 + $0x26] sm:$0xff]
  %s1914 = scalar_lea.vmem %s7, 1536
  %v1915 = vld [vmem:[%s1914] sm:$0xff]
  %v1916 = vld [vmem:[%s1914 + $0x8] sm:$0xff]
  %v1917 = vld [vmem:[%s1914 + $0x10] sm:$0xff]
  %v1918 = vld [vmem:[%s1914 + $0x18] sm:$0xff]
  %v1919 = vld [vmem:[%s1914 + $0x20] sm:$0xff]
  %v1920 = vld [vmem:[%s1914 + $0x28] sm:$0xff]
  %v1921 = vld [vmem:[%s1914 + $0x30] sm:$0xff]
  %v1922 = vld [vmem:[%s1914 + $0x38] sm:$0xff]
  %v1923 = vld [vmem:[%s1914 + $0x40] sm:$0xff]
  %v1924 = vld [vmem:[%s1914 + $0x48] sm:$0xff]
  %v1925 = vld [vmem:[%s1914 + $0x50] sm:$0xff]
  %v1926 = vld [vmem:[%s1914 + $0x58] sm:$0xff]
  %v1927 = vld [vmem:[%s1914 + $0x60] sm:$0xff]
  %v1928 = vld [vmem:[%s1914 + $0x68] sm:$0xff]
  %v1929 = vld [vmem:[%s1914 + $0x70] sm:$0xff]
  %v1930 = vld [vmem:[%s1914 + $0x78] sm:$0xff]
  %v1931 = vld [vmem:[%s1914 + $0x80] sm:$0xff]
  %v1932 = vld [vmem:[%s1914 + $0x88] sm:$0xff]
  %v1933 = vld [vmem:[%s1914 + $0x90] sm:$0xff]
  %v1934 = vld [vmem:[%s1914 + $0x98] sm:$0xff]
  %v1935 = vld [vmem:[%s1914 + $0xa0] sm:$0xff]
  %v1936 = vld [vmem:[%s1914 + $0xa8] sm:$0xff]
  %v1937 = vld [vmem:[%s1914 + $0xb0] sm:$0xff]
  %v1938 = vld [vmem:[%s1914 + $0xb8] sm:$0xff]
  %v1939 = vld [vmem:[%s1914 + $0xc0] sm:$0xff]
  %v1940 = vld [vmem:[%s1914 + $0xc8] sm:$0xff]
  %v1941 = vld [vmem:[%s1914 + $0xd0] sm:$0xff]
  %v1942 = vld [vmem:[%s1914 + $0xd8] sm:$0xff]
  %v1943 = vld [vmem:[%s1914 + $0xe0] sm:$0xff]
  %v1944 = vld [vmem:[%s1914 + $0xe8] sm:$0xff]
  %v1945 = vld [vmem:[%s1914 + $0xf0] sm:$0xff]
  %v1946 = vld [vmem:[%s1914 + $0xf8] sm:$0xff]
  %1947 = vmatprep.subr.mxu0 %v1916
  %1948 = vmatpush1.msra.mxu0 %v1915
  %1949 = vmatprep.subr.mxu0 %v1918
  %1950 = vmatpush1.msra.mxu0 %v1917
  %1951 = vmatprep.subr.mxu0 %v1920
  %1952 = vmatpush1.msra.mxu0 %v1919
  %1953 = vmatprep.subr.mxu0 %v1922
  %1954 = vmatpush1.msra.mxu0 %v1921
  %1955 = vmatprep.subr.mxu0 %v1924
  %1956 = vmatpush1.msra.mxu0 %v1923
  %1957 = vmatprep.subr.mxu0 %v1926
  %1958 = vmatpush1.msra.mxu0 %v1925
  %1959 = vmatprep.subr.mxu0 %v1928
  %1960 = vmatpush1.msra.mxu0 %v1927
  %1961 = vmatprep.subr.mxu0 %v1930
  %1962 = vmatpush1.msra.mxu0 %v1929
  %1963 = vmatprep.subr.mxu0 %v1932
  %1964 = vmatpush1.msra.mxu0 %v1931
  %1965 = vmatprep.subr.mxu0 %v1934
  %1966 = vmatpush1.msra.mxu0 %v1933
  %1967 = vmatprep.subr.mxu0 %v1936
  %1968 = vmatpush1.msra.mxu0 %v1935
  %1969 = vmatprep.subr.mxu0 %v1938
  %1970 = vmatpush1.msra.mxu0 %v1937
  %1971 = vmatprep.subr.mxu0 %v1940
  %1972 = vmatpush1.msra.mxu0 %v1939
  %1973 = vmatprep.subr.mxu0 %v1942
  %1974 = vmatpush1.msra.mxu0 %v1941
  %1975 = vmatprep.subr.mxu0 %v1944
  %1976 = vmatpush1.msra.mxu0 %v1943
  %1977 = vmatprep.subr.mxu0 %v1946
  %1978 = vmatpush1.msra.mxu0 %v1945
  %1979 = vmatprep.subr.mxu0 0.0
  %1980 = vmatpush1.msra.mxu0 0.0
  %1981 = vmatprep.subr.mxu0 0.0
  %1982 = vmatpush1.msra.mxu0 0.0
  %1983 = vmatprep.subr.mxu0 0.0
  %1984 = vmatpush1.msra.mxu0 0.0
  %1985 = vmatprep.subr.mxu0 0.0
  %1986 = vmatpush1.msra.mxu0 0.0
  %1987 = vmatprep.subr.mxu0 0.0
  %1988 = vmatpush1.msra.mxu0 0.0
  %1989 = vmatprep.subr.mxu0 0.0
  %1990 = vmatpush1.msra.mxu0 0.0
  %1991 = vmatprep.subr.mxu0 0.0
  %1992 = vmatpush1.msra.mxu0 0.0
  %1993 = vmatprep.subr.mxu0 0.0
  %1994 = vmatpush1.msra.mxu0 0.0
  %1995 = vmatprep.subr.mxu0 0.0
  %1996 = vmatpush1.msra.mxu0 0.0
  %1997 = vmatprep.subr.mxu0 0.0
  %1998 = vmatpush1.msra.mxu0 0.0
  %1999 = vmatprep.subr.mxu0 0.0
  %2000 = vmatpush1.msra.mxu0 0.0
  %2001 = vmatprep.subr.mxu0 0.0
  %2002 = vmatpush1.msra.mxu0 0.0
  %2003 = vmatprep.subr.mxu0 0.0
  %2004 = vmatpush1.msra.mxu0 0.0
  %2005 = vmatprep.subr.mxu0 0.0
  %2006 = vmatpush1.msra.mxu0 0.0
  %2007 = vmatprep.subr.mxu0 0.0
  %2008 = vmatpush1.msra.mxu0 0.0
  %2009 = vmatprep.subr.mxu0 0.0
  %2010 = vmatpush1.msra.mxu0 0.0
  %2011 = vmatprep.mubr.f32.mxu0 0.0
  %2012 = vmatmul.mubr.f32.gmra.mrb[0].mxu0 %v1910
  %v2013 = vpop.f32.mrb[0].mxu0
  %v2014 = vadd.f32 0.0, %v2013
  %v2015 = vpop.f32.mrb[0].mxu0
  %v2016 = vadd.f32 0.0, %v2015
  %2017 = vmatprep.mubr.f32.mxu0 0.0
  %2018 = vmatmul.mubr.f32.gmra.mrb[0].mxu0 %v1911
  %v2019 = vpop.f32.mrb[0].mxu0
  %v2020 = vadd.f32 0.0, %v2019
  %v2021 = vpop.f32.mrb[0].mxu0
  %v2022 = vadd.f32 0.0, %v2021
  %2023 = vmatprep.mubr.f32.mxu0 0.0
  %2024 = vmatmul.mubr.f32.gmra.mrb[0].mxu0 %v1912
  %v2025 = vpop.f32.mrb[0].mxu0
  %v2026 = vadd.f32 0.0, %v2025
  %v2027 = vpop.f32.mrb[0].mxu0
  %v2028 = vadd.f32 0.0, %v2027
  %2029 = vmatprep.mubr.f32.mxu0 0.0
  %2030 = vmatmul.mubr.f32.gmra.mrb[0].mxu0 %v1913
  %v2031 = vpop.f32.mrb[0].mxu0
  %v2032 = vadd.f32 0.0, %v2031
  %v2033 = vpop.f32.mrb[0].mxu0
  %v2034 = vadd.f32 0.0, %v2033
  %2035 = vdwg.mxu0
  %v2036 = vadd.f32 %v1902, %v2014
  %v2037 = vadd.f32 %v1903, %v2016
  %v2038 = vadd.f32 %v1904, %v2020
  %v2039 = vadd.f32 %v1905, %v2022
  %v2040 = vadd.f32 %v1906, %v2026
  %v2041 = vadd.f32 %v1907, %v2028
  %v2042 = vadd.f32 %v1908, %v2032
  %v2043 = vadd.f32 %v1909, %v2034
  %v2044 = vld [vmem:[%s8] sm:$0x3]
  %v2046 = vlaneseq
  %v2047 = vshrl.u32 %v2046, 7
  %v2048 = vsub.s32 0, %v2047
  %v2049 = vrot.slane %v2044, %v2048
  %v2050 = vlaneseq
  %v2051 = vshrl.u32 %v2050, 7
  %v2052 = vsub.s32 1, %v2051
  %v2053 = vrot.slane %v2044, %v2052
  %v2056 = vadd.f32 %v2036, %v2049
  %v2057 = vadd.f32 %v2037, %v2053
  %v2058 = vadd.f32 %v2038, %v2049
  %v2059 = vadd.f32 %v2039, %v2053
  %v2060 = vadd.f32 %v2040, %v2049
  %v2061 = vadd.f32 %v2041, %v2053
  %v2062 = vadd.f32 %v2042, %v2049
  %v2063 = vadd.f32 %v2043, %v2053
  %v2064 = vmax.f32 %v2056, 0.0
  %v2065 = vmax.f32 %v2057, 0.0
  %v2066 = vmax.f32 %v2058, 0.0
  %v2067 = vmax.f32 %v2059, 0.0
  %v2068 = vmax.f32 %v2060, 0.0
  %v2069 = vmax.f32 %v2061, 0.0
  %v2070 = vmax.f32 %v2062, 0.0
  %v2071 = vmax.f32 %v2063, 0.0
  %v2072 = vadd.f32 %v2064, %v2066
  %v2073 = vrot.slane %v2072, 4
  %v2074 = vadd.f32 %v2072, %v2073
  %v2075 = vrot.slane %v2074, 2
  %v2076 = vadd.f32 %v2074, %v2075
  %v2077 = vrot.slane %v2076, 1
  %v2078 = vadd.f32 %v2076, %v2077
  %v2079 = vadd.f32 %v2065, %v2067
  %v2080 = vrot.slane %v2079, 4
  %v2081 = vadd.f32 %v2079, %v2080
  %v2082 = vrot.slane %v2081, 2
  %v2083 = vadd.f32 %v2081, %v2082
  %v2084 = vrot.slane %v2083, 1
  %v2085 = vadd.f32 %v2083, %v2084
  %v2086 = vadd.f32 %v2068, %v2070
  %v2087 = vrot.slane %v2086, 4
  %v2088 = vadd.f32 %v2086, %v2087
  %v2089 = vrot.slane %v2088, 2
  %v2090 = vadd.f32 %v2088, %v2089
  %v2091 = vrot.slane %v2090, 1
  %v2092 = vadd.f32 %v2090, %v2091
  %v2093 = vadd.f32 %v2069, %v2071
  %v2094 = vrot.slane %v2093, 4
  %v2095 = vadd.f32 %v2093, %v2094
  %v2096 = vrot.slane %v2095, 2
  %v2097 = vadd.f32 %v2095, %v2096
  %v2098 = vrot.slane %v2097, 1
  %v2099 = vadd.f32 %v2097, %v2098
  %v2100 = vrcp.pop 16.0
  %v2101 = vmul.f32 %v2078, %v2100
  %v2102 = vmul.f32 %v2085, %v2100
  %v2103 = vmul.f32 %v2092, %v2100
  %v2104 = vmul.f32 %v2099, %v2100
  %v2105 = vld [vmem:[%s1] sm:$0xff]
  %v2106 = vld [vmem:[%s1 + $0x8] sm:$0xf]
  %v2107 = vld [vmem:[%s9] sm:$0xff]
  %v2108 = vld [vmem:[%s9 + $0x8] sm:$0xff]
  %v2109 = vld [vmem:[%s9 + $0x10] sm:$0xff]
  %v2110 = vld [vmem:[%s9 + $0x18] sm:$0xff]
  %v2111 = vld [vmem:[%s9 + $0x20] sm:$0xff]
  %v2112 = vld [vmem:[%s9 + $0x28] sm:$0xff]
  %v2113 = vld [vmem:[%s9 + $0x30] sm:$0xff]
  %v2114 = vld [vmem:[%s9 + $0x38] sm:$0xff]
  %v2115 = vld [vmem:[%s9 + $0x40] sm:$0xff]
  %v2116 = vld [vmem:[%s9 + $0x48] sm:$0xff]
  %v2117 = vld [vmem:[%s9 + $0x50] sm:$0xff]
  %v2118 = vld [vmem:[%s9 + $0x58] sm:$0xff]
  %v2119 = vld [vmem:[%s9 + $0x60] sm:$0xff]
  %v2120 = vld [vmem:[%s9 + $0x68] sm:$0xff]
  %v2121 = vld [vmem:[%s9 + $0x70] sm:$0xff]
  %v2122 = vld [vmem:[%s9 + $0x78] sm:$0xff]
  %v2123 = vld [vmem:[%s9 + $0x80] sm:$0xff]
  %v2124 = vld [vmem:[%s9 + $0x88] sm:$0xff]
  %v2125 = vld [vmem:[%s9 + $0x90] sm:$0xff]
  %v2126 = vld [vmem:[%s9 + $0x98] sm:$0xff]
  %v2127 = vld [vmem:[%s9 + $0xa0] sm:$0xff]
  %v2128 = vld [vmem:[%s9 + $0xa8] sm:$0xff]
  %v2129 = vld [vmem:[%s9 + $0xb0] sm:$0xff]
  %v2130 = vld [vmem:[%s9 + $0xb8] sm:$0xff]
  %v2131 = vld [vmem:[%s9 + $0xc0] sm:$0xff]
  %v2132 = vld [vmem:[%s9 + $0xc8] sm:$0xff]
  %v2133 = vld [vmem:[%s9 + $0xd0] sm:$0xff]
  %v2134 = vld [vmem:[%s9 + $0xd8] sm:$0xff]
  %v2135 = vld [vmem:[%s9 + $0xe0] sm:$0xff]
  %v2136 = vld [vmem:[%s9 + $0xe8] sm:$0xff]
  %v2137 = vld [vmem:[%s9 + $0xf0] sm:$0xff]
  %v2138 = vld [vmem:[%s9 + $0xf8] sm:$0xff]
  %v2139 = vld [vmem:[%s10] sm:$0xff]
  %v2140 = vld [vmem:[%s10 + $0x8] sm:$0xff]
  %v2141 = vld [vmem:[%s10 + $0x10] sm:$0xff]
  %v2142 = vld [vmem:[%s10 + $0x18] sm:$0xff]
  %v2143 = vld [vmem:[%s10 + $0x20] sm:$0xff]
  %v2144 = vld [vmem:[%s10 + $0x28] sm:$0xff]
  %v2145 = vld [vmem:[%s10 + $0x30] sm:$0xff]
  %v2146 = vld [vmem:[%s10 + $0x38] sm:$0xff]
  %v2147 = vld [vmem:[%s10 + $0x40] sm:$0xff]
  %v2148 = vld [vmem:[%s10 + $0x48] sm:$0xff]
  %v2149 = vld [vmem:[%s10 + $0x50] sm:$0xff]
  %v2150 = vld [vmem:[%s10 + $0x58] sm:$0xff]
  %v2151 = vld [vmem:[%s10 + $0x60] sm:$0xff]
  %v2152 = vld [vmem:[%s10 + $0x68] sm:$0xff]
  %v2153 = vld [vmem:[%s10 + $0x70] sm:$0xff]
  %v2154 = vld [vmem:[%s10 + $0x78] sm:$0xff]
  %v2155 = vld [vmem:[%s10 + $0x80] sm:$0xff]
  %v2156 = vld [vmem:[%s10 + $0x88] sm:$0xff]
  %v2157 = vld [vmem:[%s10 + $0x90] sm:$0xff]
  %v2158 = vld [vmem:[%s10 + $0x98] sm:$0xff]
  %v2159 = vld [vmem:[%s10 + $0xa0] sm:$0xff]
  %v2160 = vld [vmem:[%s10 + $0xa8] sm:$0xff]
  %v2161 = vld [vmem:[%s10 + $0xb0] sm:$0xff]
  %v2162 = vld [vmem:[%s10 + $0xb8] sm:$0xff]
  %v2163 = vld [vmem:[%s10 + $0xc0] sm:$0xff]
  %v2164 = vld [vmem:[%s10 + $0xc8] sm:$0xff]
  %v2165 = vld [vmem:[%s10 + $0xd0] sm:$0xff]
  %v2166 = vld [vmem:[%s10 + $0xd8] sm:$0xff]
  %v2167 = vld [vmem:[%s10 + $0xe0] sm:$0xff]
  %v2168 = vld [vmem:[%s10 + $0xe8] sm:$0xff]
  %v2169 = vld [vmem:[%s10 + $0xf0] sm:$0xff]
  %v2170 = vld [vmem:[%s10 + $0xf8] sm:$0xff]
  %v2171 = vld [vmem:[%s10 + $0x100] sm:$0xff]
  %v2172 = vld [vmem:[%s10 + $0x108] sm:$0xff]
  %v2173 = vld [vmem:[%s10 + $0x110] sm:$0xff]
  %v2174 = vld [vmem:[%s10 + $0x118] sm:$0xff]
  %v2175 = vld [vmem:[%s10 + $0x120] sm:$0xff]
  %v2176 = vld [vmem:[%s10 + $0x128] sm:$0xff]
  %v2177 = vld [vmem:[%s10 + $0x130] sm:$0xff]
  %v2178 = vld [vmem:[%s10 + $0x138] sm:$0xff]
  %v2179 = vld [vmem:[%s10 + $0x140] sm:$0xff]
  %v2180 = vld [vmem:[%s10 + $0x148] sm:$0xff]
  %v2181 = vld [vmem:[%s10 + $0x150] sm:$0xff]
  %v2182 = vld [vmem:[%s10 + $0x158] sm:$0xff]
  %v2183 = vld [vmem:[%s10 + $0x160] sm:$0xff]
  %v2184 = vld [vmem:[%s10 + $0x168] sm:$0xff]
  %v2185 = vld [vmem:[%s10 + $0x170] sm:$0xff]
  %v2186 = vld [vmem:[%s10 + $0x178] sm:$0xff]
  %v2187 = vld [vmem:[%s10 + $0x180] sm:$0xff]
  %v2188 = vld [vmem:[%s10 + $0x188] sm:$0xff]
  %v2189 = vld [vmem:[%s10 + $0x190] sm:$0xff]
  %v2190 = vld [vmem:[%s10 + $0x198] sm:$0xff]
  %v2191 = vld [vmem:[%s10 + $0x1a0] sm:$0xff]
  %v2192 = vld [vmem:[%s10 + $0x1a8] sm:$0xff]
  %v2193 = vld [vmem:[%s10 + $0x1b0] sm:$0xff]
  %v2194 = vld [vmem:[%s10 + $0x1b8] sm:$0xff]
  %v2195 = vld [vmem:[%s10 + $0x1c0] sm:$0xff]
  %v2196 = vld [vmem:[%s10 + $0x1c8] sm:$0xff]
  %v2197 = vld [vmem:[%s10 + $0x1d0] sm:$0xff]
  %v2198 = vld [vmem:[%s10 + $0x1d8] sm:$0xff]
  %v2199 = vld [vmem:[%s10 + $0x1e0] sm:$0xff]
  %v2200 = vld [vmem:[%s10 + $0x1e8] sm:$0xff]
  %v2201 = vld [vmem:[%s10 + $0x1f0] sm:$0xff]
  %v2202 = vld [vmem:[%s10 + $0x1f8] sm:$0xff]
  %v2203 = vld [vmem:[%s10 + $0x200] sm:$0xff]
  %v2204 = vld [vmem:[%s10 + $0x208] sm:$0xff]
  %v2205 = vld [vmem:[%s10 + $0x210] sm:$0xff]
  %v2206 = vld [vmem:[%s10 + $0x218] sm:$0xff]
  %v2207 = vld [vmem:[%s10 + $0x220] sm:$0xff]
  %v2208 = vld [vmem:[%s10 + $0x228] sm:$0xff]
  %v2209 = vld [vmem:[%s10 + $0x230] sm:$0xff]
  %v2210 = vld [vmem:[%s10 + $0x238] sm:$0xff]
  %v2211 = vld [vmem:[%s10 + $0x240] sm:$0xff]
  %v2212 = vld [vmem:[%s10 + $0x248] sm:$0xff]
  %v2213 = vld [vmem:[%s10 + $0x250] sm:$0xff]
  %v2214 = vld [vmem:[%s10 + $0x258] sm:$0xff]
  %v2215 = vld [vmem:[%s10 + $0x260] sm:$0xff]
  %v2216 = vld [vmem:[%s10 + $0x268] sm:$0xff]
  %v2217 = vld [vmem:[%s10 + $0x270] sm:$0xff]
  %v2218 = vld [vmem:[%s10 + $0x278] sm:$0xff]
  %v2219 = vld [vmem:[%s10 + $0x280] sm:$0xff]
  %v2220 = vld [vmem:[%s10 + $0x288] sm:$0xff]
  %v2221 = vld [vmem:[%s10 + $0x290] sm:$0xff]
  %v2222 = vld [vmem:[%s10 + $0x298] sm:$0xff]
  %v2223 = vld [vmem:[%s10 + $0x2a0] sm:$0xff]
  %v2224 = vld [vmem:[%s10 + $0x2a8] sm:$0xff]
  %v2225 = vld [vmem:[%s10 + $0x2b0] sm:$0xff]
  %v2226 = vld [vmem:[%s10 + $0x2b8] sm:$0xff]
  %v2227 = vld [vmem:[%s10 + $0x2c0] sm:$0xff]
  %v2228 = vld [vmem:[%s10 + $0x2c8] sm:$0xff]
  %v2229 = vld [vmem:[%s10 + $0x2d0] sm:$0xff]
  %v2230 = vld [vmem:[%s10 + $0x2d8] sm:$0xff]
  %v2231 = vld [vmem:[%s10 + $0x2e0] sm:$0xff]
  %v2232 = vld [vmem:[%s10 + $0x2e8] sm:$0xff]
  %v2233 = vld [vmem:[%s10 + $0x2f0] sm:$0xff]
  %v2234 = vld [vmem:[%s10 + $0x2f8] sm:$0xff]
  %v2237 = vcombine.high %v2105, %v2105
  %v2239 = vunpack.c.l.s4 1983009808
  %v2240 = vunpack.c.0.s8 %v2239
  %v2241 = vlaneseq
  %v2242 = vshrl.u32 %v2241, 7
  %v2243 = vsub.s32 %v2240, %v2242
  %v2244 = vrot.slane %v2105, %v2243
  %v2246 = vunpack.c.l.s4 1983009808
  %v2247 = vunpack.c.0.s8 %v2246
  %v2248 = vlaneseq
  %v2249 = vshrl.u32 %v2248, 7
  %v2250 = vsub.s32 %v2247, %v2249
  %v2251 = vrot.slane %v2237, %v2250
  %v2252 = vcombine.high %v2244, %v2244
  %v2253 = vcombine.high %v2251, %v2251
  %v2255 = vunpack.c.l.s4 1983009808
  %v2256 = vunpack.c.0.s8 %v2255
  %v2257 = vlaneseq
  %v2258 = vshrl.u32 %v2257, 7
  %v2259 = vsub.s32 %v2256, %v2258
  %v2260 = vrot.slane %v2106, %v2259
  %v2261 = vcombine.high %v2260, %v2260
  %2268 = vmatprep.subr.mxu0 0.0
  %2269 = vmatpush1.msra.mxu0 %v2139
  %2270 = vmatprep.subr.mxu0 0.0
  %2271 = vmatpush1.msra.mxu0 %v2140
  %2272 = vmatprep.subr.mxu0 0.0
  %2273 = vmatpush1.msra.mxu0 %v2141
  %2274 = vmatprep.subr.mxu0 0.0
  %2275 = vmatpush1.msra.mxu0 %v2142
  %2276 = vmatprep.subr.mxu0 0.0
  %2277 = vmatpush1.msra.mxu0 %v2143
  %2278 = vmatprep.subr.mxu0 0.0
  %2279 = vmatpush1.msra.mxu0 %v2144
  %2280 = vmatprep.subr.mxu0 0.0
  %2281 = vmatpush1.msra.mxu0 %v2145
  %2282 = vmatprep.subr.mxu0 0.0
  %2283 = vmatpush1.msra.mxu0 %v2146
  %2284 = vmatprep.subr.mxu0 0.0
  %2285 = vmatpush1.msra.mxu0 %v2147
  %2286 = vmatprep.subr.mxu0 0.0
  %2287 = vmatpush1.msra.mxu0 %v2148
  %2288 = vmatprep.subr.mxu0 0.0
  %2289 = vmatpush1.msra.mxu0 %v2149
  %2290 = vmatprep.subr.mxu0 0.0
  %2291 = vmatpush1.msra.mxu0 %v2150
  %2292 = vmatprep.subr.mxu0 0.0
  %2293 = vmatpush1.msra.mxu0 %v2151
  %2294 = vmatprep.subr.mxu0 0.0
  %2295 = vmatpush1.msra.mxu0 %v2152
  %2296 = vmatprep.subr.mxu0 0.0
  %2297 = vmatpush1.msra.mxu0 %v2153
  %2298 = vmatprep.subr.mxu0 0.0
  %2299 = vmatpush1.msra.mxu0 %v2154
  %2300 = vmatprep.subr.mxu0 0.0
  %2301 = vmatpush1.msra.mxu0 %v2155
  %2302 = vmatprep.subr.mxu0 0.0
  %2303 = vmatpush1.msra.mxu0 %v2156
  %2304 = vmatprep.subr.mxu0 0.0
  %2305 = vmatpush1.msra.mxu0 %v2157
  %2306 = vmatprep.subr.mxu0 0.0
  %2307 = vmatpush1.msra.mxu0 %v2158
  %2308 = vmatprep.subr.mxu0 0.0
  %2309 = vmatpush1.msra.mxu0 %v2159
  %2310 = vmatprep.subr.mxu0 0.0
  %2311 = vmatpush1.msra.mxu0 %v2160
  %2312 = vmatprep.subr.mxu0 0.0
  %2313 = vmatpush1.msra.mxu0 %v2161
  %2314 = vmatprep.subr.mxu0 0.0
  %2315 = vmatpush1.msra.mxu0 %v2162
  %2316 = vmatprep.subr.mxu0 0.0
  %2317 = vmatpush1.msra.mxu0 %v2163
  %2318 = vmatprep.subr.mxu0 0.0
  %2319 = vmatpush1.msra.mxu0 %v2164
  %2320 = vmatprep.subr.mxu0 0.0
  %2321 = vmatpush1.msra.mxu0 %v2165
  %2322 = vmatprep.subr.mxu0 0.0
  %2323 = vmatpush1.msra.mxu0 %v2166
  %2324 = vmatprep.subr.mxu0 0.0
  %2325 = vmatpush1.msra.mxu0 %v2167
  %2326 = vmatprep.subr.mxu0 0.0
  %2327 = vmatpush1.msra.mxu0 %v2168
  %2328 = vmatprep.subr.mxu0 0.0
  %2329 = vmatpush1.msra.mxu0 %v2169
  %2330 = vmatprep.subr.mxu0 0.0
  %2331 = vmatpush1.msra.mxu0 %v2170
  %2332 = vmatprep.mubr.f32.mxu0 %v2252
  %2333 = vmatmul.mubr.f32.gmra.mrb[0].mxu0 %v2244
  %v2334 = vpop.f32.mrb[0].mxu0
  %v2335 = vadd.f32 0.0, %v2334
  %v2336 = vpop.f32.mrb[0].mxu0
  %2337 = vdwg.mxu0
  %2338 = vmatprep.subr.mxu0 0.0
  %2339 = vmatpush1.msra.mxu0 %v2171
  %2340 = vmatprep.subr.mxu0 0.0
  %2341 = vmatpush1.msra.mxu0 %v2172
  %2342 = vmatprep.subr.mxu0 0.0
  %2343 = vmatpush1.msra.mxu0 %v2173
  %2344 = vmatprep.subr.mxu0 0.0
  %2345 = vmatpush1.msra.mxu0 %v2174
  %2346 = vmatprep.subr.mxu0 0.0
  %2347 = vmatpush1.msra.mxu0 %v2175
  %2348 = vmatprep.subr.mxu0 0.0
  %2349 = vmatpush1.msra.mxu0 %v2176
  %2350 = vmatprep.subr.mxu0 0.0
  %2351 = vmatpush1.msra.mxu0 %v2177
  %2352 = vmatprep.subr.mxu0 0.0
  %2353 = vmatpush1.msra.mxu0 %v2178
  %2354 = vmatprep.subr.mxu0 0.0
  %2355 = vmatpush1.msra.mxu0 %v2179
  %2356 = vmatprep.subr.mxu0 0.0
  %2357 = vmatpush1.msra.mxu0 %v2180
  %2358 = vmatprep.subr.mxu0 0.0
  %2359 = vmatpush1.msra.mxu0 %v2181
  %2360 = vmatprep.subr.mxu0 0.0
  %2361 = vmatpush1.msra.mxu0 %v2182
  %2362 = vmatprep.subr.mxu0 0.0
  %2363 = vmatpush1.msra.mxu0 %v2183
  %2364 = vmatprep.subr.mxu0 0.0
  %2365 = vmatpush1.msra.mxu0 %v2184
  %2366 = vmatprep.subr.mxu0 0.0
  %2367 = vmatpush1.msra.mxu0 %v2185
  %2368 = vmatprep.subr.mxu0 0.0
  %2369 = vmatpush1.msra.mxu0 %v2186
  %2370 = vmatprep.subr.mxu0 0.0
  %2371 = vmatpush1.msra.mxu0 %v2187
  %2372 = vmatprep.subr.mxu0 0.0
  %2373 = vmatpush1.msra.mxu0 %v2188
  %2374 = vmatprep.subr.mxu0 0.0
  %2375 = vmatpush1.msra.mxu0 %v2189
  %2376 = vmatprep.subr.mxu0 0.0
  %2377 = vmatpush1.msra.mxu0 %v2190
  %2378 = vmatprep.subr.mxu0 0.0
  %2379 = vmatpush1.msra.mxu0 %v2191
  %2380 = vmatprep.subr.mxu0 0.0
  %2381 = vmatpush1.msra.mxu0 %v2192
  %2382 = vmatprep.subr.mxu0 0.0
  %2383 = vmatpush1.msra.mxu0 %v2193
  %2384 = vmatprep.subr.mxu0 0.0
  %2385 = vmatpush1.msra.mxu0 %v2194
  %2386 = vmatprep.subr.mxu0 0.0
  %2387 = vmatpush1.msra.mxu0 %v2195
  %2388 = vmatprep.subr.mxu0 0.0
  %2389 = vmatpush1.msra.mxu0 %v2196
  %2390 = vmatprep.subr.mxu0 0.0
  %2391 = vmatpush1.msra.mxu0 %v2197
  %2392 = vmatprep.subr.mxu0 0.0
  %2393 = vmatpush1.msra.mxu0 %v2198
  %2394 = vmatprep.subr.mxu0 0.0
  %2395 = vmatpush1.msra.mxu0 %v2199
  %2396 = vmatprep.subr.mxu0 0.0
  %2397 = vmatpush1.msra.mxu0 %v2200
  %2398 = vmatprep.subr.mxu0 0.0
  %2399 = vmatpush1.msra.mxu0 %v2201
  %2400 = vmatprep.subr.mxu0 0.0
  %2401 = vmatpush1.msra.mxu0 %v2202
  %2402 = vmatprep.mubr.f32.mxu0 %v2253
  %2403 = vmatmul.mubr.f32.gmra.mrb[0].mxu0 %v2251
  %v2404 = vpop.f32.mrb[0].mxu0
  %v2405 = vadd.f32 %v2335, %v2404
  %v2406 = vpop.f32.mrb[0].mxu0
  %2407 = vdwg.mxu0
  %2408 = vmatprep.subr.mxu0 0.0
  %2409 = vmatpush1.msra.mxu0 %v2203
  %2410 = vmatprep.subr.mxu0 0.0
  %2411 = vmatpush1.msra.mxu0 %v2204
  %2412 = vmatprep.subr.mxu0 0.0
  %2413 = vmatpush1.msra.mxu0 %v2205
  %2414 = vmatprep.subr.mxu0 0.0
  %2415 = vmatpush1.msra.mxu0 %v2206
  %2416 = vmatprep.subr.mxu0 0.0
  %2417 = vmatpush1.msra.mxu0 %v2207
  %2418 = vmatprep.subr.mxu0 0.0
  %2419 = vmatpush1.msra.mxu0 %v2208
  %2420 = vmatprep.subr.mxu0 0.0
  %2421 = vmatpush1.msra.mxu0 %v2209
  %2422 = vmatprep.subr.mxu0 0.0
  %2423 = vmatpush1.msra.mxu0 %v2210
  %2424 = vmatprep.subr.mxu0 0.0
  %2425 = vmatpush1.msra.mxu0 %v2211
  %2426 = vmatprep.subr.mxu0 0.0
  %2427 = vmatpush1.msra.mxu0 %v2212
  %2428 = vmatprep.subr.mxu0 0.0
  %2429 = vmatpush1.msra.mxu0 %v2213
  %2430 = vmatprep.subr.mxu0 0.0
  %2431 = vmatpush1.msra.mxu0 %v2214
  %2432 = vmatprep.subr.mxu0 0.0
  %2433 = vmatpush1.msra.mxu0 %v2215
  %2434 = vmatprep.subr.mxu0 0.0
  %2435 = vmatpush1.msra.mxu0 %v2216
  %2436 = vmatprep.subr.mxu0 0.0
  %2437 = vmatpush1.msra.mxu0 %v2217
  %2438 = vmatprep.subr.mxu0 0.0
  %2439 = vmatpush1.msra.mxu0 %v2218
  %2440 = vmatprep.subr.mxu0 0.0
  %2441 = vmatpush1.msra.mxu0 %v2219
  %2442 = vmatprep.subr.mxu0 0.0
  %2443 = vmatpush1.msra.mxu0 %v2220
  %2444 = vmatprep.subr.mxu0 0.0
  %2445 = vmatpush1.msra.mxu0 %v2221
  %2446 = vmatprep.subr.mxu0 0.0
  %2447 = vmatpush1.msra.mxu0 %v2222
  %2448 = vmatprep.subr.mxu0 0.0
  %2449 = vmatpush1.msra.mxu0 %v2223
  %2450 = vmatprep.subr.mxu0 0.0
  %2451 = vmatpush1.msra.mxu0 %v2224
  %2452 = vmatprep.subr.mxu0 0.0
  %2453 = vmatpush1.msra.mxu0 %v2225
  %2454 = vmatprep.subr.mxu0 0.0
  %2455 = vmatpush1.msra.mxu0 %v2226
  %2456 = vmatprep.subr.mxu0 0.0
  %2457 = vmatpush1.msra.mxu0 %v2227
  %2458 = vmatprep.subr.mxu0 0.0
  %2459 = vmatpush1.msra.mxu0 %v2228
  %2460 = vmatprep.subr.mxu0 0.0
  %2461 = vmatpush1.msra.mxu0 %v2229
  %2462 = vmatprep.subr.mxu0 0.0
  %2463 = vmatpush1.msra.mxu0 %v2230
  %2464 = vmatprep.subr.mxu0 0.0
  %2465 = vmatpush1.msra.mxu0 %v2231
  %2466 = vmatprep.subr.mxu0 0.0
  %2467 = vmatpush1.msra.mxu0 %v2232
  %2468 = vmatprep.subr.mxu0 0.0
  %2469 = vmatpush1.msra.mxu0 %v2233
  %2470 = vmatprep.subr.mxu0 0.0
  %2471 = vmatpush1.msra.mxu0 %v2234
  %2472 = vmatprep.mubr.f32.mxu0 %v2261
  %2473 = vmatmul.mubr.f32.gmra.mrb[0].mxu0 %v2260
  %v2474 = vpop.f32.mrb[0].mxu0
  %v2475 = vadd.f32 %v2405, %v2474
  %v2476 = vpop.f32.mrb[0].mxu0
  %2477 = vdwg.mxu0
  %vm2482 = vcmask 1041409
  %v2483 = vsel %vm2482, %v2103, %v2101
  %v2484 = vsel %vm2482, %v2104, %v2102
  %2487 = vmatprep.subr.mxu0 0.0
  %2488 = vmatpush1.msra.mxu0 %v2107
  %2489 = vmatprep.subr.mxu0 0.0
  %2490 = vmatpush1.msra.mxu0 %v2108
  %2491 = vmatprep.subr.mxu0 0.0
  %2492 = vmatpush1.msra.mxu0 %v2109
  %2493 = vmatprep.subr.mxu0 0.0
  %2494 = vmatpush1.msra.mxu0 %v2110
  %2495 = vmatprep.subr.mxu0 0.0
  %2496 = vmatpush1.msra.mxu0 %v2111
  %2497 = vmatprep.subr.mxu0 0.0
  %2498 = vmatpush1.msra.mxu0 %v2112
  %2499 = vmatprep.subr.mxu0 0.0
  %2500 = vmatpush1.msra.mxu0 %v2113
  %2501 = vmatprep.subr.mxu0 0.0
  %2502 = vmatpush1.msra.mxu0 %v2114
  %2503 = vmatprep.subr.mxu0 0.0
  %2504 = vmatpush1.msra.mxu0 %v2115
  %2505 = vmatprep.subr.mxu0 0.0
  %2506 = vmatpush1.msra.mxu0 %v2116
  %2507 = vmatprep.subr.mxu0 0.0
  %2508 = vmatpush1.msra.mxu0 %v2117
  %2509 = vmatprep.subr.mxu0 0.0
  %2510 = vmatpush1.msra.mxu0 %v2118
  %2511 = vmatprep.subr.mxu0 0.0
  %2512 = vmatpush1.msra.mxu0 %v2119
  %2513 = vmatprep.subr.mxu0 0.0
  %2514 = vmatpush1.msra.mxu0 %v2120
  %2515 = vmatprep.subr.mxu0 0.0
  %2516 = vmatpush1.msra.mxu0 %v2121
  %2517 = vmatprep.subr.mxu0 0.0
  %2518 = vmatpush1.msra.mxu0 %v2122
  %2519 = vmatprep.subr.mxu0 0.0
  %2520 = vmatpush1.msra.mxu0 %v2123
  %2521 = vmatprep.subr.mxu0 0.0
  %2522 = vmatpush1.msra.mxu0 %v2124
  %2523 = vmatprep.subr.mxu0 0.0
  %2524 = vmatpush1.msra.mxu0 %v2125
  %2525 = vmatprep.subr.mxu0 0.0
  %2526 = vmatpush1.msra.mxu0 %v2126
  %2527 = vmatprep.subr.mxu0 0.0
  %2528 = vmatpush1.msra.mxu0 %v2127
  %2529 = vmatprep.subr.mxu0 0.0
  %2530 = vmatpush1.msra.mxu0 %v2128
  %2531 = vmatprep.subr.mxu0 0.0
  %2532 = vmatpush1.msra.mxu0 %v2129
  %2533 = vmatprep.subr.mxu0 0.0
  %2534 = vmatpush1.msra.mxu0 %v2130
  %2535 = vmatprep.subr.mxu0 0.0
  %2536 = vmatpush1.msra.mxu0 %v2131
  %2537 = vmatprep.subr.mxu0 0.0
  %2538 = vmatpush1.msra.mxu0 %v2132
  %2539 = vmatprep.subr.mxu0 0.0
  %2540 = vmatpush1.msra.mxu0 %v2133
  %2541 = vmatprep.subr.mxu0 0.0
  %2542 = vmatpush1.msra.mxu0 %v2134
  %2543 = vmatprep.subr.mxu0 0.0
  %2544 = vmatpush1.msra.mxu0 %v2135
  %2545 = vmatprep.subr.mxu0 0.0
  %2546 = vmatpush1.msra.mxu0 %v2136
  %2547 = vmatprep.subr.mxu0 0.0
  %2548 = vmatpush1.msra.mxu0 %v2137
  %2549 = vmatprep.subr.mxu0 0.0
  %2550 = vmatpush1.msra.mxu0 %v2138
  %2551 = vmatprep.mubr.f32.mxu0 %v2484
  %2552 = vmatmul.mubr.f32.gmra.mrb[0].mxu0 %v2483
  %v2553 = vpop.f32.mrb[0].mxu0
  %v2554 = vadd.f32 %v2475, %v2553
  %v2555 = vpop.f32.mrb[0].mxu0
  %2556 = vdwg.mxu0
  %v2557 = vld [vmem:[%s11] sm:$0x1]
  %v2559 = vlaneseq
  %v2560 = vshrl.u32 %v2559, 7
  %v2561 = vsub.s32 0, %v2560
  %v2562 = vrot.slane %v2557, %v2561
  %v2564 = vadd.f32 %v2554, %v2562
  %v2565 = vmax.f32 %v2564, 0.0
  %v2566 = vld [vmem:[%s12] sm:$0xff]
  %v2567 = vld [vmem:[%s12 + $0x8] sm:$0xff]
  %v2568 = vld [vmem:[%s12 + $0x10] sm:$0xff]
  %v2569 = vld [vmem:[%s12 + $0x18] sm:$0xff]
  %v2570 = vld [vmem:[%s12 + $0x20] sm:$0xff]
  %v2571 = vld [vmem:[%s12 + $0x28] sm:$0xff]
  %v2572 = vld [vmem:[%s12 + $0x30] sm:$0xff]
  %v2573 = vld [vmem:[%s12 + $0x38] sm:$0xff]
  %v2574 = vld [vmem:[%s12 + $0x40] sm:$0xff]
  %v2575 = vld [vmem:[%s12 + $0x48] sm:$0xff]
  %v2576 = vld [vmem:[%s12 + $0x50] sm:$0xff]
  %v2577 = vld [vmem:[%s12 + $0x58] sm:$0xff]
  %v2578 = vld [vmem:[%s12 + $0x60] sm:$0xff]
  %v2579 = vld [vmem:[%s12 + $0x68] sm:$0xff]
  %v2580 = vld [vmem:[%s12 + $0x70] sm:$0xff]
  %v2581 = vld [vmem:[%s12 + $0x78] sm:$0xff]
  %v2582 = vld [vmem:[%s13] sm:$0x1]
  %v2584 = vlaneseq
  %v2585 = vshrl.u32 %v2584, 7
  %v2586 = vsub.s32 0, %v2585
  %v2587 = vrot.slane %v2582, %v2586
  %2589 = vmatprep.subr.mxu0 0.0
  %2590 = vmatpush1.msra.mxu0 %v2566
  %2591 = vmatprep.subr.mxu0 0.0
  %2592 = vmatpush1.msra.mxu0 %v2567
  %2593 = vmatprep.subr.mxu0 0.0
  %2594 = vmatpush1.msra.mxu0 %v2568
  %2595 = vmatprep.subr.mxu0 0.0
  %2596 = vmatpush1.msra.mxu0 %v2569
  %2597 = vmatprep.subr.mxu0 0.0
  %2598 = vmatpush1.msra.mxu0 %v2570
  %2599 = vmatprep.subr.mxu0 0.0
  %2600 = vmatpush1.msra.mxu0 %v2571
  %2601 = vmatprep.subr.mxu0 0.0
  %2602 = vmatpush1.msra.mxu0 %v2572
  %2603 = vmatprep.subr.mxu0 0.0
  %2604 = vmatpush1.msra.mxu0 %v2573
  %2605 = vmatprep.subr.mxu0 0.0
  %2606 = vmatpush1.msra.mxu0 %v2574
  %2607 = vmatprep.subr.mxu0 0.0
  %2608 = vmatpush1.msra.mxu0 %v2575
  %2609 = vmatprep.subr.mxu0 0.0
  %2610 = vmatpush1.msra.mxu0 %v2576
  %2611 = vmatprep.subr.mxu0 0.0
  %2612 = vmatpush1.msra.mxu0 %v2577
  %2613 = vmatprep.subr.mxu0 0.0
  %2614 = vmatpush1.msra.mxu0 %v2578
  %2615 = vmatprep.subr.mxu0 0.0
  %2616 = vmatpush1.msra.mxu0 %v2579
  %2617 = vmatprep.subr.mxu0 0.0
  %2618 = vmatpush1.msra.mxu0 %v2580
  %2619 = vmatprep.subr.mxu0 0.0
  %2620 = vmatpush1.msra.mxu0 %v2581
  %2621 = vmatprep.subr.mxu0 0.0
  %2622 = vmatpush1.msra.mxu0 0.0
  %2623 = vmatprep.subr.mxu0 0.0
  %2624 = vmatpush1.msra.mxu0 0.0
  %2625 = vmatprep.subr.mxu0 0.0
  %2626 = vmatpush1.msra.mxu0 0.0
  %2627 = vmatprep.subr.mxu0 0.0
  %2628 = vmatpush1.msra.mxu0 0.0
  %2629 = vmatprep.subr.mxu0 0.0
  %2630 = vmatpush1.msra.mxu0 0.0
  %2631 = vmatprep.subr.mxu0 0.0
  %2632 = vmatpush1.msra.mxu0 0.0
  %2633 = vmatprep.subr.mxu0 0.0
  %2634 = vmatpush1.msra.mxu0 0.0
  %2635 = vmatprep.subr.mxu0 0.0
  %2636 = vmatpush1.msra.mxu0 0.0
  %2637 = vmatprep.subr.mxu0 0.0
  %2638 = vmatpush1.msra.mxu0 0.0
  %2639 = vmatprep.subr.mxu0 0.0
  %2640 = vmatpush1.msra.mxu0 0.0
  %2641 = vmatprep.subr.mxu0 0.0
  %2642 = vmatpush1.msra.mxu0 0.0
  %2643 = vmatprep.subr.mxu0 0.0
  %2644 = vmatpush1.msra.mxu0 0.0
  %2645 = vmatprep.subr.mxu0 0.0
  %2646 = vmatpush1.msra.mxu0 0.0
  %2647 = vmatprep.subr.mxu0 0.0
  %2648 = vmatpush1.msra.mxu0 0.0
  %2649 = vmatprep.subr.mxu0 0.0
  %2650 = vmatpush1.msra.mxu0 0.0
  %2651 = vmatprep.subr.mxu0 0.0
  %2652 = vmatpush1.msra.mxu0 0.0
  %2653 = vmatprep.mubr.f32.mxu0 0.0
  %2654 = vmatmul.mubr.f32.gmra.mrb[0].mxu0 %v2565
  %v2655 = vpop.f32.mrb[0].mxu0
  %v2656 = vadd.f32 %v2587, %v2655
  %v2657 = vpop.f32.mrb[0].mxu0
  %2658 = vdwg.mxu0
  %vm2659 = vcmask 82944
  %2660 = vst.msk [vmem:[%s14] sm:$0x3] %vm2659, %v2656
  // Predicated region
  $region58: #{vccsa_forward.1} parent=0 // pred_check
    _
  $region59: #{vccsa_forward.1} parent=0 // pred_check_branch
    %2662 = sbr.rel (0) target = $region61
  $region60: #{vccsa_forward.1} parent=0 // pred_region
    _
  $region61: #{vccsa_forward.1} parent=0 // pred_fallthru
    _
  // Predicated region
  $region62: #{vccsa_forward.1} parent=0 // pred_check
    _
  $region63: #{vccsa_forward.1} parent=0 // pred_check_branch
    %2664 = sbr.rel (0) target = $region65
  $region64: #{vccsa_forward.1} parent=0 // pred_region
    _
  $region65: #{vccsa_forward.1} parent=0 // pred_fallthru
    _

</llo_original>
